<compile_context>
chip_gen: v7x
topology: tpu7x:2x2x1
jax: 0.10.0
libtpu: 0.0.40
codegen_flags: <defaults>
</compile_context>

<pallas_src>
import functools

import jax
import jax.numpy as jnp
from jax import lax
from jax.experimental import pallas as pl
from jax.experimental.pallas import tpu as pltpu


# ---------------------------------------------------------------------------
# Per-layer pixel packing: P adjacent pixels share the lane axis so the MXU N
# dimension (P*Cout) is >=128 (>=256 for fused-pool layers so the pooled output
# slab is still >=128 lanes).
# ---------------------------------------------------------------------------
def _choose_pack(W, Cout, fuse_pool):
    divs = [p for p in range(1, W + 1)
            if W % p == 0 and (not fuse_pool or p % 2 == 0)]
    target = 256 if fuse_pool else 128
    for p in divs:
        if p * Cout >= target:
            return p
    return divs[-1]


def _pack_weights(w_hwio, P, fuse_pool):
    """(3, 3, Cin, Cout) -> (3*(P+2)*Cin, P*Cout) block-banded RHS, bf16.

    K index  = dy*(P+2)*Cin + c*Cin + cin   (c = im2col window column 0..P+1)
    out lane = b*Cout + cout, where block b produces pixel perm[b] of the group.
    """
    _, _, Cin, Cout = w_hwio.shape
    w = w_hwio.astype(jnp.float32)
    wp = jnp.zeros((3, P + 2, Cin, P, Cout), jnp.float32)
    for p in range(P):
        wp = wp.at[:, p:p + 3, :, p, :].set(w)
    if fuse_pool:
        # evens first, then odds -> fused 2x2 pool's horizontal max becomes a
        # single half-lane-slice max and the result is already pool-packed.
        perm = list(range(0, P, 2)) + list(range(1, P, 2))
        wp = wp[:, :, :, perm, :]
    return wp.reshape(3 * (P + 2) * Cin, P * Cout).astype(jnp.bfloat16)


# ---------------------------------------------------------------------------
# Fused Conv3x3(pad=1, no bias) + InstanceNorm2d(affine=False) + ReLU
# [+ optional MaxPool2d(2,2)] -- one batch sample per grid step.
# ---------------------------------------------------------------------------
def _conv_in_relu_kernel(x_ref, w_ref, o_ref, xp_ref, *, P, fuse_pool):
    # x_ref : (1, H, Wg, P*Cin)  f32   one sample, P-pixel groups on lanes
    # w_ref : (K, P*Cout)        bf16  block-banded packed weights, K = 3*(P+2)*Cin
    # o_ref : (1, H, Wg, P*Cout)           if not fuse_pool
    #         (1, H//2, Wg, (P//2)*Cout)   if fuse_pool
    # xp_ref: (H+2, Wg+2, P*Cin) bf16 scratch -- zero-padded, group-packed input
    H, Wg, PC = x_ref.shape[1], x_ref.shape[2], x_ref.shape[3]
    Cin = PC // P
    Cout = w_ref.shape[1] // P
    M = H * Wg

    # ---- padded input in VMEM: zero ONLY the 1-pixel halo (rows 0 / H+1 and
    # group columns 0 / Wg+1); the interior is fully overwritten every step.
    zrow = jnp.zeros((1, Wg + 2, PC), jnp.bfloat16)
    zcol = jnp.zeros((H, 1, PC), jnp.bfloat16)
    xp_ref[pl.ds(0, 1), pl.ds(0, Wg + 2), :] = zrow
    xp_ref[pl.ds(H + 1, 1), pl.ds(0, Wg + 2), :] = zrow
    xp_ref[pl.ds(1, H), pl.ds(0, 1), :] = zcol
    xp_ref[pl.ds(1, H), pl.ds(Wg + 1, 1), :] = zcol
    xp_ref[pl.ds(1, H), pl.ds(1, Wg), :] = x_ref[0].astype(jnp.bfloat16)

    # ---- im2col built once (bf16), K = 3*(P+2)*Cin lanes per output pixel-group:
    #   window col 0    = left neighbour column (last column of group g-1)
    #   window col 1..P = the group's own P columns
    #   window col P+1  = right neighbour column (first column of group g+1)
    xall = xp_ref[...]                                        # (H+2, Wg+2, PC)
    pieces = []
    for dy in range(3):
        rows = xall[dy:dy + H]                                # (H, Wg+2, PC)
        pieces.append(rows[:, 0:Wg, (P - 1) * Cin:].reshape(M, Cin))
        pieces.append(rows[:, 1:Wg + 1, :].reshape(M, PC))
        pieces.append(rows[:, 2:Wg + 2, :Cin].reshape(M, Cin))
    lhs = jnp.concatenate(pieces, axis=1)                     # (M, K) bf16

    # ---- single bf16 MXU matmul, f32 accumulation.
    acc = jnp.dot(lhs, w_ref[...],
                  preferred_element_type=jnp.float32)         # (M, P*Cout) f32

    # ---- InstanceNorm2d(affine=False, eps=1e-5): two-pass stats in f32.
    # Channel c lives at lane p*Cout + c for every block p (permutation-safe).
    n_pix = float(M * P)                                      # = H * W
    s = jnp.sum(acc, axis=0, keepdims=True)                   # (1, P*Cout)
    mean_c = s[:, :Cout]
    for p in range(1, P):
        mean_c = mean_c + s[:, p * Cout:(p + 1) * Cout]
    mean_c = mean_c / n_pix                                   # (1, Cout)
    mean = jnp.concatenate([mean_c] * P, axis=1)              # (1, P*Cout)
    d = acc - mean
    q = jnp.sum(d * d, axis=0, keepdims=True)                 # centered sumsq
    var_c = q[:, :Cout]
    for p in range(1, P):
        var_c = var_c + q[:, p * Cout:(p + 1) * Cout]
    inv_c = lax.rsqrt(var_c / n_pix + 1e-5)                   # (1, Cout), EUP
    inv = jnp.concatenate([inv_c] * P, axis=1)                # (1, P*Cout)
    y = jnp.maximum(d * inv, 0.0)                             # IN + ReLU, f32

    if fuse_pool:
        # Weight output-blocks were permuted (evens | odds), so the horizontal
        # pool max is one half-lane-slice max and the result is already the
        # pooled image in (P/2)-pixel group packing (lane-dense store).
        half = (P // 2) * Cout
        m = jnp.maximum(y[:, :half], y[:, half:])             # (M, half)
        m4 = m.reshape(H // 2, 2, Wg, half)                   # leading-dim split only
        o_ref[0] = jnp.maximum(m4[:, 0], m4[:, 1]).astype(o_ref.dtype)
    else:
        o_ref[0] = y.reshape(H, Wg, P * Cout).astype(o_ref.dtype)


def conv3x3_in_relu(x_nhwc, w_hwio, *, fuse_pool):
    N, H, W, Cin = x_nhwc.shape
    Cout = w_hwio.shape[3]
    assert W % 2 == 0 and (not fuse_pool or H % 2 == 0), "even spatial dims required"
    P = _choose_pack(W, Cout, fuse_pool)
    Wg = W // P
    K = 3 * (P + 2) * Cin

    xr = x_nhwc.astype(jnp.float32).reshape(N, H, Wg, P * Cin)   # free reshape
    w2 = _pack_weights(w_hwio, P, fuse_pool)

    if fuse_pool:
        half = (P // 2) * Cout
        out_shape = jax.ShapeDtypeStruct((N, H // 2, Wg, half), jnp.float32)
        out_spec = pl.BlockSpec((1, H // 2, Wg, half), lambda n: (n, 0, 0, 0))
        out_elems = (H // 2) * Wg * half
    else:
        out_shape = jax.ShapeDtypeStruct((N, H, Wg, P * Cout), jnp.float32)
        out_spec = pl.BlockSpec((1, H, Wg, P * Cout), lambda n: (n, 0, 0, 0))
        out_elems = H * Wg * P * Cout

    # explicit scoped-VMEM budget: blocks (double-buffered) + scratch + working set,
    # 2x headroom, capped at 64 MiB so the same value is safe on v7x.
    M = H * Wg
    in_b = H * Wg * P * Cin * 4
    w_b = K * P * Cout * 2
    out_b = out_elems * 4
    scr_b = (H + 2) * (Wg + 2) * P * Cin * 2
    work_b = 2 * M * K * 2 + 3 * M * P * Cout * 4
    vmem_limit = int(min(max(2 * (2 * (in_b + w_b + out_b) + scr_b + work_b),
                             8 << 20), 64 << 20))

    y = pl.pallas_call(
        functools.partial(_conv_in_relu_kernel, P=P, fuse_pool=fuse_pool),
        out_shape=out_shape,
        grid_spec=pltpu.PrefetchScalarGridSpec(
            num_scalar_prefetch=0,
            grid=(N,),
            in_specs=[
                pl.BlockSpec((1, H, Wg, P * Cin), lambda n: (n, 0, 0, 0)),
                pl.BlockSpec((K, P * Cout), lambda n: (0, 0)),
            ],
            out_specs=out_spec,
            scratch_shapes=[pltpu.VMEM((H + 2, Wg + 2, P * Cin), jnp.bfloat16)],
        ),
        compiler_params=pltpu.CompilerParams(
            dimension_semantics=("parallel",),
            vmem_limit_bytes=vmem_limit),
    )(xr, w2)

    if fuse_pool:
        return y.reshape(N, H // 2, W // 2, Cout)   # free reshape back to NHWC
    return y.reshape(N, H, W, Cout)                 # free reshape back to NHWC


# ---------------------------------------------------------------------------
# Standalone MaxPool2d(2,2) (rare path: only for an 'M' not following a conv).
# ---------------------------------------------------------------------------
def _maxpool_kernel(x_ref, o_ref):
    # x_ref: (1, H, Wo, 2*C), o_ref: (1, H//2, Wo, C)
    C = o_ref.shape[3]
    Ho, Wo = o_ref.shape[1], o_ref.shape[2]
    x = x_ref[0]
    m = jnp.maximum(x[:, :, :C], x[:, :, C:])       # horizontal pair max (lane slice)
    m4 = m.reshape(Ho, 2, Wo, C)                    # free split of the leading dim
    o_ref[0] = jnp.maximum(m4[:, 0], m4[:, 1]).astype(o_ref.dtype)


def maxpool2x2(x_nhwc):
    N, H, W, C = x_nhwc.shape
    assert H % 2 == 0 and W % 2 == 0, "even spatial dims required"
    Ho, Wo = H // 2, W // 2
    xr = x_nhwc.reshape(N, H, Wo, 2 * C)            # free reshape (no transpose copy)
    itemsize = jnp.dtype(x_nhwc.dtype).itemsize
    vmem_limit = int(min(max(8 * (H * Wo * 2 * C + Ho * Wo * C) * itemsize,
                             8 << 20), 64 << 20))
    return pl.pallas_call(
        _maxpool_kernel,
        out_shape=jax.ShapeDtypeStruct((N, Ho, Wo, C), x_nhwc.dtype),
        grid_spec=pltpu.PrefetchScalarGridSpec(
            num_scalar_prefetch=0,
            grid=(N,),
            in_specs=[pl.BlockSpec((1, H, Wo, 2 * C), lambda n: (n, 0, 0, 0))],
            out_specs=pl.BlockSpec((1, Ho, Wo, C), lambda n: (n, 0, 0, 0)),
        ),
        compiler_params=pltpu.CompilerParams(
            dimension_semantics=("parallel",),
            vmem_limit_bytes=vmem_limit),
    )(xr)


# ---------------------------------------------------------------------------
# DownsamplePool forward
# ---------------------------------------------------------------------------
def init_params(cfg, c_dim, key):
    """Deterministic conv weights in HWIO layout (3, 3, Cin, Cout), He-style scale."""
    params = []
    cin = 3 + c_dim
    for v in cfg:
        if v == 'M':
            continue
        key, sub = jax.random.split(key)
        scale = (2.0 / (9 * cin)) ** 0.5
        params.append(jax.random.normal(sub, (3, 3, cin, v), jnp.float32) * scale)
        cin = v
    return params


def downsample_pool_forward(x_nchw, params, cfg):
    """PyTorch-convention NCHW in / NCHW out; internally NHWC, pool fused into conv."""
    x = jnp.transpose(x_nchw, (0, 2, 3, 1)).astype(jnp.float32)
    i, pi, n = 0, 0, len(cfg)
    while i < n:
        v = cfg[i]
        if v == 'M':
            x = maxpool2x2(x)
            i += 1
        else:
            fuse = (i + 1 < n) and (cfg[i + 1] == 'M')
            x = conv3x3_in_relu(x, params[pi], fuse_pool=fuse)
            pi += 1
            i += 2 if fuse else 1
    return jnp.transpose(x, (0, 3, 1, 2))


# ---------------------------------------------------------------------------
# Pure-JAX reference (XLA, f32) for correctness checking.
# ---------------------------------------------------------------------------
def reference_forward(x_nchw, params, cfg):
    x = x_nchw.astype(jnp.float32)
    pi = 0
    for v in cfg:
        if v == 'M':
            x = lax.reduce_window(x, -jnp.inf, lax.max,
                                  (1, 1, 2, 2), (1, 1, 2, 2), 'VALID')
        else:
            x = lax.conv_general_dilated(
                x, params[pi], window_strides=(1, 1), padding=((1, 1), (1, 1)),
                dimension_numbers=('NCHW', 'HWIO', 'NCHW'),
                precision=lax.Precision.HIGHEST)
            mean = jnp.mean(x, axis=(2, 3), keepdims=True)
            var = jnp.var(x, axis=(2, 3), keepdims=True)     # biased, like InstanceNorm2d
            x = jnp.maximum((x - mean) * lax.rsqrt(var + 1e-5), 0.0)
            pi += 1
    return x


def _check(got, want, name):
    got = jnp.asarray(got, jnp.float32)
    want = jnp.asarray(want, jnp.float32)
    assert got.shape == want.shape, (name, got.shape, want.shape)
    err = float(jnp.max(jnp.abs(got - want)))
    rel = float(jnp.linalg.norm(got - want) / (jnp.linalg.norm(want) + 1e-12))
    # bf16 matmul inputs with f32 accumulation -> allow bf16-level error.
    assert err < 6e-2 and rel < 2e-2, (name, err, rel)


if __name__ == "__main__":
    # cfg / c_dim consistent with build_downsample (in_channels = 3 + c_dim).
    cfg = [8, 'M', 16, 'M']
    c_dim = 1
    key = jax.random.PRNGKey(0)
    kx, kp = jax.random.split(key)
    N, H, W = 2, 32, 32
    x = jax.random.normal(kx, (N, 3 + c_dim, H, W), jnp.float32)   # NCHW
    params = init_params(cfg, c_dim, kp)

    # fused conv+IN+ReLU+pool path
    fwd = jax.jit(lambda xx, pp: downsample_pool_forward(xx, pp, cfg))
    out = jax.block_until_ready(fwd(x, params))
    assert out.shape == (N, 16, H // 4, W // 4), out.shape
    assert out.dtype == jnp.float32
    ref = reference_forward(x, params, cfg)
    _check(out, ref, "fused conv+IN+ReLU+pool stack")

    # un-fused conv path (last conv not followed by 'M')
    cfg2 = [8, 'M', 16]
    out2 = jax.block_until_ready(downsample_pool_forward(x, params, cfg2))
    ref2 = reference_forward(x, params, cfg2)
    assert out2.shape == (N, 16, H // 2, W // 2), out2.shape
    _check(out2, ref2, "unfused final conv")

    # standalone max-pool kernel path
    x_nhwc = jnp.transpose(x, (0, 2, 3, 1))
    p = jax.block_until_ready(maxpool2x2(x_nhwc))
    p_ref = lax.reduce_window(x_nhwc, -jnp.inf, lax.max,
                              (1, 2, 2, 1), (1, 2, 2, 1), 'VALID')
    assert jnp.allclose(p, p_ref, atol=1e-6), "standalone maxpool mismatch"

    print("KERNEL_OK")
</pallas_src>

<mosaic_0001>
module attributes {stable_mosaic.version = 11 : i64} {
  func.func @_conv_in_relu_kernel(%arg0: i32, %arg1: memref<1x32x1x128xf32, #tpu.memory_space<vmem>>, %arg2: memref<408x256xbf16, #tpu.memory_space<vmem>>, %arg3: memref<1x16x1x128xf32, #tpu.memory_space<vmem>>, %arg4: memref<34x3x128xbf16, #tpu.memory_space<vmem>>) attributes {dimension_semantics = [#tpu.dimension_semantics<parallel>], iteration_bounds = array<i64: 2>, scalar_prefetch = 0 : i64, scratch_operands = 1 : i64, tpu.core_type = #tpu.core_type<tc>, window_params = [{transform_indices = @transform_0, window_bounds = array<i64: 1, 32, 1, 128>}, {pipeline_mode = #tpu.pipeline_mode<synchronous>, transform_indices = @transform_1, window_bounds = array<i64: 408, 256>}, {transform_indices = @transform_2, window_bounds = array<i64: 1, 16, 1, 128>}]} {
    %cst = arith.constant 0.000000e+00 : bf16
    %0 = vector.broadcast %cst : bf16 to vector<1x3x128xbf16>
    %cst_0 = arith.constant 0.000000e+00 : bf16
    %1 = vector.broadcast %cst_0 : bf16 to vector<32x1x128xbf16>
    %c0 = arith.constant 0 : index
    %c0_1 = arith.constant 0 : index
    %c0_2 = arith.constant 0 : index
    %2 = vector.load %arg4[%c0, %c0_1, %c0_2] : memref<34x3x128xbf16, #tpu.memory_space<vmem>>, vector<1x3x128xbf16>
    tpu.vector_store %arg4[%c0, %c0_1, %c0_2], %0 {strides = array<i32>} : memref<34x3x128xbf16, #tpu.memory_space<vmem>>, vector<1x3x128xbf16>,
    %c33 = arith.constant 33 : index
    %c0_3 = arith.constant 0 : index
    %c0_4 = arith.constant 0 : index
    %3 = vector.load %arg4[%c33, %c0_3, %c0_4] : memref<34x3x128xbf16, #tpu.memory_space<vmem>>, vector<1x3x128xbf16>
    tpu.vector_store %arg4[%c33, %c0_3, %c0_4], %0 {strides = array<i32>} : memref<34x3x128xbf16, #tpu.memory_space<vmem>>, vector<1x3x128xbf16>,
    %c1 = arith.constant 1 : index
    %c0_5 = arith.constant 0 : index
    %c0_6 = arith.constant 0 : index
    %4 = vector.load %arg4[%c1, %c0_5, %c0_6] : memref<34x3x128xbf16, #tpu.memory_space<vmem>>, vector<32x1x128xbf16>
    tpu.vector_store %arg4[%c1, %c0_5, %c0_6], %1 {strides = array<i32>} : memref<34x3x128xbf16, #tpu.memory_space<vmem>>, vector<32x1x128xbf16>,
    %c1_7 = arith.constant 1 : index
    %c2 = arith.constant 2 : index
    %c0_8 = arith.constant 0 : index
    %5 = vector.load %arg4[%c1_7, %c2, %c0_8] : memref<34x3x128xbf16, #tpu.memory_space<vmem>>, vector<32x1x128xbf16>
    tpu.vector_store %arg4[%c1_7, %c2, %c0_8], %1 {strides = array<i32>} : memref<34x3x128xbf16, #tpu.memory_space<vmem>>, vector<32x1x128xbf16>,
    %c0_9 = arith.constant 0 : index
    %c0_10 = arith.constant 0 : index
    %c0_11 = arith.constant 0 : index
    %c0_12 = arith.constant 0 : index
    %6 = vector.load %arg1[%c0_9, %c0_10, %c0_11, %c0_12] : memref<1x32x1x128xf32, #tpu.memory_space<vmem>>, vector<1x32x1x128xf32>
    %7 = vector.shape_cast %6 : vector<1x32x1x128xf32> to vector<32x1x128xf32>
    %8 = arith.truncf %7 : vector<32x1x128xf32> to vector<32x1x128xbf16>
    %c1_13 = arith.constant 1 : index
    %c1_14 = arith.constant 1 : index
    %c0_15 = arith.constant 0 : index
    %9 = vector.load %arg4[%c1_13, %c1_14, %c0_15] : memref<34x3x128xbf16, #tpu.memory_space<vmem>>, vector<32x1x128xbf16>
    tpu.vector_store %arg4[%c1_13, %c1_14, %c0_15], %8 {strides = array<i32>} : memref<34x3x128xbf16, #tpu.memory_space<vmem>>, vector<32x1x128xbf16>,
    %c0_16 = arith.constant 0 : index
    %c0_17 = arith.constant 0 : index
    %c0_18 = arith.constant 0 : index
    %10 = vector.load %arg4[%c0_16, %c0_17, %c0_18] : memref<34x3x128xbf16, #tpu.memory_space<vmem>>, vector<34x3x128xbf16>
    %11 = vector.extract_strided_slice %10 {offsets = [0, 0, 0], sizes = [32, 3, 128], strides = [1, 1, 1]} : vector<34x3x128xbf16> to vector<32x3x128xbf16>
    %12 = vector.extract_strided_slice %11 {offsets = [0, 0, 124], sizes = [32, 1, 4], strides = [1, 1, 1]} : vector<32x3x128xbf16> to vector<32x1x4xbf16>
    %13 = vector.shape_cast %12 : vector<32x1x4xbf16> to vector<32x4xbf16>
    %14 = vector.extract_strided_slice %11 {offsets = [0, 1, 0], sizes = [32, 1, 128], strides = [1, 1, 1]} : vector<32x3x128xbf16> to vector<32x1x128xbf16>
    %15 = vector.shape_cast %14 : vector<32x1x128xbf16> to vector<32x128xbf16>
    %16 = vector.extract_strided_slice %11 {offsets = [0, 2, 0], sizes = [32, 1, 4], strides = [1, 1, 1]} : vector<32x3x128xbf16> to vector<32x1x4xbf16>
    %17 = vector.shape_cast %16 : vector<32x1x4xbf16> to vector<32x4xbf16>
    %18 = vector.extract_strided_slice %10 {offsets = [1, 0, 0], sizes = [32, 3, 128], strides = [1, 1, 1]} : vector<34x3x128xbf16> to vector<32x3x128xbf16>
    %19 = vector.extract_strided_slice %18 {offsets = [0, 0, 124], sizes = [32, 1, 4], strides = [1, 1, 1]} : vector<32x3x128xbf16> to vector<32x1x4xbf16>
    %20 = vector.shape_cast %19 : vector<32x1x4xbf16> to vector<32x4xbf16>
    %21 = vector.extract_strided_slice %18 {offsets = [0, 1, 0], sizes = [32, 1, 128], strides = [1, 1, 1]} : vector<32x3x128xbf16> to vector<32x1x128xbf16>
    %22 = vector.shape_cast %21 : vector<32x1x128xbf16> to vector<32x128xbf16>
    %23 = vector.extract_strided_slice %18 {offsets = [0, 2, 0], sizes = [32, 1, 4], strides = [1, 1, 1]} : vector<32x3x128xbf16> to vector<32x1x4xbf16>
    %24 = vector.shape_cast %23 : vector<32x1x4xbf16> to vector<32x4xbf16>
    %25 = vector.extract_strided_slice %10 {offsets = [2, 0, 0], sizes = [32, 3, 128], strides = [1, 1, 1]} : vector<34x3x128xbf16> to vector<32x3x128xbf16>
    %26 = vector.extract_strided_slice %25 {offsets = [0, 0, 124], sizes = [32, 1, 4], strides = [1, 1, 1]} : vector<32x3x128xbf16> to vector<32x1x4xbf16>
    %27 = vector.shape_cast %26 : vector<32x1x4xbf16> to vector<32x4xbf16>
    %28 = vector.extract_strided_slice %25 {offsets = [0, 1, 0], sizes = [32, 1, 128], strides = [1, 1, 1]} : vector<32x3x128xbf16> to vector<32x1x128xbf16>
    %29 = vector.shape_cast %28 : vector<32x1x128xbf16> to vector<32x128xbf16>
    %30 = vector.extract_strided_slice %25 {offsets = [0, 2, 0], sizes = [32, 1, 4], strides = [1, 1, 1]} : vector<32x3x128xbf16> to vector<32x1x4xbf16>
    %31 = vector.shape_cast %30 : vector<32x1x4xbf16> to vector<32x4xbf16>
    %32 = tpu.concatenate %13, %15, %17, %20, %22, %24, %27, %29, %31 in 1 : vector<32x4xbf16>, vector<32x128xbf16>, vector<32x4xbf16>, vector<32x4xbf16>, vector<32x128xbf16>, vector<32x4xbf16>, vector<32x4xbf16>, vector<32x128xbf16>, vector<32x4xbf16> -> vector<32x408xbf16>
    %c0_19 = arith.constant 0 : index
    %c0_20 = arith.constant 0 : index
    %33 = vector.load %arg2[%c0_19, %c0_20] : memref<408x256xbf16, #tpu.memory_space<vmem>>, vector<408x256xbf16>
    %cst_21 = arith.constant dense<0.000000e+00> : vector<32x256xf32>
    %34 = tpu.matmul %32, %33, %cst_21 {dimension_numbers = #tpu.dot_dimension_numbers<[1], [0], [0], [1], [0, 0, 1, 1], [], []>} : vector<32x408xbf16>, vector<408x256xbf16>, vector<32x256xf32> -> vector<32x256xf32>
    %cst_22 = arith.constant dense<0.000000e+00> : vector<256xf32>
    %35 = vector.multi_reduction <add>, %34, %cst_22 [0] : vector<32x256xf32> to vector<256xf32>
    %36 = vector.shape_cast %35 : vector<256xf32> to vector<1x256xf32>
    %37 = vector.extract_strided_slice %36 {offsets = [0, 0], sizes = [1, 8], strides = [1, 1]} : vector<1x256xf32> to vector<1x8xf32>
    %38 = vector.extract_strided_slice %36 {offsets = [0, 8], sizes = [1, 8], strides = [1, 1]} : vector<1x256xf32> to vector<1x8xf32>
    %39 = arith.addf %37, %38 : vector<1x8xf32>
    %40 = vector.extract_strided_slice %36 {offsets = [0, 16], sizes = [1, 8], strides = [1, 1]} : vector<1x256xf32> to vector<1x8xf32>
    %41 = arith.addf %39, %40 : vector<1x8xf32>
    %42 = vector.extract_strided_slice %36 {offsets = [0, 24], sizes = [1, 8], strides = [1, 1]} : vector<1x256xf32> to vector<1x8xf32>
    %43 = arith.addf %41, %42 : vector<1x8xf32>
    %44 = vector.extract_strided_slice %36 {offsets = [0, 32], sizes = [1, 8], strides = [1, 1]} : vector<1x256xf32> to vector<1x8xf32>
    %45 = arith.addf %43, %44 : vector<1x8xf32>
    %46 = vector.extract_strided_slice %36 {offsets = [0, 40], sizes = [1, 8], strides = [1, 1]} : vector<1x256xf32> to vector<1x8xf32>
    %47 = arith.addf %45, %46 : vector<1x8xf32>
    %48 = vector.extract_strided_slice %36 {offsets = [0, 48], sizes = [1, 8], strides = [1, 1]} : vector<1x256xf32> to vector<1x8xf32>
    %49 = arith.addf %47, %48 : vector<1x8xf32>
    %50 = vector.extract_strided_slice %36 {offsets = [0, 56], sizes = [1, 8], strides = [1, 1]} : vector<1x256xf32> to vector<1x8xf32>
    %51 = arith.addf %49, %50 : vector<1x8xf32>
    %52 = vector.extract_strided_slice %36 {offsets = [0, 64], sizes = [1, 8], strides = [1, 1]} : vector<1x256xf32> to vector<1x8xf32>
    %53 = arith.addf %51, %52 : vector<1x8xf32>
    %54 = vector.extract_strided_slice %36 {offsets = [0, 72], sizes = [1, 8], strides = [1, 1]} : vector<1x256xf32> to vector<1x8xf32>
    %55 = arith.addf %53, %54 : vector<1x8xf32>
    %56 = vector.extract_strided_slice %36 {offsets = [0, 80], sizes = [1, 8], strides = [1, 1]} : vector<1x256xf32> to vector<1x8xf32>
    %57 = arith.addf %55, %56 : vector<1x8xf32>
    %58 = vector.extract_strided_slice %36 {offsets = [0, 88], sizes = [1, 8], strides = [1, 1]} : vector<1x256xf32> to vector<1x8xf32>
    %59 = arith.addf %57, %58 : vector<1x8xf32>
    %60 = vector.extract_strided_slice %36 {offsets = [0, 96], sizes = [1, 8], strides = [1, 1]} : vector<1x256xf32> to vector<1x8xf32>
    %61 = arith.addf %59, %60 : vector<1x8xf32>
    %62 = vector.extract_strided_slice %36 {offsets = [0, 104], sizes = [1, 8], strides = [1, 1]} : vector<1x256xf32> to vector<1x8xf32>
    %63 = arith.addf %61, %62 : vector<1x8xf32>
    %64 = vector.extract_strided_slice %36 {offsets = [0, 112], sizes = [1, 8], strides = [1, 1]} : vector<1x256xf32> to vector<1x8xf32>
    %65 = arith.addf %63, %64 : vector<1x8xf32>
    %66 = vector.extract_strided_slice %36 {offsets = [0, 120], sizes = [1, 8], strides = [1, 1]} : vector<1x256xf32> to vector<1x8xf32>
    %67 = arith.addf %65, %66 : vector<1x8xf32>
    %68 = vector.extract_strided_slice %36 {offsets = [0, 128], sizes = [1, 8], strides = [1, 1]} : vector<1x256xf32> to vector<1x8xf32>
    %69 = arith.addf %67, %68 : vector<1x8xf32>
    %70 = vector.extract_strided_slice %36 {offsets = [0, 136], sizes = [1, 8], strides = [1, 1]} : vector<1x256xf32> to vector<1x8xf32>
    %71 = arith.addf %69, %70 : vector<1x8xf32>
    %72 = vector.extract_strided_slice %36 {offsets = [0, 144], sizes = [1, 8], strides = [1, 1]} : vector<1x256xf32> to vector<1x8xf32>
    %73 = arith.addf %71, %72 : vector<1x8xf32>
    %74 = vector.extract_strided_slice %36 {offsets = [0, 152], sizes = [1, 8], strides = [1, 1]} : vector<1x256xf32> to vector<1x8xf32>
    %75 = arith.addf %73, %74 : vector<1x8xf32>
    %76 = vector.extract_strided_slice %36 {offsets = [0, 160], sizes = [1, 8], strides = [1, 1]} : vector<1x256xf32> to vector<1x8xf32>
    %77 = arith.addf %75, %76 : vector<1x8xf32>
    %78 = vector.extract_strided_slice %36 {offsets = [0, 168], sizes = [1, 8], strides = [1, 1]} : vector<1x256xf32> to vector<1x8xf32>
    %79 = arith.addf %77, %78 : vector<1x8xf32>
    %80 = vector.extract_strided_slice %36 {offsets = [0, 176], sizes = [1, 8], strides = [1, 1]} : vector<1x256xf32> to vector<1x8xf32>
    %81 = arith.addf %79, %80 : vector<1x8xf32>
    %82 = vector.extract_strided_slice %36 {offsets = [0, 184], sizes = [1, 8], strides = [1, 1]} : vector<1x256xf32> to vector<1x8xf32>
    %83 = arith.addf %81, %82 : vector<1x8xf32>
    %84 = vector.extract_strided_slice %36 {offsets = [0, 192], sizes = [1, 8], strides = [1, 1]} : vector<1x256xf32> to vector<1x8xf32>
    %85 = arith.addf %83, %84 : vector<1x8xf32>
    %86 = vector.extract_strided_slice %36 {offsets = [0, 200], sizes = [1, 8], strides = [1, 1]} : vector<1x256xf32> to vector<1x8xf32>
    %87 = arith.addf %85, %86 : vector<1x8xf32>
    %88 = vector.extract_strided_slice %36 {offsets = [0, 208], sizes = [1, 8], strides = [1, 1]} : vector<1x256xf32> to vector<1x8xf32>
    %89 = arith.addf %87, %88 : vector<1x8xf32>
    %90 = vector.extract_strided_slice %36 {offsets = [0, 216], sizes = [1, 8], strides = [1, 1]} : vector<1x256xf32> to vector<1x8xf32>
    %91 = arith.addf %89, %90 : vector<1x8xf32>
    %92 = vector.extract_strided_slice %36 {offsets = [0, 224], sizes = [1, 8], strides = [1, 1]} : vector<1x256xf32> to vector<1x8xf32>
    %93 = arith.addf %91, %92 : vector<1x8xf32>
    %94 = vector.extract_strided_slice %36 {offsets = [0, 232], sizes = [1, 8], strides = [1, 1]} : vector<1x256xf32> to vector<1x8xf32>
    %95 = arith.addf %93, %94 : vector<1x8xf32>
    %96 = vector.extract_strided_slice %36 {offsets = [0, 240], sizes = [1, 8], strides = [1, 1]} : vector<1x256xf32> to vector<1x8xf32>
    %97 = arith.addf %95, %96 : vector<1x8xf32>
    %98 = vector.extract_strided_slice %36 {offsets = [0, 248], sizes = [1, 8], strides = [1, 1]} : vector<1x256xf32> to vector<1x8xf32>
    %99 = arith.addf %97, %98 : vector<1x8xf32>
    %cst_23 = arith.constant 1.024000e+03 : f32
    %100 = vector.broadcast %cst_23 : f32 to vector<1x8xf32>
    %101 = arith.divf %99, %100 : vector<1x8xf32>
    %102 = tpu.concatenate %101, %101, %101, %101, %101, %101, %101, %101, %101, %101, %101, %101, %101, %101, %101, %101 in 1 : vector<1x8xf32>, vector<1x8xf32>, vector<1x8xf32>, vector<1x8xf32>, vector<1x8xf32>, vector<1x8xf32>, vector<1x8xf32>, vector<1x8xf32>, vector<1x8xf32>, vector<1x8xf32>, vector<1x8xf32>, vector<1x8xf32>, vector<1x8xf32>, vector<1x8xf32>, vector<1x8xf32>, vector<1x8xf32> -> vector<1x128xf32>
    %103 = tpu.concatenate %101, %101, %101, %101, %101, %101, %101, %101, %101, %101, %101, %101, %101, %101, %101, %101 in 1 : vector<1x8xf32>, vector<1x8xf32>, vector<1x8xf32>, vector<1x8xf32>, vector<1x8xf32>, vector<1x8xf32>, vector<1x8xf32>, vector<1x8xf32>, vector<1x8xf32>, vector<1x8xf32>, vector<1x8xf32>, vector<1x8xf32>, vector<1x8xf32>, vector<1x8xf32>, vector<1x8xf32>, vector<1x8xf32> -> vector<1x128xf32>
    %104 = tpu.concatenate %102, %103 in 1 : vector<1x128xf32>, vector<1x128xf32> -> vector<1x256xf32>
    %105 = vector.broadcast %104 : vector<1x256xf32> to vector<32x256xf32>
    %106 = arith.subf %34, %105 : vector<32x256xf32>
    %107 = arith.mulf %106, %106 : vector<32x256xf32>
    %cst_24 = arith.constant dense<0.000000e+00> : vector<256xf32>
    %108 = vector.multi_reduction <add>, %107, %cst_24 [0] : vector<32x256xf32> to vector<256xf32>
    %109 = vector.shape_cast %108 : vector<256xf32> to vector<1x256xf32>
    %110 = vector.extract_strided_slice %109 {offsets = [0, 0], sizes = [1, 8], strides = [1, 1]} : vector<1x256xf32> to vector<1x8xf32>
    %111 = vector.extract_strided_slice %109 {offsets = [0, 8], sizes = [1, 8], strides = [1, 1]} : vector<1x256xf32> to vector<1x8xf32>
    %112 = arith.addf %110, %111 : vector<1x8xf32>
    %113 = vector.extract_strided_slice %109 {offsets = [0, 16], sizes = [1, 8], strides = [1, 1]} : vector<1x256xf32> to vector<1x8xf32>
    %114 = arith.addf %112, %113 : vector<1x8xf32>
    %115 = vector.extract_strided_slice %109 {offsets = [0, 24], sizes = [1, 8], strides = [1, 1]} : vector<1x256xf32> to vector<1x8xf32>
    %116 = arith.addf %114, %115 : vector<1x8xf32>
    %117 = vector.extract_strided_slice %109 {offsets = [0, 32], sizes = [1, 8], strides = [1, 1]} : vector<1x256xf32> to vector<1x8xf32>
    %118 = arith.addf %116, %117 : vector<1x8xf32>
    %119 = vector.extract_strided_slice %109 {offsets = [0, 40], sizes = [1, 8], strides = [1, 1]} : vector<1x256xf32> to vector<1x8xf32>
    %120 = arith.addf %118, %119 : vector<1x8xf32>
    %121 = vector.extract_strided_slice %109 {offsets = [0, 48], sizes = [1, 8], strides = [1, 1]} : vector<1x256xf32> to vector<1x8xf32>
    %122 = arith.addf %120, %121 : vector<1x8xf32>
    %123 = vector.extract_strided_slice %109 {offsets = [0, 56], sizes = [1, 8], strides = [1, 1]} : vector<1x256xf32> to vector<1x8xf32>
    %124 = arith.addf %122, %123 : vector<1x8xf32>
    %125 = vector.extract_strided_slice %109 {offsets = [0, 64], sizes = [1, 8], strides = [1, 1]} : vector<1x256xf32> to vector<1x8xf32>
    %126 = arith.addf %124, %125 : vector<1x8xf32>
    %127 = vector.extract_strided_slice %109 {offsets = [0, 72], sizes = [1, 8], strides = [1, 1]} : vector<1x256xf32> to vector<1x8xf32>
    %128 = arith.addf %126, %127 : vector<1x8xf32>
    %129 = vector.extract_strided_slice %109 {offsets = [0, 80], sizes = [1, 8], strides = [1, 1]} : vector<1x256xf32> to vector<1x8xf32>
    %130 = arith.addf %128, %129 : vector<1x8xf32>
    %131 = vector.extract_strided_slice %109 {offsets = [0, 88], sizes = [1, 8], strides = [1, 1]} : vector<1x256xf32> to vector<1x8xf32>
    %132 = arith.addf %130, %131 : vector<1x8xf32>
    %133 = vector.extract_strided_slice %109 {offsets = [0, 96], sizes = [1, 8], strides = [1, 1]} : vector<1x256xf32> to vector<1x8xf32>
    %134 = arith.addf %132, %133 : vector<1x8xf32>
    %135 = vector.extract_strided_slice %109 {offsets = [0, 104], sizes = [1, 8], strides = [1, 1]} : vector<1x256xf32> to vector<1x8xf32>
    %136 = arith.addf %134, %135 : vector<1x8xf32>
    %137 = vector.extract_strided_slice %109 {offsets = [0, 112], sizes = [1, 8], strides = [1, 1]} : vector<1x256xf32> to vector<1x8xf32>
    %138 = arith.addf %136, %137 : vector<1x8xf32>
    %139 = vector.extract_strided_slice %109 {offsets = [0, 120], sizes = [1, 8], strides = [1, 1]} : vector<1x256xf32> to vector<1x8xf32>
    %140 = arith.addf %138, %139 : vector<1x8xf32>
    %141 = vector.extract_strided_slice %109 {offsets = [0, 128], sizes = [1, 8], strides = [1, 1]} : vector<1x256xf32> to vector<1x8xf32>
    %142 = arith.addf %140, %141 : vector<1x8xf32>
    %143 = vector.extract_strided_slice %109 {offsets = [0, 136], sizes = [1, 8], strides = [1, 1]} : vector<1x256xf32> to vector<1x8xf32>
    %144 = arith.addf %142, %143 : vector<1x8xf32>
    %145 = vector.extract_strided_slice %109 {offsets = [0, 144], sizes = [1, 8], strides = [1, 1]} : vector<1x256xf32> to vector<1x8xf32>
    %146 = arith.addf %144, %145 : vector<1x8xf32>
    %147 = vector.extract_strided_slice %109 {offsets = [0, 152], sizes = [1, 8], strides = [1, 1]} : vector<1x256xf32> to vector<1x8xf32>
    %148 = arith.addf %146, %147 : vector<1x8xf32>
    %149 = vector.extract_strided_slice %109 {offsets = [0, 160], sizes = [1, 8], strides = [1, 1]} : vector<1x256xf32> to vector<1x8xf32>
    %150 = arith.addf %148, %149 : vector<1x8xf32>
    %151 = vector.extract_strided_slice %109 {offsets = [0, 168], sizes = [1, 8], strides = [1, 1]} : vector<1x256xf32> to vector<1x8xf32>
    %152 = arith.addf %150, %151 : vector<1x8xf32>
    %153 = vector.extract_strided_slice %109 {offsets = [0, 176], sizes = [1, 8], strides = [1, 1]} : vector<1x256xf32> to vector<1x8xf32>
    %154 = arith.addf %152, %153 : vector<1x8xf32>
    %155 = vector.extract_strided_slice %109 {offsets = [0, 184], sizes = [1, 8], strides = [1, 1]} : vector<1x256xf32> to vector<1x8xf32>
    %156 = arith.addf %154, %155 : vector<1x8xf32>
    %157 = vector.extract_strided_slice %109 {offsets = [0, 192], sizes = [1, 8], strides = [1, 1]} : vector<1x256xf32> to vector<1x8xf32>
    %158 = arith.addf %156, %157 : vector<1x8xf32>
    %159 = vector.extract_strided_slice %109 {offsets = [0, 200], sizes = [1, 8], strides = [1, 1]} : vector<1x256xf32> to vector<1x8xf32>
    %160 = arith.addf %158, %159 : vector<1x8xf32>
    %161 = vector.extract_strided_slice %109 {offsets = [0, 208], sizes = [1, 8], strides = [1, 1]} : vector<1x256xf32> to vector<1x8xf32>
    %162 = arith.addf %160, %161 : vector<1x8xf32>
    %163 = vector.extract_strided_slice %109 {offsets = [0, 216], sizes = [1, 8], strides = [1, 1]} : vector<1x256xf32> to vector<1x8xf32>
    %164 = arith.addf %162, %163 : vector<1x8xf32>
    %165 = vector.extract_strided_slice %109 {offsets = [0, 224], sizes = [1, 8], strides = [1, 1]} : vector<1x256xf32> to vector<1x8xf32>
    %166 = arith.addf %164, %165 : vector<1x8xf32>
    %167 = vector.extract_strided_slice %109 {offsets = [0, 232], sizes = [1, 8], strides = [1, 1]} : vector<1x256xf32> to vector<1x8xf32>
    %168 = arith.addf %166, %167 : vector<1x8xf32>
    %169 = vector.extract_strided_slice %109 {offsets = [0, 240], sizes = [1, 8], strides = [1, 1]} : vector<1x256xf32> to vector<1x8xf32>
    %170 = arith.addf %168, %169 : vector<1x8xf32>
    %171 = vector.extract_strided_slice %109 {offsets = [0, 248], sizes = [1, 8], strides = [1, 1]} : vector<1x256xf32> to vector<1x8xf32>
    %172 = arith.addf %170, %171 : vector<1x8xf32>
    %cst_25 = arith.constant 1.024000e+03 : f32
    %173 = vector.broadcast %cst_25 : f32 to vector<1x8xf32>
    %174 = arith.divf %172, %173 : vector<1x8xf32>
    %cst_26 = arith.constant 9.99999974E-6 : f32
    %175 = vector.broadcast %cst_26 : f32 to vector<1x8xf32>
    %176 = arith.addf %174, %175 : vector<1x8xf32>
    %177 = math.rsqrt %176 : vector<1x8xf32>
    %178 = tpu.concatenate %177, %177, %177, %177, %177, %177, %177, %177, %177, %177, %177, %177, %177, %177, %177, %177 in 1 : vector<1x8xf32>, vector<1x8xf32>, vector<1x8xf32>, vector<1x8xf32>, vector<1x8xf32>, vector<1x8xf32>, vector<1x8xf32>, vector<1x8xf32>, vector<1x8xf32>, vector<1x8xf32>, vector<1x8xf32>, vector<1x8xf32>, vector<1x8xf32>, vector<1x8xf32>, vector<1x8xf32>, vector<1x8xf32> -> vector<1x128xf32>
    %179 = tpu.concatenate %177, %177, %177, %177, %177, %177, %177, %177, %177, %177, %177, %177, %177, %177, %177, %177 in 1 : vector<1x8xf32>, vector<1x8xf32>, vector<1x8xf32>, vector<1x8xf32>, vector<1x8xf32>, vector<1x8xf32>, vector<1x8xf32>, vector<1x8xf32>, vector<1x8xf32>, vector<1x8xf32>, vector<1x8xf32>, vector<1x8xf32>, vector<1x8xf32>, vector<1x8xf32>, vector<1x8xf32>, vector<1x8xf32> -> vector<1x128xf32>
    %180 = tpu.concatenate %178, %179 in 1 : vector<1x128xf32>, vector<1x128xf32> -> vector<1x256xf32>
    %181 = vector.broadcast %180 : vector<1x256xf32> to vector<32x256xf32>
    %182 = arith.mulf %106, %181 : vector<32x256xf32>
    %cst_27 = arith.constant 0.000000e+00 : f32
    %183 = vector.broadcast %cst_27 : f32 to vector<32x256xf32>
    %184 = arith.maximumf %182, %183 : vector<32x256xf32>
    %185 = vector.extract_strided_slice %184 {offsets = [0, 0], sizes = [32, 128], strides = [1, 1]} : vector<32x256xf32> to vector<32x128xf32>
    %186 = vector.extract_strided_slice %184 {offsets = [0, 128], sizes = [32, 128], strides = [1, 1]} : vector<32x256xf32> to vector<32x128xf32>
    %187 = arith.maximumf %185, %186 : vector<32x128xf32>
    %188 = vector.shape_cast %187 : vector<32x128xf32> to vector<16x2x1x128xf32>
    %189 = vector.extract_strided_slice %188 {offsets = [0, 0, 0, 0], sizes = [16, 1, 1, 128], strides = [1, 1, 1, 1]} : vector<16x2x1x128xf32> to vector<16x1x1x128xf32>
    %190 = vector.shape_cast %189 : vector<16x1x1x128xf32> to vector<16x1x128xf32>
    %191 = vector.extract_strided_slice %188 {offsets = [0, 1, 0, 0], sizes = [16, 1, 1, 128], strides = [1, 1, 1, 1]} : vector<16x2x1x128xf32> to vector<16x1x1x128xf32>
    %192 = vector.shape_cast %191 : vector<16x1x1x128xf32> to vector<16x1x128xf32>
    %193 = arith.maximumf %190, %192 : vector<16x1x128xf32>
    %c0_28 = arith.constant 0 : index
    %c0_29 = arith.constant 0 : index
    %c0_30 = arith.constant 0 : index
    %c0_31 = arith.constant 0 : index
    %194 = vector.load %arg3[%c0_28, %c0_29, %c0_30, %c0_31] : memref<1x16x1x128xf32, #tpu.memory_space<vmem>>, vector<1x16x1x128xf32>
    %195 = vector.shape_cast %194 : vector<1x16x1x128xf32> to vector<16x1x128xf32>
    %196 = vector.shape_cast %193 : vector<16x1x128xf32> to vector<1x16x1x128xf32>
    tpu.vector_store %arg3[%c0_28, %c0_29, %c0_30, %c0_31], %196 {strides = array<i32>} : memref<1x16x1x128xf32, #tpu.memory_space<vmem>>, vector<1x16x1x128xf32>,
    return
  }
  func.func @transform_0(%arg0: i32) -> (i32, i32, i32, i32) {
    %c0_i32 = arith.constant 0 : i32
    %c0_i32_0 = arith.constant 0 : i32
    %c0_i32_1 = arith.constant 0 : i32
    %c0_i32_2 = arith.constant 0 : i32
    return %arg0, %c0_i32, %c0_i32_0, %c0_i32_1 : i32, i32, i32, i32
  }
  func.func @transform_1(%arg0: i32) -> (i32, i32) {
    %c0_i32 = arith.constant 0 : i32
    %c0_i32_0 = arith.constant 0 : i32
    %c0_i32_1 = arith.constant 0 : i32
    return %c0_i32, %c0_i32_0 : i32, i32
  }
  func.func @transform_2(%arg0: i32) -> (i32, i32, i32, i32) {
    %c0_i32 = arith.constant 0 : i32
    %c0_i32_0 = arith.constant 0 : i32
    %c0_i32_1 = arith.constant 0 : i32
    %c0_i32_2 = arith.constant 0 : i32
    return %arg0, %c0_i32, %c0_i32_0, %c0_i32_1 : i32, i32, i32, i32
  }
}

module attributes {stable_mosaic.version = 11 : i64} {
  func.func @_conv_in_relu_kernel(%arg0: i32, %arg1: memref<1x16x1x128xf32, #tpu.memory_space<vmem>>, %arg2: memref<432x256xbf16, #tpu.memory_space<vmem>>, %arg3: memref<1x8x1x128xf32, #tpu.memory_space<vmem>>, %arg4: memref<18x3x128xbf16, #tpu.memory_space<vmem>>) attributes {dimension_semantics = [#tpu.dimension_semantics<parallel>], iteration_bounds = array<i64: 2>, scalar_prefetch = 0 : i64, scratch_operands = 1 : i64, tpu.core_type = #tpu.core_type<tc>, window_params = [{transform_indices = @transform_0, window_bounds = array<i64: 1, 16, 1, 128>}, {pipeline_mode = #tpu.pipeline_mode<synchronous>, transform_indices = @transform_1, window_bounds = array<i64: 432, 256>}, {transform_indices = @transform_2, window_bounds = array<i64: 1, 8, 1, 128>}]} {
    %cst = arith.constant 0.000000e+00 : bf16
    %0 = vector.broadcast %cst : bf16 to vector<1x3x128xbf16>
    %cst_0 = arith.constant 0.000000e+00 : bf16
    %1 = vector.broadcast %cst_0 : bf16 to vector<16x1x128xbf16>
    %c0 = arith.constant 0 : index
    %c0_1 = arith.constant 0 : index
    %c0_2 = arith.constant 0 : index
    %2 = vector.load %arg4[%c0, %c0_1, %c0_2] : memref<18x3x128xbf16, #tpu.memory_space<vmem>>, vector<1x3x128xbf16>
    tpu.vector_store %arg4[%c0, %c0_1, %c0_2], %0 {strides = array<i32>} : memref<18x3x128xbf16, #tpu.memory_space<vmem>>, vector<1x3x128xbf16>,
    %c17 = arith.constant 17 : index
    %c0_3 = arith.constant 0 : index
    %c0_4 = arith.constant 0 : index
    %3 = vector.load %arg4[%c17, %c0_3, %c0_4] : memref<18x3x128xbf16, #tpu.memory_space<vmem>>, vector<1x3x128xbf16>
    tpu.vector_store %arg4[%c17, %c0_3, %c0_4], %0 {strides = array<i32>} : memref<18x3x128xbf16, #tpu.memory_space<vmem>>, vector<1x3x128xbf16>,
    %c1 = arith.constant 1 : index
    %c0_5 = arith.constant 0 : index
    %c0_6 = arith.constant 0 : index
    %4 = vector.load %arg4[%c1, %c0_5, %c0_6] : memref<18x3x128xbf16, #tpu.memory_space<vmem>>, vector<16x1x128xbf16>
    tpu.vector_store %arg4[%c1, %c0_5, %c0_6], %1 {strides = array<i32>} : memref<18x3x128xbf16, #tpu.memory_space<vmem>>, vector<16x1x128xbf16>,
    %c1_7 = arith.constant 1 : index
    %c2 = arith.constant 2 : index
    %c0_8 = arith.constant 0 : index
    %5 = vector.load %arg4[%c1_7, %c2, %c0_8] : memref<18x3x128xbf16, #tpu.memory_space<vmem>>, vector<16x1x128xbf16>
    tpu.vector_store %arg4[%c1_7, %c2, %c0_8], %1 {strides = array<i32>} : memref<18x3x128xbf16, #tpu.memory_space<vmem>>, vector<16x1x128xbf16>,
    %c0_9 = arith.constant 0 : index
    %c0_10 = arith.constant 0 : index
    %c0_11 = arith.constant 0 : index
    %c0_12 = arith.constant 0 : index
    %6 = vector.load %arg1[%c0_9, %c0_10, %c0_11, %c0_12] : memref<1x16x1x128xf32, #tpu.memory_space<vmem>>, vector<1x16x1x128xf32>
    %7 = vector.shape_cast %6 : vector<1x16x1x128xf32> to vector<16x1x128xf32>
    %8 = arith.truncf %7 : vector<16x1x128xf32> to vector<16x1x128xbf16>
    %c1_13 = arith.constant 1 : index
    %c1_14 = arith.constant 1 : index
    %c0_15 = arith.constant 0 : index
    %9 = vector.load %arg4[%c1_13, %c1_14, %c0_15] : memref<18x3x128xbf16, #tpu.memory_space<vmem>>, vector<16x1x128xbf16>
    tpu.vector_store %arg4[%c1_13, %c1_14, %c0_15], %8 {strides = array<i32>} : memref<18x3x128xbf16, #tpu.memory_space<vmem>>, vector<16x1x128xbf16>,
    %c0_16 = arith.constant 0 : index
    %c0_17 = arith.constant 0 : index
    %c0_18 = arith.constant 0 : index
    %10 = vector.load %arg4[%c0_16, %c0_17, %c0_18] : memref<18x3x128xbf16, #tpu.memory_space<vmem>>, vector<18x3x128xbf16>
    %11 = vector.extract_strided_slice %10 {offsets = [0, 0, 0], sizes = [16, 3, 128], strides = [1, 1, 1]} : vector<18x3x128xbf16> to vector<16x3x128xbf16>
    %12 = vector.extract_strided_slice %11 {offsets = [0, 0, 120], sizes = [16, 1, 8], strides = [1, 1, 1]} : vector<16x3x128xbf16> to vector<16x1x8xbf16>
    %13 = vector.shape_cast %12 : vector<16x1x8xbf16> to vector<16x8xbf16>
    %14 = vector.extract_strided_slice %11 {offsets = [0, 1, 0], sizes = [16, 1, 128], strides = [1, 1, 1]} : vector<16x3x128xbf16> to vector<16x1x128xbf16>
    %15 = vector.shape_cast %14 : vector<16x1x128xbf16> to vector<16x128xbf16>
    %16 = vector.extract_strided_slice %11 {offsets = [0, 2, 0], sizes = [16, 1, 8], strides = [1, 1, 1]} : vector<16x3x128xbf16> to vector<16x1x8xbf16>
    %17 = vector.shape_cast %16 : vector<16x1x8xbf16> to vector<16x8xbf16>
    %18 = vector.extract_strided_slice %10 {offsets = [1, 0, 0], sizes = [16, 3, 128], strides = [1, 1, 1]} : vector<18x3x128xbf16> to vector<16x3x128xbf16>
    %19 = vector.extract_strided_slice %18 {offsets = [0, 0, 120], sizes = [16, 1, 8], strides = [1, 1, 1]} : vector<16x3x128xbf16> to vector<16x1x8xbf16>
    %20 = vector.shape_cast %19 : vector<16x1x8xbf16> to vector<16x8xbf16>
    %21 = vector.extract_strided_slice %18 {offsets = [0, 1, 0], sizes = [16, 1, 128], strides = [1, 1, 1]} : vector<16x3x128xbf16> to vector<16x1x128xbf16>
    %22 = vector.shape_cast %21 : vector<16x1x128xbf16> to vector<16x128xbf16>
    %23 = vector.extract_strided_slice %18 {offsets = [0, 2, 0], sizes = [16, 1, 8], strides = [1, 1, 1]} : vector<16x3x128xbf16> to vector<16x1x8xbf16>
    %24 = vector.shape_cast %23 : vector<16x1x8xbf16> to vector<16x8xbf16>
    %25 = vector.extract_strided_slice %10 {offsets = [2, 0, 0], sizes = [16, 3, 128], strides = [1, 1, 1]} : vector<18x3x128xbf16> to vector<16x3x128xbf16>
    %26 = vector.extract_strided_slice %25 {offsets = [0, 0, 120], sizes = [16, 1, 8], strides = [1, 1, 1]} : vector<16x3x128xbf16> to vector<16x1x8xbf16>
    %27 = vector.shape_cast %26 : vector<16x1x8xbf16> to vector<16x8xbf16>
    %28 = vector.extract_strided_slice %25 {offsets = [0, 1, 0], sizes = [16, 1, 128], strides = [1, 1, 1]} : vector<16x3x128xbf16> to vector<16x1x128xbf16>
    %29 = vector.shape_cast %28 : vector<16x1x128xbf16> to vector<16x128xbf16>
    %30 = vector.extract_strided_slice %25 {offsets = [0, 2, 0], sizes = [16, 1, 8], strides = [1, 1, 1]} : vector<16x3x128xbf16> to vector<16x1x8xbf16>
    %31 = vector.shape_cast %30 : vector<16x1x8xbf16> to vector<16x8xbf16>
    %32 = tpu.concatenate %13, %15, %17, %20, %22, %24, %27, %29, %31 in 1 : vector<16x8xbf16>, vector<16x128xbf16>, vector<16x8xbf16>, vector<16x8xbf16>, vector<16x128xbf16>, vector<16x8xbf16>, vector<16x8xbf16>, vector<16x128xbf16>, vector<16x8xbf16> -> vector<16x432xbf16>
    %c0_19 = arith.constant 0 : index
    %c0_20 = arith.constant 0 : index
    %33 = vector.load %arg2[%c0_19, %c0_20] : memref<432x256xbf16, #tpu.memory_space<vmem>>, vector<432x256xbf16>
    %cst_21 = arith.constant dense<0.000000e+00> : vector<16x256xf32>
    %34 = tpu.matmul %32, %33, %cst_21 {dimension_numbers = #tpu.dot_dimension_numbers<[1], [0], [0], [1], [0, 0, 1, 1], [], []>} : vector<16x432xbf16>, vector<432x256xbf16>, vector<16x256xf32> -> vector<16x256xf32>
    %cst_22 = arith.constant dense<0.000000e+00> : vector<256xf32>
    %35 = vector.multi_reduction <add>, %34, %cst_22 [0] : vector<16x256xf32> to vector<256xf32>
    %36 = vector.shape_cast %35 : vector<256xf32> to vector<1x256xf32>
    %37 = vector.extract_strided_slice %36 {offsets = [0, 0], sizes = [1, 16], strides = [1, 1]} : vector<1x256xf32> to vector<1x16xf32>
    %38 = vector.extract_strided_slice %36 {offsets = [0, 16], sizes = [1, 16], strides = [1, 1]} : vector<1x256xf32> to vector<1x16xf32>
    %39 = arith.addf %37, %38 : vector<1x16xf32>
    %40 = vector.extract_strided_slice %36 {offsets = [0, 32], sizes = [1, 16], strides = [1, 1]} : vector<1x256xf32> to vector<1x16xf32>
    %41 = arith.addf %39, %40 : vector<1x16xf32>
    %42 = vector.extract_strided_slice %36 {offsets = [0, 48], sizes = [1, 16], strides = [1, 1]} : vector<1x256xf32> to vector<1x16xf32>
    %43 = arith.addf %41, %42 : vector<1x16xf32>
    %44 = vector.extract_strided_slice %36 {offsets = [0, 64], sizes = [1, 16], strides = [1, 1]} : vector<1x256xf32> to vector<1x16xf32>
    %45 = arith.addf %43, %44 : vector<1x16xf32>
    %46 = vector.extract_strided_slice %36 {offsets = [0, 80], sizes = [1, 16], strides = [1, 1]} : vector<1x256xf32> to vector<1x16xf32>
    %47 = arith.addf %45, %46 : vector<1x16xf32>
    %48 = vector.extract_strided_slice %36 {offsets = [0, 96], sizes = [1, 16], strides = [1, 1]} : vector<1x256xf32> to vector<1x16xf32>
    %49 = arith.addf %47, %48 : vector<1x16xf32>
    %50 = vector.extract_strided_slice %36 {offsets = [0, 112], sizes = [1, 16], strides = [1, 1]} : vector<1x256xf32> to vector<1x16xf32>
    %51 = arith.addf %49, %50 : vector<1x16xf32>
    %52 = vector.extract_strided_slice %36 {offsets = [0, 128], sizes = [1, 16], strides = [1, 1]} : vector<1x256xf32> to vector<1x16xf32>
    %53 = arith.addf %51, %52 : vector<1x16xf32>
    %54 = vector.extract_strided_slice %36 {offsets = [0, 144], sizes = [1, 16], strides = [1, 1]} : vector<1x256xf32> to vector<1x16xf32>
    %55 = arith.addf %53, %54 : vector<1x16xf32>
    %56 = vector.extract_strided_slice %36 {offsets = [0, 160], sizes = [1, 16], strides = [1, 1]} : vector<1x256xf32> to vector<1x16xf32>
    %57 = arith.addf %55, %56 : vector<1x16xf32>
    %58 = vector.extract_strided_slice %36 {offsets = [0, 176], sizes = [1, 16], strides = [1, 1]} : vector<1x256xf32> to vector<1x16xf32>
    %59 = arith.addf %57, %58 : vector<1x16xf32>
    %60 = vector.extract_strided_slice %36 {offsets = [0, 192], sizes = [1, 16], strides = [1, 1]} : vector<1x256xf32> to vector<1x16xf32>
    %61 = arith.addf %59, %60 : vector<1x16xf32>
    %62 = vector.extract_strided_slice %36 {offsets = [0, 208], sizes = [1, 16], strides = [1, 1]} : vector<1x256xf32> to vector<1x16xf32>
    %63 = arith.addf %61, %62 : vector<1x16xf32>
    %64 = vector.extract_strided_slice %36 {offsets = [0, 224], sizes = [1, 16], strides = [1, 1]} : vector<1x256xf32> to vector<1x16xf32>
    %65 = arith.addf %63, %64 : vector<1x16xf32>
    %66 = vector.extract_strided_slice %36 {offsets = [0, 240], sizes = [1, 16], strides = [1, 1]} : vector<1x256xf32> to vector<1x16xf32>
    %67 = arith.addf %65, %66 : vector<1x16xf32>
    %cst_23 = arith.constant 2.560000e+02 : f32
    %68 = vector.broadcast %cst_23 : f32 to vector<1x16xf32>
    %69 = arith.divf %67, %68 : vector<1x16xf32>
    %70 = tpu.concatenate %69, %69, %69, %69, %69, %69, %69, %69, %69, %69, %69, %69, %69, %69, %69, %69 in 1 : vector<1x16xf32>, vector<1x16xf32>, vector<1x16xf32>, vector<1x16xf32>, vector<1x16xf32>, vector<1x16xf32>, vector<1x16xf32>, vector<1x16xf32>, vector<1x16xf32>, vector<1x16xf32>, vector<1x16xf32>, vector<1x16xf32>, vector<1x16xf32>, vector<1x16xf32>, vector<1x16xf32>, vector<1x16xf32> -> vector<1x256xf32>
    %71 = vector.broadcast %70 : vector<1x256xf32> to vector<16x256xf32>
    %72 = arith.subf %34, %71 : vector<16x256xf32>
    %73 = arith.mulf %72, %72 : vector<16x256xf32>
    %cst_24 = arith.constant dense<0.000000e+00> : vector<256xf32>
    %74 = vector.multi_reduction <add>, %73, %cst_24 [0] : vector<16x256xf32> to vector<256xf32>
    %75 = vector.shape_cast %74 : vector<256xf32> to vector<1x256xf32>
    %76 = vector.extract_strided_slice %75 {offsets = [0, 0], sizes = [1, 16], strides = [1, 1]} : vector<1x256xf32> to vector<1x16xf32>
    %77 = vector.extract_strided_slice %75 {offsets = [0, 16], sizes = [1, 16], strides = [1, 1]} : vector<1x256xf32> to vector<1x16xf32>
    %78 = arith.addf %76, %77 : vector<1x16xf32>
    %79 = vector.extract_strided_slice %75 {offsets = [0, 32], sizes = [1, 16], strides = [1, 1]} : vector<1x256xf32> to vector<1x16xf32>
    %80 = arith.addf %78, %79 : vector<1x16xf32>
    %81 = vector.extract_strided_slice %75 {offsets = [0, 48], sizes = [1, 16], strides = [1, 1]} : vector<1x256xf32> to vector<1x16xf32>
    %82 = arith.addf %80, %81 : vector<1x16xf32>
    %83 = vector.extract_strided_slice %75 {offsets = [0, 64], sizes = [1, 16], strides = [1, 1]} : vector<1x256xf32> to vector<1x16xf32>
    %84 = arith.addf %82, %83 : vector<1x16xf32>
    %85 = vector.extract_strided_slice %75 {offsets = [0, 80], sizes = [1, 16], strides = [1, 1]} : vector<1x256xf32> to vector<1x16xf32>
    %86 = arith.addf %84, %85 : vector<1x16xf32>
    %87 = vector.extract_strided_slice %75 {offsets = [0, 96], sizes = [1, 16], strides = [1, 1]} : vector<1x256xf32> to vector<1x16xf32>
    %88 = arith.addf %86, %87 : vector<1x16xf32>
    %89 = vector.extract_strided_slice %75 {offsets = [0, 112], sizes = [1, 16], strides = [1, 1]} : vector<1x256xf32> to vector<1x16xf32>
    %90 = arith.addf %88, %89 : vector<1x16xf32>
    %91 = vector.extract_strided_slice %75 {offsets = [0, 128], sizes = [1, 16], strides = [1, 1]} : vector<1x256xf32> to vector<1x16xf32>
    %92 = arith.addf %90, %91 : vector<1x16xf32>
    %93 = vector.extract_strided_slice %75 {offsets = [0, 144], sizes = [1, 16], strides = [1, 1]} : vector<1x256xf32> to vector<1x16xf32>
    %94 = arith.addf %92, %93 : vector<1x16xf32>
    %95 = vector.extract_strided_slice %75 {offsets = [0, 160], sizes = [1, 16], strides = [1, 1]} : vector<1x256xf32> to vector<1x16xf32>
    %96 = arith.addf %94, %95 : vector<1x16xf32>
    %97 = vector.extract_strided_slice %75 {offsets = [0, 176], sizes = [1, 16], strides = [1, 1]} : vector<1x256xf32> to vector<1x16xf32>
    %98 = arith.addf %96, %97 : vector<1x16xf32>
    %99 = vector.extract_strided_slice %75 {offsets = [0, 192], sizes = [1, 16], strides = [1, 1]} : vector<1x256xf32> to vector<1x16xf32>
    %100 = arith.addf %98, %99 : vector<1x16xf32>
    %101 = vector.extract_strided_slice %75 {offsets = [0, 208], sizes = [1, 16], strides = [1, 1]} : vector<1x256xf32> to vector<1x16xf32>
    %102 = arith.addf %100, %101 : vector<1x16xf32>
    %103 = vector.extract_strided_slice %75 {offsets = [0, 224], sizes = [1, 16], strides = [1, 1]} : vector<1x256xf32> to vector<1x16xf32>
    %104 = arith.addf %102, %103 : vector<1x16xf32>
    %105 = vector.extract_strided_slice %75 {offsets = [0, 240], sizes = [1, 16], strides = [1, 1]} : vector<1x256xf32> to vector<1x16xf32>
    %106 = arith.addf %104, %105 : vector<1x16xf32>
    %cst_25 = arith.constant 2.560000e+02 : f32
    %107 = vector.broadcast %cst_25 : f32 to vector<1x16xf32>
    %108 = arith.divf %106, %107 : vector<1x16xf32>
    %cst_26 = arith.constant 9.99999974E-6 : f32
    %109 = vector.broadcast %cst_26 : f32 to vector<1x16xf32>
    %110 = arith.addf %108, %109 : vector<1x16xf32>
    %111 = math.rsqrt %110 : vector<1x16xf32>
    %112 = tpu.concatenate %111, %111, %111, %111, %111, %111, %111, %111, %111, %111, %111, %111, %111, %111, %111, %111 in 1 : vector<1x16xf32>, vector<1x16xf32>, vector<1x16xf32>, vector<1x16xf32>, vector<1x16xf32>, vector<1x16xf32>, vector<1x16xf32>, vector<1x16xf32>, vector<1x16xf32>, vector<1x16xf32>, vector<1x16xf32>, vector<1x16xf32>, vector<1x16xf32>, vector<1x16xf32>, vector<1x16xf32>, vector<1x16xf32> -> vector<1x256xf32>
    %113 = vector.broadcast %112 : vector<1x256xf32> to vector<16x256xf32>
    %114 = arith.mulf %72, %113 : vector<16x256xf32>
    %cst_27 = arith.constant 0.000000e+00 : f32
    %115 = vector.broadcast %cst_27 : f32 to vector<16x256xf32>
    %116 = arith.maximumf %114, %115 : vector<16x256xf32>
    %117 = vector.extract_strided_slice %116 {offsets = [0, 0], sizes = [16, 128], strides = [1, 1]} : vector<16x256xf32> to vector<16x128xf32>
    %118 = vector.extract_strided_slice %116 {offsets = [0, 128], sizes = [16, 128], strides = [1, 1]} : vector<16x256xf32> to vector<16x128xf32>
    %119 = arith.maximumf %117, %118 : vector<16x128xf32>
    %120 = vector.shape_cast %119 : vector<16x128xf32> to vector<8x2x1x128xf32>
    %121 = vector.extract_strided_slice %120 {offsets = [0, 0, 0, 0], sizes = [8, 1, 1, 128], strides = [1, 1, 1, 1]} : vector<8x2x1x128xf32> to vector<8x1x1x128xf32>
    %122 = vector.shape_cast %121 : vector<8x1x1x128xf32> to vector<8x1x128xf32>
    %123 = vector.extract_strided_slice %120 {offsets = [0, 1, 0, 0], sizes = [8, 1, 1, 128], strides = [1, 1, 1, 1]} : vector<8x2x1x128xf32> to vector<8x1x1x128xf32>
    %124 = vector.shape_cast %123 : vector<8x1x1x128xf32> to vector<8x1x128xf32>
    %125 = arith.maximumf %122, %124 : vector<8x1x128xf32>
    %c0_28 = arith.constant 0 : index
    %c0_29 = arith.constant 0 : index
    %c0_30 = arith.constant 0 : index
    %c0_31 = arith.constant 0 : index
    %126 = vector.load %arg3[%c0_28, %c0_29, %c0_30, %c0_31] : memref<1x8x1x128xf32, #tpu.memory_space<vmem>>, vector<1x8x1x128xf32>
    %127 = vector.shape_cast %126 : vector<1x8x1x128xf32> to vector<8x1x128xf32>
    %128 = vector.shape_cast %125 : vector<8x1x128xf32> to vector<1x8x1x128xf32>
    tpu.vector_store %arg3[%c0_28, %c0_29, %c0_30, %c0_31], %128 {strides = array<i32>} : memref<1x8x1x128xf32, #tpu.memory_space<vmem>>, vector<1x8x1x128xf32>,
    return
  }
  func.func @transform_0(%arg0: i32) -> (i32, i32, i32, i32) {
    %c0_i32 = arith.constant 0 : i32
    %c0_i32_0 = arith.constant 0 : i32
    %c0_i32_1 = arith.constant 0 : i32
    %c0_i32_2 = arith.constant 0 : i32
    return %arg0, %c0_i32, %c0_i32_0, %c0_i32_1 : i32, i32, i32, i32
  }
  func.func @transform_1(%arg0: i32) -> (i32, i32) {
    %c0_i32 = arith.constant 0 : i32
    %c0_i32_0 = arith.constant 0 : i32
    %c0_i32_1 = arith.constant 0 : i32
    return %c0_i32, %c0_i32_0 : i32, i32
  }
  func.func @transform_2(%arg0: i32) -> (i32, i32, i32, i32) {
    %c0_i32 = arith.constant 0 : i32
    %c0_i32_0 = arith.constant 0 : i32
    %c0_i32_1 = arith.constant 0 : i32
    %c0_i32_2 = arith.constant 0 : i32
    return %arg0, %c0_i32, %c0_i32_0, %c0_i32_1 : i32, i32, i32, i32
  }
}

</mosaic_0001>

<llo_original>
// kernel: _lambda_.2
$region0: #{_lambda_.2}
  #allocation0 [shape = 'u32[]', space=smem, size = 0x4, offset = 0x4, fixed_abs, tag = 'smem constant byte address 0x4 - core index']
  #allocation1 [shape = 'u32[144,128]{1,0:T(1,128)}', space=vmem, size = 0x12000, scoped, tag = 'internal scratch']
  #allocation2 [shape = 'bf16[34,3,128]{2,1,0:T(4,128)(2,1)}', space=vmem, size = 0x8800, scoped, tag = 'scratch operand']
  %s0 = inlined_call_operand.vmem [shape: f32[2,32,1,128], index: 0, kind: input, shape index: {}]
  %s1 = inlined_call_operand.vmem [shape: bf16[408,256], index: 1, kind: input, shape index: {}]
  %s2 = inlined_call_operand.vmem [shape: f32[2,16,1,128], index: 2, kind: output, shape index: {}]
  %s3 = sld [smem:[#allocation0]]
  $region41: #{_lambda_.2} parent=0
    _
  %s5 = ssub.s32 1, %s3
  %s6 = scalar_select 0, %s5, %s3
  loop: start=0, step=1, limit=4
  $region2: #{_lambda_.2} parent=0 // loop_pre_header
    _
  $region3: #{_lambda_.2} parent=0 // loop_header
    %s8 = sphi 0, %s12
    %p9 = scmp.ge.s32.totalorder %s8, 4
    %s18 = sphi 0, %s20
    %s21 = sphi 0, %s18
    %s22 = sphi 0, %s21
    %s38 = sphi 0, %s22
    %s42 = sphi 0, %s42
    %s44 = sphi 0, %s42
    %s45 = sphi 0, %s44
    %s59 = sphi 0, %s45
    %s65 = sphi 0, %s67
    %s68 = sphi 0, %s65
    %s69 = sphi 0, %s68
    %s85 = sphi 0, %s69
  $region4: #{_lambda_.2} parent=0 // loop_header_branch
    %11 = sbr.rel (%p9) target = $region8
  $region5: #{_lambda_.2} parent=0 // loop_body
    %s13 = ssub.s32 %s8, 1
    %s14 = ssub.s32 %s8, 2
    %s15 = sadd.s32 %s8, 1
    %s16 = ssub.s32 %s8, %s15
    %p17 = scmp.eq.s32.totalorder %s16, 0
    %s19 = sadd.s32 %s18, 1
    %s20 = scalar_select %p17, %s18, %s19
    %p23 = pneg %p17
    %p24 = scmp.eq.s32.totalorder %s8, 1
    %p25 = por %p23, %p24
    %p26 = scmp.ne.s32.totalorder %s18, %s21
    %p27 = scmp.eq.s32.totalorder %s8, 0
    %p28 = por %p26, %p27
    %p29 = scmp.ne.s32.totalorder %s18, %s21
    %p30 = scmp.eq.s32.totalorder %s13, 1
    %p31 = por %p29, %p30
    %p32 = scmp.ne.s32.totalorder %s21, %s22
    %p33 = scmp.eq.s32.totalorder %s13, 0
    %p34 = por %p32, %p33
    %p35 = scmp.ne.s32.totalorder %s21, %s22
    %p36 = scmp.eq.s32.totalorder %s14, 1
    %p37 = por %p35, %p36
    %p39 = scmp.ne.s32.totalorder %s22, %s38
    %p40 = scmp.eq.s32.totalorder %s14, 0
    %p41 = por %p39, %p40
    %s43 = sadd.s32 %s42, 1
    %p46 = scmp.eq.s32.totalorder %s8, 1
    %p47 = scmp.ne.s32.totalorder %s42, %s44
    %p48 = scmp.eq.s32.totalorder %s8, 0
    %p49 = por %p47, %p48
    %p50 = scmp.ne.s32.totalorder %s42, %s44
    %p51 = scmp.eq.s32.totalorder %s13, 1
    %p52 = por %p50, %p51
    %p53 = scmp.ne.s32.totalorder %s44, %s45
    %p54 = scmp.eq.s32.totalorder %s13, 0
    %p55 = por %p53, %p54
    %p56 = scmp.ne.s32.totalorder %s44, %s45
    %p57 = scmp.eq.s32.totalorder %s14, 1
    %p58 = por %p56, %p57
    %p60 = scmp.ne.s32.totalorder %s45, %s59
    %p61 = scmp.eq.s32.totalorder %s14, 0
    %p62 = por %p60, %p61
    %s63 = ssub.s32 %s8, %s15
    %p64 = scmp.eq.s32.totalorder %s63, 0
    %s66 = sadd.s32 %s65, 1
    %s67 = scalar_select %p64, %s65, %s66
    %p70 = pneg %p64
    %p71 = scmp.eq.s32.totalorder %s8, 1
    %p72 = por %p70, %p71
    %p73 = scmp.ne.s32.totalorder %s65, %s68
    %p74 = scmp.eq.s32.totalorder %s8, 0
    %p75 = por %p73, %p74
    %p76 = scmp.ne.s32.totalorder %s65, %s68
    %p77 = scmp.eq.s32.totalorder %s13, 1
    %p78 = por %p76, %p77
    %p79 = scmp.ne.s32.totalorder %s68, %s69
    %p80 = scmp.eq.s32.totalorder %s13, 0
    %p81 = por %p79, %p80
    %p82 = scmp.ne.s32.totalorder %s68, %s69
    %p83 = scmp.eq.s32.totalorder %s14, 1
    %p84 = por %p82, %p83
    %p86 = scmp.ne.s32.totalorder %s69, %s85
    %p87 = scmp.eq.s32.totalorder %s14, 0
    %p88 = por %p86, %p87
    %p89 = scmp.le.s32.totalorder 1, %s8
    %p90 = scmp.lt.s32.totalorder %s8, 3
    %p91 = pnand %p89, %p90
    %p92 = pneg %p91
    // Predicated region
    $region9: #{_lambda_.2} parent=5 // pred_check
      _
    $region10: #{_lambda_.2} parent=5 // pred_check_branch
      %94 = sbr.rel (%p91) target = $region12
    $region11: #{_lambda_.2} parent=5 // pred_region
      %s95 = ssub.s32 %s8, 1
      // Predicated region
      $region13: #{_lambda_.2} parent=11 // pred_check
        %p96 = pneg %p55
      $region14: #{_lambda_.2} parent=11 // pred_check_branch
        %98 = sbr.rel (%p96) target = $region16
      $region15: #{_lambda_.2} parent=11 // pred_region
        _
      $region16: #{_lambda_.2} parent=11 // pred_fallthru
        _
    $region12: #{_lambda_.2} parent=5 // pred_fallthru
      _
    %p99 = scmp.lt.s32.totalorder %s8, 2
    // Predicated region
    $region17: #{_lambda_.2} parent=5 // pred_check
      %p100 = pneg %p99
    $region18: #{_lambda_.2} parent=5 // pred_check_branch
      %102 = sbr.rel (%p100) target = $region20
    $region19: #{_lambda_.2} parent=5 // pred_region
      // Predicated region
      $region21: #{_lambda_.2} parent=19 // pred_check
        %p103 = pneg %p28
      $region22: #{_lambda_.2} parent=19 // pred_check_branch
        %105 = sbr.rel (%p103) target = $region24
      $region23: #{_lambda_.2} parent=19 // pred_region
        %p106 = scmp.lt.s32.totalorder %s8, 1
        %s107 = scalar_select %p106, %s8, 1
        %s108 = smul.addr %s107, 32
        %s109 = scalar_lea.vmem %s0, %s108
      $region24: #{_lambda_.2} parent=19 // pred_fallthru
        _
    $region20: #{_lambda_.2} parent=5 // pred_fallthru
      _
    %p110 = scmp.le.s32.totalorder 1, %s8
    %p111 = scmp.lt.s32.totalorder %s8, 3
    %p112 = pnand %p110, %p111
    %p113 = pneg %p112
    // Predicated region
    $region25: #{_lambda_.2} parent=5 // pred_check
      _
    $region26: #{_lambda_.2} parent=5 // pred_check_branch
      %115 = sbr.rel (%p112) target = $region28
    $region27: #{_lambda_.2} parent=5 // pred_region
      %s116 = ssub.s32 %s8, 1
      %p117 = scmp.lt.s32.totalorder %s13, 1
      %s118 = scalar_select %p117, %s13, 1
      %s119 = smul.addr %s118, 32
      %s120 = scalar_lea.vmem %s0, %s119
      %p121 = pneg %p34
      %p122 = pneg %p31
      %p123 = pneg %p55
      %p124 = pneg %p52
      %p125 = pneg %p81
      %p126 = pneg %p78
      %p127 = scmp.lt.s32.totalorder %s13, 1
      %s128 = scalar_select %p127, %s13, 1
      %s129 = smul.addr %s128, 16
      %s130 = scalar_lea.vmem %s2, %s129
      %p131 = scmp.lt.s32.totalorder %s13, 1
      %s132 = scalar_select %p131, %s13, 1
      %s133 = smul.addr %s132, 32
      %s134 = scalar_lea.vmem %s0, %s133
      %p135 = scmp.lt.s32.totalorder %s13, 1
      %s136 = scalar_select %p135, %s13, 1
      %s137 = smul.addr %s136, 16
      %s138 = scalar_lea.vmem %s2, %s137
      %vm140 = vcmask 1041408
      %vm141 = vsmask.f32 1280
      %vm142 = vmand %vm140, %vm141
      %v143 = vld [vmem:[#allocation2] sm:$0x3]
      %v144 = vsel %vm142, 0, %v143
      %145 = vst [vmem:[#allocation2] sm:$0x3] %v144
      %s146 = scalar_lea.vmem [#allocation2], 66
      %v147 = vld [vmem:[%s146] sm:$0x3]
      %v148 = vsel %vm142, 0, %v147
      %149 = vst [vmem:[%s146] sm:$0x3] %v148
      %s150 = scalar_lea.vmem [#allocation2], 2
      %vm151 = vcmask 1040384
      %vm152 = vsmask.f32 256
      %vm153 = vmand %vm151, %vm152
      %v154 = vld [vmem:[%s150] sm:$0x1]
      %v155 = vsel %vm153, 0, %v154
      %156 = vst [vmem:[%s150] sm:$0x1] %v155
      %v157 = vld [vmem:[%s150 + $0x2] sm:$0x1]
      %v158 = vsel %vm153, 0, %v157
      %159 = vst [vmem:[%s150 + $0x2] sm:$0x1] %v158
      %v160 = vld [vmem:[%s150 + $0x4] sm:$0x1]
      %v161 = vsel %vm153, 0, %v160
      %162 = vst [vmem:[%s150 + $0x4] sm:$0x1] %v161
      %v163 = vld [vmem:[%s150 + $0x6] sm:$0x1]
      %v164 = vsel %vm153, 0, %v163
      %165 = vst [vmem:[%s150 + $0x6] sm:$0x1] %v164
      %v166 = vld [vmem:[%s150 + $0x8] sm:$0x1]
      %v167 = vsel %vm153, 0, %v166
      %168 = vst [vmem:[%s150 + $0x8] sm:$0x1] %v167
      %v169 = vld [vmem:[%s150 + $0xa] sm:$0x1]
      %v170 = vsel %vm153, 0, %v169
      %171 = vst [vmem:[%s150 + $0xa] sm:$0x1] %v170
      %v172 = vld [vmem:[%s150 + $0xc] sm:$0x1]
      %v173 = vsel %vm153, 0, %v172
      %174 = vst [vmem:[%s150 + $0xc] sm:$0x1] %v173
      %v175 = vld [vmem:[%s150 + $0xe] sm:$0x1]
      %v176 = vsel %vm153, 0, %v175
      %177 = vst [vmem:[%s150 + $0xe] sm:$0x1] %v176
      %v178 = vld [vmem:[%s150 + $0x10] sm:$0x1]
      %v179 = vsel %vm153, 0, %v178
      %180 = vst [vmem:[%s150 + $0x10] sm:$0x1] %v179
      %v181 = vld [vmem:[%s150 + $0x12] sm:$0x1]
      %v182 = vsel %vm153, 0, %v181
      %183 = vst [vmem:[%s150 + $0x12] sm:$0x1] %v182
      %v184 = vld [vmem:[%s150 + $0x14] sm:$0x1]
      %v185 = vsel %vm153, 0, %v184
      %186 = vst [vmem:[%s150 + $0x14] sm:$0x1] %v185
      %v187 = vld [vmem:[%s150 + $0x16] sm:$0x1]
      %v188 = vsel %vm153, 0, %v187
      %189 = vst [vmem:[%s150 + $0x16] sm:$0x1] %v188
      %v190 = vld [vmem:[%s150 + $0x18] sm:$0x1]
      %v191 = vsel %vm153, 0, %v190
      %192 = vst [vmem:[%s150 + $0x18] sm:$0x1] %v191
      %v193 = vld [vmem:[%s150 + $0x1a] sm:$0x1]
      %v194 = vsel %vm153, 0, %v193
      %195 = vst [vmem:[%s150 + $0x1a] sm:$0x1] %v194
      %v196 = vld [vmem:[%s150 + $0x1c] sm:$0x1]
      %v197 = vsel %vm153, 0, %v196
      %198 = vst [vmem:[%s150 + $0x1c] sm:$0x1] %v197
      %v199 = vld [vmem:[%s150 + $0x1e] sm:$0x1]
      %v200 = vsel %vm153, 0, %v199
      %201 = vst [vmem:[%s150 + $0x1e] sm:$0x1] %v200
      %v202 = vld [vmem:[%s150 + $0x20] sm:$0x1]
      %v203 = vsel %vm153, 0, %v202
      %204 = vst [vmem:[%s150 + $0x20] sm:$0x1] %v203
      %v205 = vld [vmem:[%s150 + $0x22] sm:$0x1]
      %v206 = vsel %vm153, 0, %v205
      %207 = vst [vmem:[%s150 + $0x22] sm:$0x1] %v206
      %v208 = vld [vmem:[%s150 + $0x24] sm:$0x1]
      %v209 = vsel %vm153, 0, %v208
      %210 = vst [vmem:[%s150 + $0x24] sm:$0x1] %v209
      %v211 = vld [vmem:[%s150 + $0x26] sm:$0x1]
      %v212 = vsel %vm153, 0, %v211
      %213 = vst [vmem:[%s150 + $0x26] sm:$0x1] %v212
      %v214 = vld [vmem:[%s150 + $0x28] sm:$0x1]
      %v215 = vsel %vm153, 0, %v214
      %216 = vst [vmem:[%s150 + $0x28] sm:$0x1] %v215
      %v217 = vld [vmem:[%s150 + $0x2a] sm:$0x1]
      %v218 = vsel %vm153, 0, %v217
      %219 = vst [vmem:[%s150 + $0x2a] sm:$0x1] %v218
      %v220 = vld [vmem:[%s150 + $0x2c] sm:$0x1]
      %v221 = vsel %vm153, 0, %v220
      %222 = vst [vmem:[%s150 + $0x2c] sm:$0x1] %v221
      %v223 = vld [vmem:[%s150 + $0x2e] sm:$0x1]
      %v224 = vsel %vm153, 0, %v223
      %225 = vst [vmem:[%s150 + $0x2e] sm:$0x1] %v224
      %v226 = vld [vmem:[%s150 + $0x30] sm:$0x1]
      %v227 = vsel %vm153, 0, %v226
      %228 = vst [vmem:[%s150 + $0x30] sm:$0x1] %v227
      %v229 = vld [vmem:[%s150 + $0x32] sm:$0x1]
      %v230 = vsel %vm153, 0, %v229
      %231 = vst [vmem:[%s150 + $0x32] sm:$0x1] %v230
      %v232 = vld [vmem:[%s150 + $0x34] sm:$0x1]
      %v233 = vsel %vm153, 0, %v232
      %234 = vst [vmem:[%s150 + $0x34] sm:$0x1] %v233
      %v235 = vld [vmem:[%s150 + $0x36] sm:$0x1]
      %v236 = vsel %vm153, 0, %v235
      %237 = vst [vmem:[%s150 + $0x36] sm:$0x1] %v236
      %v238 = vld [vmem:[%s150 + $0x38] sm:$0x1]
      %v239 = vsel %vm153, 0, %v238
      %240 = vst [vmem:[%s150 + $0x38] sm:$0x1] %v239
      %v241 = vld [vmem:[%s150 + $0x3a] sm:$0x1]
      %v242 = vsel %vm153, 0, %v241
      %243 = vst [vmem:[%s150 + $0x3a] sm:$0x1] %v242
      %v244 = vld [vmem:[%s150 + $0x3c] sm:$0x1]
      %v245 = vsel %vm153, 0, %v244
      %246 = vst [vmem:[%s150 + $0x3c] sm:$0x1] %v245
      %v247 = vld [vmem:[%s150 + $0x3e] sm:$0x1]
      %v248 = vsel %vm153, 0, %v247
      %249 = vst [vmem:[%s150 + $0x3e] sm:$0x1] %v248
      %vm250 = vcmask 1041409
      %vm251 = vmand %vm250, %vm141
      %v252 = vld [vmem:[%s150] sm:$0x2]
      %v253 = vsel %vm251, 0, %v252
      %254 = vst [vmem:[%s150] sm:$0x2] %v253
      %v255 = vld [vmem:[%s150 + $0x2] sm:$0x2]
      %v256 = vsel %vm251, 0, %v255
      %257 = vst [vmem:[%s150 + $0x2] sm:$0x2] %v256
      %v258 = vld [vmem:[%s150 + $0x4] sm:$0x2]
      %v259 = vsel %vm251, 0, %v258
      %260 = vst [vmem:[%s150 + $0x4] sm:$0x2] %v259
      %v261 = vld [vmem:[%s150 + $0x6] sm:$0x2]
      %v262 = vsel %vm251, 0, %v261
      %263 = vst [vmem:[%s150 + $0x6] sm:$0x2] %v262
      %v264 = vld [vmem:[%s150 + $0x8] sm:$0x2]
      %v265 = vsel %vm251, 0, %v264
      %266 = vst [vmem:[%s150 + $0x8] sm:$0x2] %v265
      %v267 = vld [vmem:[%s150 + $0xa] sm:$0x2]
      %v268 = vsel %vm251, 0, %v267
      %269 = vst [vmem:[%s150 + $0xa] sm:$0x2] %v268
      %v270 = vld [vmem:[%s150 + $0xc] sm:$0x2]
      %v271 = vsel %vm251, 0, %v270
      %272 = vst [vmem:[%s150 + $0xc] sm:$0x2] %v271
      %v273 = vld [vmem:[%s150 + $0xe] sm:$0x2]
      %v274 = vsel %vm251, 0, %v273
      %275 = vst [vmem:[%s150 + $0xe] sm:$0x2] %v274
      %v276 = vld [vmem:[%s150 + $0x10] sm:$0x2]
      %v277 = vsel %vm251, 0, %v276
      %278 = vst [vmem:[%s150 + $0x10] sm:$0x2] %v277
      %v279 = vld [vmem:[%s150 + $0x12] sm:$0x2]
      %v280 = vsel %vm251, 0, %v279
      %281 = vst [vmem:[%s150 + $0x12] sm:$0x2] %v280
      %v282 = vld [vmem:[%s150 + $0x14] sm:$0x2]
      %v283 = vsel %vm251, 0, %v282
      %284 = vst [vmem:[%s150 + $0x14] sm:$0x2] %v283
      %v285 = vld [vmem:[%s150 + $0x16] sm:$0x2]
      %v286 = vsel %vm251, 0, %v285
      %287 = vst [vmem:[%s150 + $0x16] sm:$0x2] %v286
      %v288 = vld [vmem:[%s150 + $0x18] sm:$0x2]
      %v289 = vsel %vm251, 0, %v288
      %290 = vst [vmem:[%s150 + $0x18] sm:$0x2] %v289
      %v291 = vld [vmem:[%s150 + $0x1a] sm:$0x2]
      %v292 = vsel %vm251, 0, %v291
      %293 = vst [vmem:[%s150 + $0x1a] sm:$0x2] %v292
      %v294 = vld [vmem:[%s150 + $0x1c] sm:$0x2]
      %v295 = vsel %vm251, 0, %v294
      %296 = vst [vmem:[%s150 + $0x1c] sm:$0x2] %v295
      %v297 = vld [vmem:[%s150 + $0x1e] sm:$0x2]
      %v298 = vsel %vm251, 0, %v297
      %299 = vst [vmem:[%s150 + $0x1e] sm:$0x2] %v298
      %v300 = vld [vmem:[%s150 + $0x20] sm:$0x2]
      %v301 = vsel %vm251, 0, %v300
      %302 = vst [vmem:[%s150 + $0x20] sm:$0x2] %v301
      %v303 = vld [vmem:[%s150 + $0x22] sm:$0x2]
      %v304 = vsel %vm251, 0, %v303
      %305 = vst [vmem:[%s150 + $0x22] sm:$0x2] %v304
      %v306 = vld [vmem:[%s150 + $0x24] sm:$0x2]
      %v307 = vsel %vm251, 0, %v306
      %308 = vst [vmem:[%s150 + $0x24] sm:$0x2] %v307
      %v309 = vld [vmem:[%s150 + $0x26] sm:$0x2]
      %v310 = vsel %vm251, 0, %v309
      %311 = vst [vmem:[%s150 + $0x26] sm:$0x2] %v310
      %v312 = vld [vmem:[%s150 + $0x28] sm:$0x2]
      %v313 = vsel %vm251, 0, %v312
      %314 = vst [vmem:[%s150 + $0x28] sm:$0x2] %v313
      %v315 = vld [vmem:[%s150 + $0x2a] sm:$0x2]
      %v316 = vsel %vm251, 0, %v315
      %317 = vst [vmem:[%s150 + $0x2a] sm:$0x2] %v316
      %v318 = vld [vmem:[%s150 + $0x2c] sm:$0x2]
      %v319 = vsel %vm251, 0, %v318
      %320 = vst [vmem:[%s150 + $0x2c] sm:$0x2] %v319
      %v321 = vld [vmem:[%s150 + $0x2e] sm:$0x2]
      %v322 = vsel %vm251, 0, %v321
      %323 = vst [vmem:[%s150 + $0x2e] sm:$0x2] %v322
      %v324 = vld [vmem:[%s150 + $0x30] sm:$0x2]
      %v325 = vsel %vm251, 0, %v324
      %326 = vst [vmem:[%s150 + $0x30] sm:$0x2] %v325
      %v327 = vld [vmem:[%s150 + $0x32] sm:$0x2]
      %v328 = vsel %vm251, 0, %v327
      %329 = vst [vmem:[%s150 + $0x32] sm:$0x2] %v328
      %v330 = vld [vmem:[%s150 + $0x34] sm:$0x2]
      %v331 = vsel %vm251, 0, %v330
      %332 = vst [vmem:[%s150 + $0x34] sm:$0x2] %v331
      %v333 = vld [vmem:[%s150 + $0x36] sm:$0x2]
      %v334 = vsel %vm251, 0, %v333
      %335 = vst [vmem:[%s150 + $0x36] sm:$0x2] %v334
      %v336 = vld [vmem:[%s150 + $0x38] sm:$0x2]
      %v337 = vsel %vm251, 0, %v336
      %338 = vst [vmem:[%s150 + $0x38] sm:$0x2] %v337
      %v339 = vld [vmem:[%s150 + $0x3a] sm:$0x2]
      %v340 = vsel %vm251, 0, %v339
      %341 = vst [vmem:[%s150 + $0x3a] sm:$0x2] %v340
      %v342 = vld [vmem:[%s150 + $0x3c] sm:$0x2]
      %v343 = vsel %vm251, 0, %v342
      %344 = vst [vmem:[%s150 + $0x3c] sm:$0x2] %v343
      %v345 = vld [vmem:[%s150 + $0x3e] sm:$0x2]
      %v346 = vsel %vm251, 0, %v345
      %347 = vst [vmem:[%s150 + $0x3e] sm:$0x2] %v346
      %v348 = vld [vmem:[%s134] sm:$0x1]
      %v349 = vld [vmem:[%s134 + $0x1] sm:$0x1]
      %v350 = vld [vmem:[%s134 + $0x2] sm:$0x1]
      %v351 = vld [vmem:[%s134 + $0x3] sm:$0x1]
      %v352 = vld [vmem:[%s134 + $0x4] sm:$0x1]
      %v353 = vld [vmem:[%s134 + $0x5] sm:$0x1]
      %v354 = vld [vmem:[%s134 + $0x6] sm:$0x1]
      %v355 = vld [vmem:[%s134 + $0x7] sm:$0x1]
      %v356 = vld [vmem:[%s134 + $0x8] sm:$0x1]
      %v357 = vld [vmem:[%s134 + $0x9] sm:$0x1]
      %v358 = vld [vmem:[%s134 + $0xa] sm:$0x1]
      %v359 = vld [vmem:[%s134 + $0xb] sm:$0x1]
      %v360 = vld [vmem:[%s134 + $0xc] sm:$0x1]
      %v361 = vld [vmem:[%s134 + $0xd] sm:$0x1]
      %v362 = vld [vmem:[%s134 + $0xe] sm:$0x1]
      %v363 = vld [vmem:[%s134 + $0xf] sm:$0x1]
      %v364 = vld [vmem:[%s134 + $0x10] sm:$0x1]
      %v365 = vld [vmem:[%s134 + $0x11] sm:$0x1]
      %v366 = vld [vmem:[%s134 + $0x12] sm:$0x1]
      %v367 = vld [vmem:[%s134 + $0x13] sm:$0x1]
      %v368 = vld [vmem:[%s134 + $0x14] sm:$0x1]
      %v369 = vld [vmem:[%s134 + $0x15] sm:$0x1]
      %v370 = vld [vmem:[%s134 + $0x16] sm:$0x1]
      %v371 = vld [vmem:[%s134 + $0x17] sm:$0x1]
      %v372 = vld [vmem:[%s134 + $0x18] sm:$0x1]
      %v373 = vld [vmem:[%s134 + $0x19] sm:$0x1]
      %v374 = vld [vmem:[%s134 + $0x1a] sm:$0x1]
      %v375 = vld [vmem:[%s134 + $0x1b] sm:$0x1]
      %v376 = vld [vmem:[%s134 + $0x1c] sm:$0x1]
      %v377 = vld [vmem:[%s134 + $0x1d] sm:$0x1]
      %v378 = vld [vmem:[%s134 + $0x1e] sm:$0x1]
      %v379 = vld [vmem:[%s134 + $0x1f] sm:$0x1]
      %v380 = vpack.c.bf16 %v348, %v348
      %v381 = vpack.c.bf16 %v349, %v349
      %v382 = vpack.c.bf16 %v350, %v350
      %v383 = vpack.c.bf16 %v351, %v351
      %v384 = vpack.c.bf16 %v352, %v352
      %v385 = vpack.c.bf16 %v353, %v353
      %v386 = vpack.c.bf16 %v354, %v354
      %v387 = vpack.c.bf16 %v355, %v355
      %v388 = vpack.c.bf16 %v356, %v356
      %v389 = vpack.c.bf16 %v357, %v357
      %v390 = vpack.c.bf16 %v358, %v358
      %v391 = vpack.c.bf16 %v359, %v359
      %v392 = vpack.c.bf16 %v360, %v360
      %v393 = vpack.c.bf16 %v361, %v361
      %v394 = vpack.c.bf16 %v362, %v362
      %v395 = vpack.c.bf16 %v363, %v363
      %v396 = vpack.c.bf16 %v364, %v364
      %v397 = vpack.c.bf16 %v365, %v365
      %v398 = vpack.c.bf16 %v366, %v366
      %v399 = vpack.c.bf16 %v367, %v367
      %v400 = vpack.c.bf16 %v368, %v368
      %v401 = vpack.c.bf16 %v369, %v369
      %v402 = vpack.c.bf16 %v370, %v370
      %v403 = vpack.c.bf16 %v371, %v371
      %v404 = vpack.c.bf16 %v372, %v372
      %v405 = vpack.c.bf16 %v373, %v373
      %v406 = vpack.c.bf16 %v374, %v374
      %v407 = vpack.c.bf16 %v375, %v375
      %v408 = vpack.c.bf16 %v376, %v376
      %v409 = vpack.c.bf16 %v377, %v377
      %v410 = vpack.c.bf16 %v378, %v378
      %v411 = vpack.c.bf16 %v379, %v379
      %v445 = vunpack.c.l.s4 1983009808
      %v446 = vunpack.c.0.s8 %v445
      %v447 = vlaneseq
      %v448 = vshrl.u32 %v447, 7
      %v449 = vsub.s32 %v446, %v448
      %v450 = vrot.slane %v380, %v449
      %v452 = vunpack.c.l.s4 1983009808
      %v453 = vunpack.c.0.s8 %v452
      %v454 = vlaneseq
      %v455 = vshrl.u32 %v454, 7
      %v456 = vsub.s32 %v453, %v455
      %v457 = vrot.slane %v381, %v456
      %v459 = vunpack.c.l.s4 1983009808
      %v460 = vunpack.c.0.s8 %v459
      %v461 = vlaneseq
      %v462 = vshrl.u32 %v461, 7
      %v463 = vsub.s32 %v460, %v462
      %v464 = vrot.slane %v382, %v463
      %v466 = vunpack.c.l.s4 1983009808
      %v467 = vunpack.c.0.s8 %v466
      %v468 = vlaneseq
      %v469 = vshrl.u32 %v468, 7
      %v470 = vsub.s32 %v467, %v469
      %v471 = vrot.slane %v383, %v470
      %v473 = vunpack.c.l.s4 1983009808
      %v474 = vunpack.c.0.s8 %v473
      %v475 = vlaneseq
      %v476 = vshrl.u32 %v475, 7
      %v477 = vsub.s32 %v474, %v476
      %v478 = vrot.slane %v384, %v477
      %v480 = vunpack.c.l.s4 1983009808
      %v481 = vunpack.c.0.s8 %v480
      %v482 = vlaneseq
      %v483 = vshrl.u32 %v482, 7
      %v484 = vsub.s32 %v481, %v483
      %v485 = vrot.slane %v385, %v484
      %v487 = vunpack.c.l.s4 1983009808
      %v488 = vunpack.c.0.s8 %v487
      %v489 = vlaneseq
      %v490 = vshrl.u32 %v489, 7
      %v491 = vsub.s32 %v488, %v490
      %v492 = vrot.slane %v386, %v491
      %v494 = vunpack.c.l.s4 1983009808
      %v495 = vunpack.c.0.s8 %v494
      %v496 = vlaneseq
      %v497 = vshrl.u32 %v496, 7
      %v498 = vsub.s32 %v495, %v497
      %v499 = vrot.slane %v387, %v498
      %v501 = vunpack.c.l.s4 1983009808
      %v502 = vunpack.c.0.s8 %v501
      %v503 = vlaneseq
      %v504 = vshrl.u32 %v503, 7
      %v505 = vsub.s32 %v502, %v504
      %v506 = vrot.slane %v388, %v505
      %v508 = vunpack.c.l.s4 1983009808
      %v509 = vunpack.c.0.s8 %v508
      %v510 = vlaneseq
      %v511 = vshrl.u32 %v510, 7
      %v512 = vsub.s32 %v509, %v511
      %v513 = vrot.slane %v389, %v512
      %v515 = vunpack.c.l.s4 1983009808
      %v516 = vunpack.c.0.s8 %v515
      %v517 = vlaneseq
      %v518 = vshrl.u32 %v517, 7
      %v519 = vsub.s32 %v516, %v518
      %v520 = vrot.slane %v390, %v519
      %v522 = vunpack.c.l.s4 1983009808
      %v523 = vunpack.c.0.s8 %v522
      %v524 = vlaneseq
      %v525 = vshrl.u32 %v524, 7
      %v526 = vsub.s32 %v523, %v525
      %v527 = vrot.slane %v391, %v526
      %v529 = vunpack.c.l.s4 1983009808
      %v530 = vunpack.c.0.s8 %v529
      %v531 = vlaneseq
      %v532 = vshrl.u32 %v531, 7
      %v533 = vsub.s32 %v530, %v532
      %v534 = vrot.slane %v392, %v533
      %v536 = vunpack.c.l.s4 1983009808
      %v537 = vunpack.c.0.s8 %v536
      %v538 = vlaneseq
      %v539 = vshrl.u32 %v538, 7
      %v540 = vsub.s32 %v537, %v539
      %v541 = vrot.slane %v393, %v540
      %v543 = vunpack.c.l.s4 1983009808
      %v544 = vunpack.c.0.s8 %v543
      %v545 = vlaneseq
      %v546 = vshrl.u32 %v545, 7
      %v547 = vsub.s32 %v544, %v546
      %v548 = vrot.slane %v394, %v547
      %v550 = vunpack.c.l.s4 1983009808
      %v551 = vunpack.c.0.s8 %v550
      %v552 = vlaneseq
      %v553 = vshrl.u32 %v552, 7
      %v554 = vsub.s32 %v551, %v553
      %v555 = vrot.slane %v395, %v554
      %v557 = vunpack.c.l.s4 1983009808
      %v558 = vunpack.c.0.s8 %v557
      %v559 = vlaneseq
      %v560 = vshrl.u32 %v559, 7
      %v561 = vsub.s32 %v558, %v560
      %v562 = vrot.slane %v396, %v561
      %v564 = vunpack.c.l.s4 1983009808
      %v565 = vunpack.c.0.s8 %v564
      %v566 = vlaneseq
      %v567 = vshrl.u32 %v566, 7
      %v568 = vsub.s32 %v565, %v567
      %v569 = vrot.slane %v397, %v568
      %v571 = vunpack.c.l.s4 1983009808
      %v572 = vunpack.c.0.s8 %v571
      %v573 = vlaneseq
      %v574 = vshrl.u32 %v573, 7
      %v575 = vsub.s32 %v572, %v574
      %v576 = vrot.slane %v398, %v575
      %v578 = vunpack.c.l.s4 1983009808
      %v579 = vunpack.c.0.s8 %v578
      %v580 = vlaneseq
      %v581 = vshrl.u32 %v580, 7
      %v582 = vsub.s32 %v579, %v581
      %v583 = vrot.slane %v399, %v582
      %v585 = vunpack.c.l.s4 1983009808
      %v586 = vunpack.c.0.s8 %v585
      %v587 = vlaneseq
      %v588 = vshrl.u32 %v587, 7
      %v589 = vsub.s32 %v586, %v588
      %v590 = vrot.slane %v400, %v589
      %v592 = vunpack.c.l.s4 1983009808
      %v593 = vunpack.c.0.s8 %v592
      %v594 = vlaneseq
      %v595 = vshrl.u32 %v594, 7
      %v596 = vsub.s32 %v593, %v595
      %v597 = vrot.slane %v401, %v596
      %v599 = vunpack.c.l.s4 1983009808
      %v600 = vunpack.c.0.s8 %v599
      %v601 = vlaneseq
      %v602 = vshrl.u32 %v601, 7
      %v603 = vsub.s32 %v600, %v602
      %v604 = vrot.slane %v402, %v603
      %v606 = vunpack.c.l.s4 1983009808
      %v607 = vunpack.c.0.s8 %v606
      %v608 = vlaneseq
      %v609 = vshrl.u32 %v608, 7
      %v610 = vsub.s32 %v607, %v609
      %v611 = vrot.slane %v403, %v610
      %v613 = vunpack.c.l.s4 1983009808
      %v614 = vunpack.c.0.s8 %v613
      %v615 = vlaneseq
      %v616 = vshrl.u32 %v615, 7
      %v617 = vsub.s32 %v614, %v616
      %v618 = vrot.slane %v404, %v617
      %v620 = vunpack.c.l.s4 1983009808
      %v621 = vunpack.c.0.s8 %v620
      %v622 = vlaneseq
      %v623 = vshrl.u32 %v622, 7
      %v624 = vsub.s32 %v621, %v623
      %v625 = vrot.slane %v405, %v624
      %v627 = vunpack.c.l.s4 1983009808
      %v628 = vunpack.c.0.s8 %v627
      %v629 = vlaneseq
      %v630 = vshrl.u32 %v629, 7
      %v631 = vsub.s32 %v628, %v630
      %v632 = vrot.slane %v406, %v631
      %v634 = vunpack.c.l.s4 1983009808
      %v635 = vunpack.c.0.s8 %v634
      %v636 = vlaneseq
      %v637 = vshrl.u32 %v636, 7
      %v638 = vsub.s32 %v635, %v637
      %v639 = vrot.slane %v407, %v638
      %v641 = vunpack.c.l.s4 1983009808
      %v642 = vunpack.c.0.s8 %v641
      %v643 = vlaneseq
      %v644 = vshrl.u32 %v643, 7
      %v645 = vsub.s32 %v642, %v644
      %v646 = vrot.slane %v408, %v645
      %v648 = vunpack.c.l.s4 1983009808
      %v649 = vunpack.c.0.s8 %v648
      %v650 = vlaneseq
      %v651 = vshrl.u32 %v650, 7
      %v652 = vsub.s32 %v649, %v651
      %v653 = vrot.slane %v409, %v652
      %v655 = vunpack.c.l.s4 1983009808
      %v656 = vunpack.c.0.s8 %v655
      %v657 = vlaneseq
      %v658 = vshrl.u32 %v657, 7
      %v659 = vsub.s32 %v656, %v658
      %v660 = vrot.slane %v410, %v659
      %v662 = vunpack.c.l.s4 1983009808
      %v663 = vunpack.c.0.s8 %v662
      %v664 = vlaneseq
      %v665 = vshrl.u32 %v664, 7
      %v666 = vsub.s32 %v663, %v665
      %v667 = vrot.slane %v411, %v666
      %v669 = vshll.u32 %v450, 16
      %v672 = vshll.u32 %v457, 16
      %v675 = vshll.u32 %v464, 16
      %v678 = vshll.u32 %v471, 16
      %v681 = vshll.u32 %v478, 16
      %v684 = vshll.u32 %v485, 16
      %v687 = vshll.u32 %v492, 16
      %v690 = vshll.u32 %v499, 16
      %v693 = vshll.u32 %v506, 16
      %v696 = vshll.u32 %v513, 16
      %v699 = vshll.u32 %v520, 16
      %v702 = vshll.u32 %v527, 16
      %v705 = vshll.u32 %v534, 16
      %v708 = vshll.u32 %v541, 16
      %v711 = vshll.u32 %v548, 16
      %v714 = vshll.u32 %v555, 16
      %v717 = vshll.u32 %v562, 16
      %v720 = vshll.u32 %v569, 16
      %v723 = vshll.u32 %v576, 16
      %v726 = vshll.u32 %v583, 16
      %v729 = vshll.u32 %v590, 16
      %v732 = vshll.u32 %v597, 16
      %v735 = vshll.u32 %v604, 16
      %v738 = vshll.u32 %v611, 16
      %v741 = vshll.u32 %v618, 16
      %v744 = vshll.u32 %v625, 16
      %v747 = vshll.u32 %v632, 16
      %v750 = vshll.u32 %v639, 16
      %v753 = vshll.u32 %v646, 16
      %v756 = vshll.u32 %v653, 16
      %v759 = vshll.u32 %v660, 16
      %v762 = vshll.u32 %v667, 16
      %vm796 = vsmask.f32 7938
      %vm797 = vmand %vm151, %vm796
      %v798 = vld [vmem:[%s150] sm:$0x1]
      %v799 = vsel %vm797, %v669, %v798
      %800 = vst [vmem:[%s150] sm:$0x1] %v799
      %v801 = vld [vmem:[%s150 + $0x2] sm:$0x1]
      %v802 = vsel %vm797, %v672, %v801
      %803 = vst [vmem:[%s150 + $0x2] sm:$0x1] %v802
      %v804 = vld [vmem:[%s150 + $0x4] sm:$0x1]
      %v805 = vsel %vm797, %v675, %v804
      %806 = vst [vmem:[%s150 + $0x4] sm:$0x1] %v805
      %v807 = vld [vmem:[%s150 + $0x6] sm:$0x1]
      %v808 = vsel %vm797, %v678, %v807
      %809 = vst [vmem:[%s150 + $0x6] sm:$0x1] %v808
      %v810 = vld [vmem:[%s150 + $0x8] sm:$0x1]
      %v811 = vsel %vm797, %v681, %v810
      %812 = vst [vmem:[%s150 + $0x8] sm:$0x1] %v811
      %v813 = vld [vmem:[%s150 + $0xa] sm:$0x1]
      %v814 = vsel %vm797, %v684, %v813
      %815 = vst [vmem:[%s150 + $0xa] sm:$0x1] %v814
      %v816 = vld [vmem:[%s150 + $0xc] sm:$0x1]
      %v817 = vsel %vm797, %v687, %v816
      %818 = vst [vmem:[%s150 + $0xc] sm:$0x1] %v817
      %v819 = vld [vmem:[%s150 + $0xe] sm:$0x1]
      %v820 = vsel %vm797, %v690, %v819
      %821 = vst [vmem:[%s150 + $0xe] sm:$0x1] %v820
      %v822 = vld [vmem:[%s150 + $0x10] sm:$0x1]
      %v823 = vsel %vm797, %v693, %v822
      %824 = vst [vmem:[%s150 + $0x10] sm:$0x1] %v823
      %v825 = vld [vmem:[%s150 + $0x12] sm:$0x1]
      %v826 = vsel %vm797, %v696, %v825
      %827 = vst [vmem:[%s150 + $0x12] sm:$0x1] %v826
      %v828 = vld [vmem:[%s150 + $0x14] sm:$0x1]
      %v829 = vsel %vm797, %v699, %v828
      %830 = vst [vmem:[%s150 + $0x14] sm:$0x1] %v829
      %v831 = vld [vmem:[%s150 + $0x16] sm:$0x1]
      %v832 = vsel %vm797, %v702, %v831
      %833 = vst [vmem:[%s150 + $0x16] sm:$0x1] %v832
      %v834 = vld [vmem:[%s150 + $0x18] sm:$0x1]
      %v835 = vsel %vm797, %v705, %v834
      %836 = vst [vmem:[%s150 + $0x18] sm:$0x1] %v835
      %v837 = vld [vmem:[%s150 + $0x1a] sm:$0x1]
      %v838 = vsel %vm797, %v708, %v837
      %839 = vst [vmem:[%s150 + $0x1a] sm:$0x1] %v838
      %v840 = vld [vmem:[%s150 + $0x1c] sm:$0x1]
      %v841 = vsel %vm797, %v711, %v840
      %842 = vst [vmem:[%s150 + $0x1c] sm:$0x1] %v841
      %v843 = vld [vmem:[%s150 + $0x1e] sm:$0x1]
      %v844 = vsel %vm797, %v714, %v843
      %845 = vst [vmem:[%s150 + $0x1e] sm:$0x1] %v844
      %v846 = vld [vmem:[%s150 + $0x20] sm:$0x1]
      %v847 = vsel %vm797, %v717, %v846
      %848 = vst [vmem:[%s150 + $0x20] sm:$0x1] %v847
      %v849 = vld [vmem:[%s150 + $0x22] sm:$0x1]
      %v850 = vsel %vm797, %v720, %v849
      %851 = vst [vmem:[%s150 + $0x22] sm:$0x1] %v850
      %v852 = vld [vmem:[%s150 + $0x24] sm:$0x1]
      %v853 = vsel %vm797, %v723, %v852
      %854 = vst [vmem:[%s150 + $0x24] sm:$0x1] %v853
      %v855 = vld [vmem:[%s150 + $0x26] sm:$0x1]
      %v856 = vsel %vm797, %v726, %v855
      %857 = vst [vmem:[%s150 + $0x26] sm:$0x1] %v856
      %v858 = vld [vmem:[%s150 + $0x28] sm:$0x1]
      %v859 = vsel %vm797, %v729, %v858
      %860 = vst [vmem:[%s150 + $0x28] sm:$0x1] %v859
      %v861 = vld [vmem:[%s150 + $0x2a] sm:$0x1]
      %v862 = vsel %vm797, %v732, %v861
      %863 = vst [vmem:[%s150 + $0x2a] sm:$0x1] %v862
      %v864 = vld [vmem:[%s150 + $0x2c] sm:$0x1]
      %v865 = vsel %vm797, %v735, %v864
      %866 = vst [vmem:[%s150 + $0x2c] sm:$0x1] %v865
      %v867 = vld [vmem:[%s150 + $0x2e] sm:$0x1]
      %v868 = vsel %vm797, %v738, %v867
      %869 = vst [vmem:[%s150 + $0x2e] sm:$0x1] %v868
      %v870 = vld [vmem:[%s150 + $0x30] sm:$0x1]
      %v871 = vsel %vm797, %v741, %v870
      %872 = vst [vmem:[%s150 + $0x30] sm:$0x1] %v871
      %v873 = vld [vmem:[%s150 + $0x32] sm:$0x1]
      %v874 = vsel %vm797, %v744, %v873
      %875 = vst [vmem:[%s150 + $0x32] sm:$0x1] %v874
      %v876 = vld [vmem:[%s150 + $0x34] sm:$0x1]
      %v877 = vsel %vm797, %v747, %v876
      %878 = vst [vmem:[%s150 + $0x34] sm:$0x1] %v877
      %v879 = vld [vmem:[%s150 + $0x36] sm:$0x1]
      %v880 = vsel %vm797, %v750, %v879
      %881 = vst [vmem:[%s150 + $0x36] sm:$0x1] %v880
      %v882 = vld [vmem:[%s150 + $0x38] sm:$0x1]
      %v883 = vsel %vm797, %v753, %v882
      %884 = vst [vmem:[%s150 + $0x38] sm:$0x1] %v883
      %v885 = vld [vmem:[%s150 + $0x3a] sm:$0x1]
      %v886 = vsel %vm797, %v756, %v885
      %887 = vst [vmem:[%s150 + $0x3a] sm:$0x1] %v886
      %v888 = vld [vmem:[%s150 + $0x3c] sm:$0x1]
      %v889 = vsel %vm797, %v759, %v888
      %890 = vst [vmem:[%s150 + $0x3c] sm:$0x1] %v889
      %v891 = vld [vmem:[%s150 + $0x3e] sm:$0x1]
      %v892 = vsel %vm797, %v762, %v891
      %893 = vst [vmem:[%s150 + $0x3e] sm:$0x1] %v892
      %v894 = vld [vmem:[#allocation2] sm:$0x3]
      %v895 = vld [vmem:[#allocation2 + $0x2] sm:$0x3]
      %v896 = vld [vmem:[#allocation2 + $0x4] sm:$0x3]
      %v897 = vld [vmem:[#allocation2 + $0x6] sm:$0x3]
      %v898 = vld [vmem:[#allocation2 + $0x8] sm:$0x3]
      %v899 = vld [vmem:[#allocation2 + $0xa] sm:$0x3]
      %v900 = vld [vmem:[#allocation2 + $0xc] sm:$0x3]
      %v901 = vld [vmem:[#allocation2 + $0xe] sm:$0x3]
      %v902 = vld [vmem:[#allocation2 + $0x10] sm:$0x3]
      %v903 = vld [vmem:[#allocation2 + $0x12] sm:$0x3]
      %v904 = vld [vmem:[#allocation2 + $0x14] sm:$0x3]
      %v905 = vld [vmem:[#allocation2 + $0x16] sm:$0x3]
      %v906 = vld [vmem:[#allocation2 + $0x18] sm:$0x3]
      %v907 = vld [vmem:[#allocation2 + $0x1a] sm:$0x3]
      %v908 = vld [vmem:[#allocation2 + $0x1c] sm:$0x3]
      %v909 = vld [vmem:[#allocation2 + $0x1e] sm:$0x3]
      %v910 = vld [vmem:[#allocation2 + $0x20] sm:$0x3]
      %v911 = vld [vmem:[#allocation2 + $0x22] sm:$0x3]
      %v912 = vld [vmem:[#allocation2 + $0x24] sm:$0x3]
      %v913 = vld [vmem:[#allocation2 + $0x26] sm:$0x3]
      %v914 = vld [vmem:[#allocation2 + $0x28] sm:$0x3]
      %v915 = vld [vmem:[#allocation2 + $0x2a] sm:$0x3]
      %v916 = vld [vmem:[#allocation2 + $0x2c] sm:$0x3]
      %v917 = vld [vmem:[#allocation2 + $0x2e] sm:$0x3]
      %v918 = vld [vmem:[#allocation2 + $0x30] sm:$0x3]
      %v919 = vld [vmem:[#allocation2 + $0x32] sm:$0x3]
      %v920 = vld [vmem:[#allocation2 + $0x34] sm:$0x3]
      %v921 = vld [vmem:[#allocation2 + $0x36] sm:$0x3]
      %v922 = vld [vmem:[#allocation2 + $0x38] sm:$0x3]
      %v923 = vld [vmem:[#allocation2 + $0x3a] sm:$0x3]
      %v924 = vld [vmem:[#allocation2 + $0x3c] sm:$0x3]
      %v925 = vld [vmem:[#allocation2 + $0x3e] sm:$0x3]
      %v926 = vld [vmem:[#allocation2 + $0x40] sm:$0x3]
      %v927 = vld [vmem:[#allocation2 + $0x42] sm:$0x3]
      %v961 = vunpack.c.l.s4 1983009808
      %v962 = vunpack.c.0.s8 %v961
      %v963 = vlaneseq
      %v964 = vshrl.u32 %v963, 7
      %v965 = vsub.s32 %v962, %v964
      %v966 = vrot.slane %v894, %v965
      %v968 = vunpack.c.l.s4 1983009808
      %v969 = vunpack.c.0.s8 %v968
      %v970 = vlaneseq
      %v971 = vshrl.u32 %v970, 7
      %v972 = vsub.s32 %v969, %v971
      %v973 = vrot.slane %v895, %v972
      %v975 = vunpack.c.l.s4 1983009808
      %v976 = vunpack.c.0.s8 %v975
      %v977 = vlaneseq
      %v978 = vshrl.u32 %v977, 7
      %v979 = vsub.s32 %v976, %v978
      %v980 = vrot.slane %v896, %v979
      %v982 = vunpack.c.l.s4 1983009808
      %v983 = vunpack.c.0.s8 %v982
      %v984 = vlaneseq
      %v985 = vshrl.u32 %v984, 7
      %v986 = vsub.s32 %v983, %v985
      %v987 = vrot.slane %v897, %v986
      %v989 = vunpack.c.l.s4 1983009808
      %v990 = vunpack.c.0.s8 %v989
      %v991 = vlaneseq
      %v992 = vshrl.u32 %v991, 7
      %v993 = vsub.s32 %v990, %v992
      %v994 = vrot.slane %v898, %v993
      %v996 = vunpack.c.l.s4 1983009808
      %v997 = vunpack.c.0.s8 %v996
      %v998 = vlaneseq
      %v999 = vshrl.u32 %v998, 7
      %v1000 = vsub.s32 %v997, %v999
      %v1001 = vrot.slane %v899, %v1000
      %v1003 = vunpack.c.l.s4 1983009808
      %v1004 = vunpack.c.0.s8 %v1003
      %v1005 = vlaneseq
      %v1006 = vshrl.u32 %v1005, 7
      %v1007 = vsub.s32 %v1004, %v1006
      %v1008 = vrot.slane %v900, %v1007
      %v1010 = vunpack.c.l.s4 1983009808
      %v1011 = vunpack.c.0.s8 %v1010
      %v1012 = vlaneseq
      %v1013 = vshrl.u32 %v1012, 7
      %v1014 = vsub.s32 %v1011, %v1013
      %v1015 = vrot.slane %v901, %v1014
      %v1017 = vunpack.c.l.s4 1983009808
      %v1018 = vunpack.c.0.s8 %v1017
      %v1019 = vlaneseq
      %v1020 = vshrl.u32 %v1019, 7
      %v1021 = vsub.s32 %v1018, %v1020
      %v1022 = vrot.slane %v902, %v1021
      %v1024 = vunpack.c.l.s4 1983009808
      %v1025 = vunpack.c.0.s8 %v1024
      %v1026 = vlaneseq
      %v1027 = vshrl.u32 %v1026, 7
      %v1028 = vsub.s32 %v1025, %v1027
      %v1029 = vrot.slane %v903, %v1028
      %v1031 = vunpack.c.l.s4 1983009808
      %v1032 = vunpack.c.0.s8 %v1031
      %v1033 = vlaneseq
      %v1034 = vshrl.u32 %v1033, 7
      %v1035 = vsub.s32 %v1032, %v1034
      %v1036 = vrot.slane %v904, %v1035
      %v1038 = vunpack.c.l.s4 1983009808
      %v1039 = vunpack.c.0.s8 %v1038
      %v1040 = vlaneseq
      %v1041 = vshrl.u32 %v1040, 7
      %v1042 = vsub.s32 %v1039, %v1041
      %v1043 = vrot.slane %v905, %v1042
      %v1045 = vunpack.c.l.s4 1983009808
      %v1046 = vunpack.c.0.s8 %v1045
      %v1047 = vlaneseq
      %v1048 = vshrl.u32 %v1047, 7
      %v1049 = vsub.s32 %v1046, %v1048
      %v1050 = vrot.slane %v906, %v1049
      %v1052 = vunpack.c.l.s4 1983009808
      %v1053 = vunpack.c.0.s8 %v1052
      %v1054 = vlaneseq
      %v1055 = vshrl.u32 %v1054, 7
      %v1056 = vsub.s32 %v1053, %v1055
      %v1057 = vrot.slane %v907, %v1056
      %v1059 = vunpack.c.l.s4 1983009808
      %v1060 = vunpack.c.0.s8 %v1059
      %v1061 = vlaneseq
      %v1062 = vshrl.u32 %v1061, 7
      %v1063 = vsub.s32 %v1060, %v1062
      %v1064 = vrot.slane %v908, %v1063
      %v1066 = vunpack.c.l.s4 1983009808
      %v1067 = vunpack.c.0.s8 %v1066
      %v1068 = vlaneseq
      %v1069 = vshrl.u32 %v1068, 7
      %v1070 = vsub.s32 %v1067, %v1069
      %v1071 = vrot.slane %v909, %v1070
      %v1073 = vunpack.c.l.s4 1983009808
      %v1074 = vunpack.c.0.s8 %v1073
      %v1075 = vlaneseq
      %v1076 = vshrl.u32 %v1075, 7
      %v1077 = vsub.s32 %v1074, %v1076
      %v1078 = vrot.slane %v910, %v1077
      %v1080 = vunpack.c.l.s4 1983009808
      %v1081 = vunpack.c.0.s8 %v1080
      %v1082 = vlaneseq
      %v1083 = vshrl.u32 %v1082, 7
      %v1084 = vsub.s32 %v1081, %v1083
      %v1085 = vrot.slane %v911, %v1084
      %v1087 = vunpack.c.l.s4 1983009808
      %v1088 = vunpack.c.0.s8 %v1087
      %v1089 = vlaneseq
      %v1090 = vshrl.u32 %v1089, 7
      %v1091 = vsub.s32 %v1088, %v1090
      %v1092 = vrot.slane %v912, %v1091
      %v1094 = vunpack.c.l.s4 1983009808
      %v1095 = vunpack.c.0.s8 %v1094
      %v1096 = vlaneseq
      %v1097 = vshrl.u32 %v1096, 7
      %v1098 = vsub.s32 %v1095, %v1097
      %v1099 = vrot.slane %v913, %v1098
      %v1101 = vunpack.c.l.s4 1983009808
      %v1102 = vunpack.c.0.s8 %v1101
      %v1103 = vlaneseq
      %v1104 = vshrl.u32 %v1103, 7
      %v1105 = vsub.s32 %v1102, %v1104
      %v1106 = vrot.slane %v914, %v1105
      %v1108 = vunpack.c.l.s4 1983009808
      %v1109 = vunpack.c.0.s8 %v1108
      %v1110 = vlaneseq
      %v1111 = vshrl.u32 %v1110, 7
      %v1112 = vsub.s32 %v1109, %v1111
      %v1113 = vrot.slane %v915, %v1112
      %v1115 = vunpack.c.l.s4 1983009808
      %v1116 = vunpack.c.0.s8 %v1115
      %v1117 = vlaneseq
      %v1118 = vshrl.u32 %v1117, 7
      %v1119 = vsub.s32 %v1116, %v1118
      %v1120 = vrot.slane %v916, %v1119
      %v1122 = vunpack.c.l.s4 1983009808
      %v1123 = vunpack.c.0.s8 %v1122
      %v1124 = vlaneseq
      %v1125 = vshrl.u32 %v1124, 7
      %v1126 = vsub.s32 %v1123, %v1125
      %v1127 = vrot.slane %v917, %v1126
      %v1129 = vunpack.c.l.s4 1983009808
      %v1130 = vunpack.c.0.s8 %v1129
      %v1131 = vlaneseq
      %v1132 = vshrl.u32 %v1131, 7
      %v1133 = vsub.s32 %v1130, %v1132
      %v1134 = vrot.slane %v918, %v1133
      %v1136 = vunpack.c.l.s4 1983009808
      %v1137 = vunpack.c.0.s8 %v1136
      %v1138 = vlaneseq
      %v1139 = vshrl.u32 %v1138, 7
      %v1140 = vsub.s32 %v1137, %v1139
      %v1141 = vrot.slane %v919, %v1140
      %v1143 = vunpack.c.l.s4 1983009808
      %v1144 = vunpack.c.0.s8 %v1143
      %v1145 = vlaneseq
      %v1146 = vshrl.u32 %v1145, 7
      %v1147 = vsub.s32 %v1144, %v1146
      %v1148 = vrot.slane %v920, %v1147
      %v1150 = vunpack.c.l.s4 1983009808
      %v1151 = vunpack.c.0.s8 %v1150
      %v1152 = vlaneseq
      %v1153 = vshrl.u32 %v1152, 7
      %v1154 = vsub.s32 %v1151, %v1153
      %v1155 = vrot.slane %v921, %v1154
      %v1157 = vunpack.c.l.s4 1983009808
      %v1158 = vunpack.c.0.s8 %v1157
      %v1159 = vlaneseq
      %v1160 = vshrl.u32 %v1159, 7
      %v1161 = vsub.s32 %v1158, %v1160
      %v1162 = vrot.slane %v922, %v1161
      %v1164 = vunpack.c.l.s4 1983009808
      %v1165 = vunpack.c.0.s8 %v1164
      %v1166 = vlaneseq
      %v1167 = vshrl.u32 %v1166, 7
      %v1168 = vsub.s32 %v1165, %v1167
      %v1169 = vrot.slane %v923, %v1168
      %v1171 = vunpack.c.l.s4 1983009808
      %v1172 = vunpack.c.0.s8 %v1171
      %v1173 = vlaneseq
      %v1174 = vshrl.u32 %v1173, 7
      %v1175 = vsub.s32 %v1172, %v1174
      %v1176 = vrot.slane %v924, %v1175
      %v1178 = vunpack.c.l.s4 1983009808
      %v1179 = vunpack.c.0.s8 %v1178
      %v1180 = vlaneseq
      %v1181 = vshrl.u32 %v1180, 7
      %v1182 = vsub.s32 %v1179, %v1181
      %v1183 = vrot.slane %v925, %v1182
      %v1184 = vunpack.c.l.b16 %v966
      %v1185 = vunpack.c.l.b16 %v973
      %v1186 = vunpack.c.l.b16 %v980
      %v1187 = vunpack.c.l.b16 %v987
      %v1188 = vunpack.c.l.b16 %v994
      %v1189 = vunpack.c.l.b16 %v1001
      %v1190 = vunpack.c.l.b16 %v1008
      %v1191 = vunpack.c.l.b16 %v1015
      %v1192 = vunpack.c.l.b16 %v1022
      %v1193 = vunpack.c.l.b16 %v1029
      %v1194 = vunpack.c.l.b16 %v1036
      %v1195 = vunpack.c.l.b16 %v1043
      %v1196 = vunpack.c.l.b16 %v1050
      %v1197 = vunpack.c.l.b16 %v1057
      %v1198 = vunpack.c.l.b16 %v1064
      %v1199 = vunpack.c.l.b16 %v1071
      %v1200 = vunpack.c.l.b16 %v1078
      %v1201 = vunpack.c.l.b16 %v1085
      %v1202 = vunpack.c.l.b16 %v1092
      %v1203 = vunpack.c.l.b16 %v1099
      %v1204 = vunpack.c.l.b16 %v1106
      %v1205 = vunpack.c.l.b16 %v1113
      %v1206 = vunpack.c.l.b16 %v1120
      %v1207 = vunpack.c.l.b16 %v1127
      %v1208 = vunpack.c.l.b16 %v1134
      %v1209 = vunpack.c.l.b16 %v1141
      %v1210 = vunpack.c.l.b16 %v1148
      %v1211 = vunpack.c.l.b16 %v1155
      %v1212 = vunpack.c.l.b16 %v1162
      %v1213 = vunpack.c.l.b16 %v1169
      %v1214 = vunpack.c.l.b16 %v1176
      %v1215 = vunpack.c.l.b16 %v1183
      %v1216 = vrot.slane %v1185, 7
      %vm1217 = vcmask 1041409
      %v1218 = vsel %vm1217, %v1216, %v1184
      %v1219 = vrot.slane %v1186, 6
      %vm1220 = vcmask 1042434
      %v1221 = vsel %vm1220, %v1219, %v1218
      %v1222 = vrot.slane %v1187, 5
      %vm1223 = vcmask 1043459
      %v1224 = vsel %vm1223, %v1222, %v1221
      %v1225 = vrot.slane %v1188, 4
      %vm1226 = vcmask 1044484
      %v1227 = vsel %vm1226, %v1225, %v1224
      %v1228 = vrot.slane %v1189, 3
      %vm1229 = vcmask 1045509
      %v1230 = vsel %vm1229, %v1228, %v1227
      %v1231 = vrot.slane %v1190, 2
      %vm1232 = vcmask 1046534
      %v1233 = vsel %vm1232, %v1231, %v1230
      %v1234 = vrot.slane %v1191, 1
      %vm1235 = vcmask 1047559
      %v1236 = vsel %vm1235, %v1234, %v1233
      %v1237 = vrot.slane %v1193, 7
      %v1238 = vsel %vm1217, %v1237, %v1192
      %v1239 = vrot.slane %v1194, 6
      %v1240 = vsel %vm1220, %v1239, %v1238
      %v1241 = vrot.slane %v1195, 5
      %v1242 = vsel %vm1223, %v1241, %v1240
      %v1243 = vrot.slane %v1196, 4
      %v1244 = vsel %vm1226, %v1243, %v1242
      %v1245 = vrot.slane %v1197, 3
      %v1246 = vsel %vm1229, %v1245, %v1244
      %v1247 = vrot.slane %v1198, 2
      %v1248 = vsel %vm1232, %v1247, %v1246
      %v1249 = vrot.slane %v1199, 1
      %v1250 = vsel %vm1235, %v1249, %v1248
      %v1251 = vrot.slane %v1201, 7
      %v1252 = vsel %vm1217, %v1251, %v1200
      %v1253 = vrot.slane %v1202, 6
      %v1254 = vsel %vm1220, %v1253, %v1252
      %v1255 = vrot.slane %v1203, 5
      %v1256 = vsel %vm1223, %v1255, %v1254
      %v1257 = vrot.slane %v1204, 4
      %v1258 = vsel %vm1226, %v1257, %v1256
      %v1259 = vrot.slane %v1205, 3
      %v1260 = vsel %vm1229, %v1259, %v1258
      %v1261 = vrot.slane %v1206, 2
      %v1262 = vsel %vm1232, %v1261, %v1260
      %v1263 = vrot.slane %v1207, 1
      %v1264 = vsel %vm1235, %v1263, %v1262
      %v1265 = vrot.slane %v1209, 7
      %v1266 = vsel %vm1217, %v1265, %v1208
      %v1267 = vrot.slane %v1210, 6
      %v1268 = vsel %vm1220, %v1267, %v1266
      %v1269 = vrot.slane %v1211, 5
      %v1270 = vsel %vm1223, %v1269, %v1268
      %v1271 = vrot.slane %v1212, 4
      %v1272 = vsel %vm1226, %v1271, %v1270
      %v1273 = vrot.slane %v1213, 3
      %v1274 = vsel %vm1229, %v1273, %v1272
      %v1275 = vrot.slane %v1214, 2
      %v1276 = vsel %vm1232, %v1275, %v1274
      %v1277 = vrot.slane %v1215, 1
      %v1278 = vsel %vm1235, %v1277, %v1276
      %v1279 = vpack.c.b16 %v1250, %v1236
      %v1280 = vpack.c.b16 %v1278, %v1264
      %1281 = vrot.lane.b32.xlu0 %v1279, 4
      %v1282 = vpop.permute.xlu0 %1281
      %1283 = vrot.lane.b32.xlu0 %v1280, 4
      %v1284 = vpop.permute.xlu0 %1283
      %v1285 = vrot.slane %v1184, 1
      %v1286 = vsel %vm1217, %v1185, %v1285
      %v1287 = vrot.slane %v1186, 7
      %v1288 = vsel %vm1220, %v1287, %v1286
      %v1289 = vrot.slane %v1187, 6
      %v1290 = vsel %vm1223, %v1289, %v1288
      %v1291 = vrot.slane %v1188, 5
      %v1292 = vsel %vm1226, %v1291, %v1290
      %v1293 = vrot.slane %v1189, 4
      %v1294 = vsel %vm1229, %v1293, %v1292
      %v1295 = vrot.slane %v1190, 3
      %v1296 = vsel %vm1232, %v1295, %v1294
      %v1297 = vrot.slane %v1191, 2
      %v1298 = vsel %vm1235, %v1297, %v1296
      %v1299 = vrot.slane %v1192, 1
      %v1300 = vsel %vm1217, %v1193, %v1299
      %v1301 = vrot.slane %v1194, 7
      %v1302 = vsel %vm1220, %v1301, %v1300
      %v1303 = vrot.slane %v1195, 6
      %v1304 = vsel %vm1223, %v1303, %v1302
      %v1305 = vrot.slane %v1196, 5
      %v1306 = vsel %vm1226, %v1305, %v1304
      %v1307 = vrot.slane %v1197, 4
      %v1308 = vsel %vm1229, %v1307, %v1306
      %v1309 = vrot.slane %v1198, 3
      %v1310 = vsel %vm1232, %v1309, %v1308
      %v1311 = vrot.slane %v1199, 2
      %v1312 = vsel %vm1235, %v1311, %v1310
      %v1313 = vrot.slane %v1200, 1
      %v1314 = vsel %vm1217, %v1201, %v1313
      %v1315 = vrot.slane %v1202, 7
      %v1316 = vsel %vm1220, %v1315, %v1314
      %v1317 = vrot.slane %v1203, 6
      %v1318 = vsel %vm1223, %v1317, %v1316
      %v1319 = vrot.slane %v1204, 5
      %v1320 = vsel %vm1226, %v1319, %v1318
      %v1321 = vrot.slane %v1205, 4
      %v1322 = vsel %vm1229, %v1321, %v1320
      %v1323 = vrot.slane %v1206, 3
      %v1324 = vsel %vm1232, %v1323, %v1322
      %v1325 = vrot.slane %v1207, 2
      %v1326 = vsel %vm1235, %v1325, %v1324
      %v1327 = vrot.slane %v1208, 1
      %v1328 = vsel %vm1217, %v1209, %v1327
      %v1329 = vrot.slane %v1210, 7
      %v1330 = vsel %vm1220, %v1329, %v1328
      %v1331 = vrot.slane %v1211, 6
      %v1332 = vsel %vm1223, %v1331, %v1330
      %v1333 = vrot.slane %v1212, 5
      %v1334 = vsel %vm1226, %v1333, %v1332
      %v1335 = vrot.slane %v1213, 4
      %v1336 = vsel %vm1229, %v1335, %v1334
      %v1337 = vrot.slane %v1214, 3
      %v1338 = vsel %vm1232, %v1337, %v1336
      %v1339 = vrot.slane %v1215, 2
      %v1340 = vsel %vm1235, %v1339, %v1338
      %v1341 = vpack.c.b16 %v1312, %v1298
      %v1342 = vpack.c.b16 %v1340, %v1326
      %1343 = vrot.lane.b32.xlu0 %v1341, 4
      %v1344 = vpop.permute.xlu0 %1343
      %1345 = vrot.lane.b32.xlu0 %v1342, 4
      %v1346 = vpop.permute.xlu0 %1345
      %v1347 = vrot.slane %v1184, 2
      %v1348 = vrot.slane %v1185, 1
      %v1349 = vsel %vm1217, %v1348, %v1347
      %v1350 = vsel %vm1220, %v1186, %v1349
      %v1351 = vrot.slane %v1187, 7
      %v1352 = vsel %vm1223, %v1351, %v1350
      %v1353 = vrot.slane %v1188, 6
      %v1354 = vsel %vm1226, %v1353, %v1352
      %v1355 = vrot.slane %v1189, 5
      %v1356 = vsel %vm1229, %v1355, %v1354
      %v1357 = vrot.slane %v1190, 4
      %v1358 = vsel %vm1232, %v1357, %v1356
      %v1359 = vrot.slane %v1191, 3
      %v1360 = vsel %vm1235, %v1359, %v1358
      %v1361 = vrot.slane %v1192, 2
      %v1362 = vrot.slane %v1193, 1
      %v1363 = vsel %vm1217, %v1362, %v1361
      %v1364 = vsel %vm1220, %v1194, %v1363
      %v1365 = vrot.slane %v1195, 7
      %v1366 = vsel %vm1223, %v1365, %v1364
      %v1367 = vrot.slane %v1196, 6
      %v1368 = vsel %vm1226, %v1367, %v1366
      %v1369 = vrot.slane %v1197, 5
      %v1370 = vsel %vm1229, %v1369, %v1368
      %v1371 = vrot.slane %v1198, 4
      %v1372 = vsel %vm1232, %v1371, %v1370
      %v1373 = vrot.slane %v1199, 3
      %v1374 = vsel %vm1235, %v1373, %v1372
      %v1375 = vrot.slane %v1200, 2
      %v1376 = vrot.slane %v1201, 1
      %v1377 = vsel %vm1217, %v1376, %v1375
      %v1378 = vsel %vm1220, %v1202, %v1377
      %v1379 = vrot.slane %v1203, 7
      %v1380 = vsel %vm1223, %v1379, %v1378
      %v1381 = vrot.slane %v1204, 6
      %v1382 = vsel %vm1226, %v1381, %v1380
      %v1383 = vrot.slane %v1205, 5
      %v1384 = vsel %vm1229, %v1383, %v1382
      %v1385 = vrot.slane %v1206, 4
      %v1386 = vsel %vm1232, %v1385, %v1384
      %v1387 = vrot.slane %v1207, 3
      %v1388 = vsel %vm1235, %v1387, %v1386
      %v1389 = vrot.slane %v1208, 2
      %v1390 = vrot.slane %v1209, 1
      %v1391 = vsel %vm1217, %v1390, %v1389
      %v1392 = vsel %vm1220, %v1210, %v1391
      %v1393 = vrot.slane %v1211, 7
      %v1394 = vsel %vm1223, %v1393, %v1392
      %v1395 = vrot.slane %v1212, 6
      %v1396 = vsel %vm1226, %v1395, %v1394
      %v1397 = vrot.slane %v1213, 5
      %v1398 = vsel %vm1229, %v1397, %v1396
      %v1399 = vrot.slane %v1214, 4
      %v1400 = vsel %vm1232, %v1399, %v1398
      %v1401 = vrot.slane %v1215, 3
      %v1402 = vsel %vm1235, %v1401, %v1400
      %v1403 = vpack.c.b16 %v1374, %v1360
      %v1404 = vpack.c.b16 %v1402, %v1388
      %1405 = vrot.lane.b32.xlu0 %v1403, 4
      %v1406 = vpop.permute.xlu0 %1405
      %1407 = vrot.lane.b32.xlu0 %v1404, 4
      %v1408 = vpop.permute.xlu0 %1407
      %v1411 = vunpack.c.l.s4 1983009808
      %v1412 = vunpack.c.0.s8 %v1411
      %v1413 = vlaneseq
      %v1414 = vshrl.u32 %v1413, 7
      %v1415 = vsub.s32 %v1412, %v1414
      %v1416 = vrot.slane %v926, %v1415
      %v1417 = vunpack.c.l.b16 %v1416
      %v1418 = vsel %vm1217, %v1287, %v1185
      %v1419 = vsel %vm1220, %v1289, %v1418
      %v1420 = vsel %vm1223, %v1291, %v1419
      %v1421 = vsel %vm1226, %v1293, %v1420
      %v1422 = vsel %vm1229, %v1295, %v1421
      %v1423 = vsel %vm1232, %v1297, %v1422
      %v1424 = vsel %vm1235, %v1299, %v1423
      %v1425 = vsel %vm1217, %v1301, %v1193
      %v1426 = vsel %vm1220, %v1303, %v1425
      %v1427 = vsel %vm1223, %v1305, %v1426
      %v1428 = vsel %vm1226, %v1307, %v1427
      %v1429 = vsel %vm1229, %v1309, %v1428
      %v1430 = vsel %vm1232, %v1311, %v1429
      %v1431 = vsel %vm1235, %v1313, %v1430
      %v1432 = vsel %vm1217, %v1315, %v1201
      %v1433 = vsel %vm1220, %v1317, %v1432
      %v1434 = vsel %vm1223, %v1319, %v1433
      %v1435 = vsel %vm1226, %v1321, %v1434
      %v1436 = vsel %vm1229, %v1323, %v1435
      %v1437 = vsel %vm1232, %v1325, %v1436
      %v1438 = vsel %vm1235, %v1327, %v1437
      %v1439 = vsel %vm1217, %v1329, %v1209
      %v1440 = vsel %vm1220, %v1331, %v1439
      %v1441 = vsel %vm1223, %v1333, %v1440
      %v1442 = vsel %vm1226, %v1335, %v1441
      %v1443 = vsel %vm1229, %v1337, %v1442
      %v1444 = vsel %vm1232, %v1339, %v1443
      %v1445 = vrot.slane %v1417, 1
      %v1446 = vsel %vm1235, %v1445, %v1444
      %v1447 = vpack.c.b16 %v1431, %v1424
      %v1448 = vpack.c.b16 %v1446, %v1438
      %1449 = vrot.lane.b32.xlu0 %v1447, 12
      %v1450 = vpop.permute.xlu0 %1449
      %1451 = vrot.lane.b32.xlu0 %v1448, 12
      %v1452 = vpop.permute.xlu0 %1451
      %v1453 = vsel %vm1217, %v1186, %v1348
      %v1454 = vsel %vm1220, %v1351, %v1453
      %v1455 = vsel %vm1223, %v1353, %v1454
      %v1456 = vsel %vm1226, %v1355, %v1455
      %v1457 = vsel %vm1229, %v1357, %v1456
      %v1458 = vsel %vm1232, %v1359, %v1457
      %v1459 = vsel %vm1235, %v1361, %v1458
      %v1460 = vsel %vm1217, %v1194, %v1362
      %v1461 = vsel %vm1220, %v1365, %v1460
      %v1462 = vsel %vm1223, %v1367, %v1461
      %v1463 = vsel %vm1226, %v1369, %v1462
      %v1464 = vsel %vm1229, %v1371, %v1463
      %v1465 = vsel %vm1232, %v1373, %v1464
      %v1466 = vsel %vm1235, %v1375, %v1465
      %v1467 = vsel %vm1217, %v1202, %v1376
      %v1468 = vsel %vm1220, %v1379, %v1467
      %v1469 = vsel %vm1223, %v1381, %v1468
      %v1470 = vsel %vm1226, %v1383, %v1469
      %v1471 = vsel %vm1229, %v1385, %v1470
      %v1472 = vsel %vm1232, %v1387, %v1471
      %v1473 = vsel %vm1235, %v1389, %v1472
      %v1474 = vsel %vm1217, %v1210, %v1390
      %v1475 = vsel %vm1220, %v1393, %v1474
      %v1476 = vsel %vm1223, %v1395, %v1475
      %v1477 = vsel %vm1226, %v1397, %v1476
      %v1478 = vsel %vm1229, %v1399, %v1477
      %v1479 = vsel %vm1232, %v1401, %v1478
      %v1480 = vrot.slane %v1417, 2
      %v1481 = vsel %vm1235, %v1480, %v1479
      %v1482 = vpack.c.b16 %v1466, %v1459
      %v1483 = vpack.c.b16 %v1481, %v1473
      %1484 = vrot.lane.b32.xlu0 %v1482, 12
      %v1485 = vpop.permute.xlu0 %1484
      %1486 = vrot.lane.b32.xlu0 %v1483, 12
      %v1487 = vpop.permute.xlu0 %1486
      %v1488 = vrot.slane %v1185, 2
      %v1489 = vrot.slane %v1186, 1
      %v1490 = vsel %vm1217, %v1489, %v1488
      %v1491 = vsel %vm1220, %v1187, %v1490
      %v1492 = vrot.slane %v1188, 7
      %v1493 = vsel %vm1223, %v1492, %v1491
      %v1494 = vrot.slane %v1189, 6
      %v1495 = vsel %vm1226, %v1494, %v1493
      %v1496 = vrot.slane %v1190, 5
      %v1497 = vsel %vm1229, %v1496, %v1495
      %v1498 = vrot.slane %v1191, 4
      %v1499 = vsel %vm1232, %v1498, %v1497
      %v1500 = vrot.slane %v1192, 3
      %v1501 = vsel %vm1235, %v1500, %v1499
      %v1502 = vrot.slane %v1193, 2
      %v1503 = vrot.slane %v1194, 1
      %v1504 = vsel %vm1217, %v1503, %v1502
      %v1505 = vsel %vm1220, %v1195, %v1504
      %v1506 = vrot.slane %v1196, 7
      %v1507 = vsel %vm1223, %v1506, %v1505
      %v1508 = vrot.slane %v1197, 6
      %v1509 = vsel %vm1226, %v1508, %v1507
      %v1510 = vrot.slane %v1198, 5
      %v1511 = vsel %vm1229, %v1510, %v1509
      %v1512 = vrot.slane %v1199, 4
      %v1513 = vsel %vm1232, %v1512, %v1511
      %v1514 = vrot.slane %v1200, 3
      %v1515 = vsel %vm1235, %v1514, %v1513
      %v1516 = vrot.slane %v1201, 2
      %v1517 = vrot.slane %v1202, 1
      %v1518 = vsel %vm1217, %v1517, %v1516
      %v1519 = vsel %vm1220, %v1203, %v1518
      %v1520 = vrot.slane %v1204, 7
      %v1521 = vsel %vm1223, %v1520, %v1519
      %v1522 = vrot.slane %v1205, 6
      %v1523 = vsel %vm1226, %v1522, %v1521
      %v1524 = vrot.slane %v1206, 5
      %v1525 = vsel %vm1229, %v1524, %v1523
      %v1526 = vrot.slane %v1207, 4
      %v1527 = vsel %vm1232, %v1526, %v1525
      %v1528 = vrot.slane %v1208, 3
      %v1529 = vsel %vm1235, %v1528, %v1527
      %v1530 = vrot.slane %v1209, 2
      %v1531 = vrot.slane %v1210, 1
      %v1532 = vsel %vm1217, %v1531, %v1530
      %v1533 = vsel %vm1220, %v1211, %v1532
      %v1534 = vrot.slane %v1212, 7
      %v1535 = vsel %vm1223, %v1534, %v1533
      %v1536 = vrot.slane %v1213, 6
      %v1537 = vsel %vm1226, %v1536, %v1535
      %v1538 = vrot.slane %v1214, 5
      %v1539 = vsel %vm1229, %v1538, %v1537
      %v1540 = vrot.slane %v1215, 4
      %v1541 = vsel %vm1232, %v1540, %v1539
      %v1542 = vrot.slane %v1417, 3
      %v1543 = vsel %vm1235, %v1542, %v1541
      %v1544 = vpack.c.b16 %v1515, %v1501
      %v1545 = vpack.c.b16 %v1543, %v1529
      %1546 = vrot.lane.b32.xlu0 %v1544, 12
      %v1547 = vpop.permute.xlu0 %1546
      %1548 = vrot.lane.b32.xlu0 %v1545, 12
      %v1549 = vpop.permute.xlu0 %1548
      %v1552 = vunpack.c.l.s4 1983009808
      %v1553 = vunpack.c.0.s8 %v1552
      %v1554 = vlaneseq
      %v1555 = vshrl.u32 %v1554, 7
      %v1556 = vsub.s32 %v1553, %v1555
      %v1557 = vrot.slane %v927, %v1556
      %v1558 = vunpack.c.l.b16 %v1557
      %v1559 = vsel %vm1217, %v1351, %v1186
      %v1560 = vsel %vm1220, %v1353, %v1559
      %v1561 = vsel %vm1223, %v1355, %v1560
      %v1562 = vsel %vm1226, %v1357, %v1561
      %v1563 = vsel %vm1229, %v1359, %v1562
      %v1564 = vsel %vm1232, %v1361, %v1563
      %v1565 = vsel %vm1235, %v1362, %v1564
      %v1566 = vsel %vm1217, %v1365, %v1194
      %v1567 = vsel %vm1220, %v1367, %v1566
      %v1568 = vsel %vm1223, %v1369, %v1567
      %v1569 = vsel %vm1226, %v1371, %v1568
      %v1570 = vsel %vm1229, %v1373, %v1569
      %v1571 = vsel %vm1232, %v1375, %v1570
      %v1572 = vsel %vm1235, %v1376, %v1571
      %v1573 = vsel %vm1217, %v1379, %v1202
      %v1574 = vsel %vm1220, %v1381, %v1573
      %v1575 = vsel %vm1223, %v1383, %v1574
      %v1576 = vsel %vm1226, %v1385, %v1575
      %v1577 = vsel %vm1229, %v1387, %v1576
      %v1578 = vsel %vm1232, %v1389, %v1577
      %v1579 = vsel %vm1235, %v1390, %v1578
      %v1580 = vsel %vm1217, %v1393, %v1210
      %v1581 = vsel %vm1220, %v1395, %v1580
      %v1582 = vsel %vm1223, %v1397, %v1581
      %v1583 = vsel %vm1226, %v1399, %v1582
      %v1584 = vsel %vm1229, %v1401, %v1583
      %v1585 = vsel %vm1232, %v1480, %v1584
      %v1586 = vrot.slane %v1558, 1
      %v1587 = vsel %vm1235, %v1586, %v1585
      %v1588 = vpack.c.b16 %v1572, %v1565
      %v1589 = vpack.c.b16 %v1587, %v1579
      %1590 = vrot.lane.b32.xlu0 %v1588, 20
      %v1591 = vpop.permute.xlu0 %1590
      %1592 = vrot.lane.b32.xlu0 %v1589, 20
      %v1593 = vpop.permute.xlu0 %1592
      %v1594 = vsel %vm1217, %v1187, %v1489
      %v1595 = vsel %vm1220, %v1492, %v1594
      %v1596 = vsel %vm1223, %v1494, %v1595
      %v1597 = vsel %vm1226, %v1496, %v1596
      %v1598 = vsel %vm1229, %v1498, %v1597
      %v1599 = vsel %vm1232, %v1500, %v1598
      %v1600 = vsel %vm1235, %v1502, %v1599
      %v1601 = vsel %vm1217, %v1195, %v1503
      %v1602 = vsel %vm1220, %v1506, %v1601
      %v1603 = vsel %vm1223, %v1508, %v1602
      %v1604 = vsel %vm1226, %v1510, %v1603
      %v1605 = vsel %vm1229, %v1512, %v1604
      %v1606 = vsel %vm1232, %v1514, %v1605
      %v1607 = vsel %vm1235, %v1516, %v1606
      %v1608 = vsel %vm1217, %v1203, %v1517
      %v1609 = vsel %vm1220, %v1520, %v1608
      %v1610 = vsel %vm1223, %v1522, %v1609
      %v1611 = vsel %vm1226, %v1524, %v1610
      %v1612 = vsel %vm1229, %v1526, %v1611
      %v1613 = vsel %vm1232, %v1528, %v1612
      %v1614 = vsel %vm1235, %v1530, %v1613
      %v1615 = vsel %vm1217, %v1211, %v1531
      %v1616 = vsel %vm1220, %v1534, %v1615
      %v1617 = vsel %vm1223, %v1536, %v1616
      %v1618 = vsel %vm1226, %v1538, %v1617
      %v1619 = vsel %vm1229, %v1540, %v1618
      %v1620 = vsel %vm1232, %v1542, %v1619
      %v1621 = vrot.slane %v1558, 2
      %v1622 = vsel %vm1235, %v1621, %v1620
      %v1623 = vpack.c.b16 %v1607, %v1600
      %v1624 = vpack.c.b16 %v1622, %v1614
      %1625 = vrot.lane.b32.xlu0 %v1623, 20
      %v1626 = vpop.permute.xlu0 %1625
      %1627 = vrot.lane.b32.xlu0 %v1624, 20
      %v1628 = vpop.permute.xlu0 %1627
      %v1629 = vrot.slane %v1186, 2
      %v1630 = vrot.slane %v1187, 1
      %v1631 = vsel %vm1217, %v1630, %v1629
      %v1632 = vsel %vm1220, %v1188, %v1631
      %v1633 = vrot.slane %v1189, 7
      %v1634 = vsel %vm1223, %v1633, %v1632
      %v1635 = vrot.slane %v1190, 6
      %v1636 = vsel %vm1226, %v1635, %v1634
      %v1637 = vrot.slane %v1191, 5
      %v1638 = vsel %vm1229, %v1637, %v1636
      %v1639 = vrot.slane %v1192, 4
      %v1640 = vsel %vm1232, %v1639, %v1638
      %v1641 = vrot.slane %v1193, 3
      %v1642 = vsel %vm1235, %v1641, %v1640
      %v1643 = vrot.slane %v1194, 2
      %v1644 = vrot.slane %v1195, 1
      %v1645 = vsel %vm1217, %v1644, %v1643
      %v1646 = vsel %vm1220, %v1196, %v1645
      %v1647 = vrot.slane %v1197, 7
      %v1648 = vsel %vm1223, %v1647, %v1646
      %v1649 = vrot.slane %v1198, 6
      %v1650 = vsel %vm1226, %v1649, %v1648
      %v1651 = vrot.slane %v1199, 5
      %v1652 = vsel %vm1229, %v1651, %v1650
      %v1653 = vrot.slane %v1200, 4
      %v1654 = vsel %vm1232, %v1653, %v1652
      %v1655 = vrot.slane %v1201, 3
      %v1656 = vsel %vm1235, %v1655, %v1654
      %v1657 = vrot.slane %v1202, 2
      %v1658 = vrot.slane %v1203, 1
      %v1659 = vsel %vm1217, %v1658, %v1657
      %v1660 = vsel %vm1220, %v1204, %v1659
      %v1661 = vrot.slane %v1205, 7
      %v1662 = vsel %vm1223, %v1661, %v1660
      %v1663 = vrot.slane %v1206, 6
      %v1664 = vsel %vm1226, %v1663, %v1662
      %v1665 = vrot.slane %v1207, 5
      %v1666 = vsel %vm1229, %v1665, %v1664
      %v1667 = vrot.slane %v1208, 4
      %v1668 = vsel %vm1232, %v1667, %v1666
      %v1669 = vrot.slane %v1209, 3
      %v1670 = vsel %vm1235, %v1669, %v1668
      %v1671 = vrot.slane %v1210, 2
      %v1672 = vrot.slane %v1211, 1
      %v1673 = vsel %vm1217, %v1672, %v1671
      %v1674 = vsel %vm1220, %v1212, %v1673
      %v1675 = vrot.slane %v1213, 7
      %v1676 = vsel %vm1223, %v1675, %v1674
      %v1677 = vrot.slane %v1214, 6
      %v1678 = vsel %vm1226, %v1677, %v1676
      %v1679 = vrot.slane %v1215, 5
      %v1680 = vsel %vm1229, %v1679, %v1678
      %v1681 = vrot.slane %v1417, 4
      %v1682 = vsel %vm1232, %v1681, %v1680
      %v1683 = vrot.slane %v1558, 3
      %v1684 = vsel %vm1235, %v1683, %v1682
      %v1685 = vpack.c.b16 %v1656, %v1642
      %v1686 = vpack.c.b16 %v1684, %v1670
      %1687 = vrot.lane.b32.xlu0 %v1685, 20
      %v1688 = vpop.permute.xlu0 %1687
      %1689 = vrot.lane.b32.xlu0 %v1686, 20
      %v1690 = vpop.permute.xlu0 %1689
      %vm1691 = vcmask 31744
      %v1694 = vsel %vm1691, %v1282, %v1344
      %v1698 = vsel %vm1691, %v1284, %v1346
      %v1701 = vsel %vm1691, %v1344, %v1406
      %v1703 = vsel %vm1691, %v1346, %v1408
      %vm1704 = vcmask 64512
      %v1706 = vsel %vm1704, %v1701, %v1450
      %v1708 = vsel %vm1704, %v1703, %v1452
      %vm1709 = vcmask 97280
      %v1711 = vsel %vm1709, %v1706, %v1485
      %v1714 = vsel %vm1709, %v1708, %v1487
      %v1717 = vsel %vm1709, %v1485, %v1547
      %v1719 = vsel %vm1709, %v1487, %v1549
      %vm1720 = vcmask 130048
      %v1722 = vsel %vm1720, %v1717, %v1591
      %v1724 = vsel %vm1720, %v1719, %v1593
      %vm1725 = vcmask 162816
      %v1727 = vsel %vm1725, %v1722, %v1626
      %v1730 = vsel %vm1725, %v1724, %v1628
      %v1733 = vsel %vm1725, %v1626, %v1688
      %v1735 = vsel %vm1725, %v1628, %v1690
      %v1736 = vld [vmem:[%s1] sm:$0xff]
      %v1737 = vld [vmem:[%s1 + $0x8] sm:$0xff]
      %v1738 = vld [vmem:[%s1 + $0x10] sm:$0xff]
      %v1739 = vld [vmem:[%s1 + $0x18] sm:$0xff]
      %v1740 = vld [vmem:[%s1 + $0x20] sm:$0xff]
      %v1741 = vld [vmem:[%s1 + $0x28] sm:$0xff]
      %v1742 = vld [vmem:[%s1 + $0x30] sm:$0xff]
      %v1743 = vld [vmem:[%s1 + $0x38] sm:$0xff]
      %v1744 = vld [vmem:[%s1 + $0x40] sm:$0xff]
      %v1745 = vld [vmem:[%s1 + $0x48] sm:$0xff]
      %v1746 = vld [vmem:[%s1 + $0x50] sm:$0xff]
      %v1747 = vld [vmem:[%s1 + $0x58] sm:$0xff]
      %v1748 = vld [vmem:[%s1 + $0x60] sm:$0xff]
      %v1749 = vld [vmem:[%s1 + $0x68] sm:$0xff]
      %v1750 = vld [vmem:[%s1 + $0x70] sm:$0xff]
      %v1751 = vld [vmem:[%s1 + $0x78] sm:$0xff]
      %v1752 = vld [vmem:[%s1 + $0x80] sm:$0xff]
      %v1753 = vld [vmem:[%s1 + $0x88] sm:$0xff]
      %v1754 = vld [vmem:[%s1 + $0x90] sm:$0xff]
      %v1755 = vld [vmem:[%s1 + $0x98] sm:$0xff]
      %v1756 = vld [vmem:[%s1 + $0xa0] sm:$0xff]
      %v1757 = vld [vmem:[%s1 + $0xa8] sm:$0xff]
      %v1758 = vld [vmem:[%s1 + $0xb0] sm:$0xff]
      %v1759 = vld [vmem:[%s1 + $0xb8] sm:$0xff]
      %v1760 = vld [vmem:[%s1 + $0xc0] sm:$0xff]
      %v1761 = vld [vmem:[%s1 + $0xc8] sm:$0xff]
      %v1762 = vld [vmem:[%s1 + $0xd0] sm:$0xff]
      %v1763 = vld [vmem:[%s1 + $0xd8] sm:$0xff]
      %v1764 = vld [vmem:[%s1 + $0xe0] sm:$0xff]
      %v1765 = vld [vmem:[%s1 + $0xe8] sm:$0xff]
      %v1766 = vld [vmem:[%s1 + $0xf0] sm:$0xff]
      %v1767 = vld [vmem:[%s1 + $0xf8] sm:$0xff]
      %v1768 = vld [vmem:[%s1 + $0x100] sm:$0xff]
      %v1769 = vld [vmem:[%s1 + $0x108] sm:$0xff]
      %v1770 = vld [vmem:[%s1 + $0x110] sm:$0xff]
      %v1771 = vld [vmem:[%s1 + $0x118] sm:$0xff]
      %v1772 = vld [vmem:[%s1 + $0x120] sm:$0xff]
      %v1773 = vld [vmem:[%s1 + $0x128] sm:$0xff]
      %v1774 = vld [vmem:[%s1 + $0x130] sm:$0xff]
      %v1775 = vld [vmem:[%s1 + $0x138] sm:$0xff]
      %v1776 = vld [vmem:[%s1 + $0x140] sm:$0xff]
      %v1777 = vld [vmem:[%s1 + $0x148] sm:$0xff]
      %v1778 = vld [vmem:[%s1 + $0x150] sm:$0xff]
      %v1779 = vld [vmem:[%s1 + $0x158] sm:$0xff]
      %v1780 = vld [vmem:[%s1 + $0x160] sm:$0xff]
      %v1781 = vld [vmem:[%s1 + $0x168] sm:$0xff]
      %v1782 = vld [vmem:[%s1 + $0x170] sm:$0xff]
      %v1783 = vld [vmem:[%s1 + $0x178] sm:$0xff]
      %v1784 = vld [vmem:[%s1 + $0x180] sm:$0xff]
      %v1785 = vld [vmem:[%s1 + $0x188] sm:$0xff]
      %v1786 = vld [vmem:[%s1 + $0x190] sm:$0xff]
      %v1838 = vunpack.c.l.b16 %v1736
      %v1839 = vunpack.c.h.b16 %v1736
      %v1840 = vunpack.c.l.b16 %v1737
      %v1841 = vunpack.c.h.b16 %v1737
      %v1842 = vunpack.c.l.b16 %v1738
      %v1843 = vunpack.c.h.b16 %v1738
      %v1844 = vunpack.c.l.b16 %v1739
      %v1845 = vunpack.c.h.b16 %v1739
      %v1846 = vunpack.c.l.b16 %v1740
      %v1847 = vunpack.c.h.b16 %v1740
      %v1848 = vunpack.c.l.b16 %v1741
      %v1849 = vunpack.c.h.b16 %v1741
      %v1850 = vunpack.c.l.b16 %v1742
      %v1851 = vunpack.c.h.b16 %v1742
      %v1852 = vunpack.c.l.b16 %v1743
      %v1853 = vunpack.c.h.b16 %v1743
      %v1854 = vunpack.c.l.b16 %v1744
      %v1855 = vunpack.c.h.b16 %v1744
      %v1856 = vunpack.c.l.b16 %v1745
      %v1857 = vunpack.c.h.b16 %v1745
      %v1858 = vunpack.c.l.b16 %v1746
      %v1859 = vunpack.c.h.b16 %v1746
      %v1860 = vunpack.c.l.b16 %v1747
      %v1861 = vunpack.c.h.b16 %v1747
      %v1862 = vunpack.c.l.b16 %v1748
      %v1863 = vunpack.c.h.b16 %v1748
      %v1864 = vunpack.c.l.b16 %v1749
      %v1865 = vunpack.c.h.b16 %v1749
      %v1866 = vunpack.c.l.b16 %v1750
      %v1867 = vunpack.c.h.b16 %v1750
      %v1868 = vunpack.c.l.b16 %v1751
      %v1869 = vunpack.c.h.b16 %v1751
      %v1870 = vunpack.c.l.b16 %v1752
      %v1871 = vunpack.c.h.b16 %v1752
      %v1872 = vunpack.c.l.b16 %v1753
      %v1873 = vunpack.c.h.b16 %v1753
      %v1874 = vunpack.c.l.b16 %v1754
      %v1875 = vunpack.c.h.b16 %v1754
      %v1876 = vunpack.c.l.b16 %v1755
      %v1877 = vunpack.c.h.b16 %v1755
      %v1878 = vunpack.c.l.b16 %v1756
      %v1879 = vunpack.c.h.b16 %v1756
      %v1880 = vunpack.c.l.b16 %v1757
      %v1881 = vunpack.c.h.b16 %v1757
      %v1882 = vunpack.c.l.b16 %v1758
      %v1883 = vunpack.c.h.b16 %v1758
      %v1884 = vunpack.c.l.b16 %v1759
      %v1885 = vunpack.c.h.b16 %v1759
      %v1886 = vunpack.c.l.b16 %v1760
      %v1887 = vunpack.c.h.b16 %v1760
      %v1888 = vunpack.c.l.b16 %v1761
      %v1889 = vunpack.c.h.b16 %v1761
      %v1890 = vunpack.c.l.b16 %v1762
      %v1891 = vunpack.c.h.b16 %v1762
      %v1892 = vunpack.c.l.b16 %v1763
      %v1893 = vunpack.c.h.b16 %v1763
      %v1894 = vunpack.c.l.b16 %v1764
      %v1895 = vunpack.c.h.b16 %v1764
      %v1896 = vunpack.c.l.b16 %v1765
      %v1897 = vunpack.c.h.b16 %v1765
      %v1898 = vunpack.c.l.b16 %v1766
      %v1899 = vunpack.c.h.b16 %v1766
      %v1900 = vunpack.c.l.b16 %v1767
      %v1901 = vunpack.c.h.b16 %v1767
      %v1902 = vunpack.c.l.b16 %v1768
      %v1903 = vunpack.c.h.b16 %v1768
      %v1904 = vunpack.c.l.b16 %v1769
      %v1905 = vunpack.c.h.b16 %v1769
      %v1906 = vunpack.c.l.b16 %v1770
      %v1907 = vunpack.c.h.b16 %v1770
      %v1908 = vunpack.c.l.b16 %v1771
      %v1909 = vunpack.c.h.b16 %v1771
      %v1910 = vunpack.c.l.b16 %v1772
      %v1911 = vunpack.c.h.b16 %v1772
      %v1912 = vunpack.c.l.b16 %v1773
      %v1913 = vunpack.c.h.b16 %v1773
      %v1914 = vunpack.c.l.b16 %v1774
      %v1915 = vunpack.c.h.b16 %v1774
      %v1916 = vunpack.c.l.b16 %v1775
      %v1917 = vunpack.c.h.b16 %v1775
      %v1918 = vunpack.c.l.b16 %v1776
      %v1919 = vunpack.c.h.b16 %v1776
      %v1920 = vunpack.c.l.b16 %v1777
      %v1921 = vunpack.c.h.b16 %v1777
      %v1922 = vunpack.c.l.b16 %v1778
      %v1923 = vunpack.c.h.b16 %v1778
      %v1924 = vunpack.c.l.b16 %v1779
      %v1925 = vunpack.c.h.b16 %v1779
      %v1926 = vunpack.c.l.b16 %v1780
      %v1927 = vunpack.c.h.b16 %v1780
      %v1928 = vunpack.c.l.b16 %v1781
      %v1929 = vunpack.c.h.b16 %v1781
      %v1930 = vunpack.c.l.b16 %v1782
      %v1931 = vunpack.c.h.b16 %v1782
      %v1932 = vunpack.c.l.b16 %v1783
      %v1933 = vunpack.c.h.b16 %v1783
      %v1934 = vunpack.c.l.b16 %v1784
      %v1935 = vunpack.c.h.b16 %v1784
      %v1936 = vunpack.c.l.b16 %v1785
      %v1937 = vunpack.c.h.b16 %v1785
      %v1938 = vunpack.c.l.b16 %v1786
      %v1939 = vunpack.c.h.b16 %v1786
      %v1940 = vpack.c.b16 %v1840, %v1838
      %v1941 = vpack.c.b16 %v1841, %v1839
      %v1942 = vpack.c.b16 %v1844, %v1842
      %v1943 = vpack.c.b16 %v1845, %v1843
      %v1944 = vpack.c.b16 %v1848, %v1846
      %v1945 = vpack.c.b16 %v1849, %v1847
      %v1946 = vpack.c.b16 %v1852, %v1850
      %v1947 = vpack.c.b16 %v1853, %v1851
      %v1948 = vpack.c.b16 %v1856, %v1854
      %v1949 = vpack.c.b16 %v1857, %v1855
      %v1950 = vpack.c.b16 %v1860, %v1858
      %v1951 = vpack.c.b16 %v1861, %v1859
      %v1952 = vpack.c.b16 %v1864, %v1862
      %v1953 = vpack.c.b16 %v1865, %v1863
      %v1954 = vpack.c.b16 %v1868, %v1866
      %v1955 = vpack.c.b16 %v1869, %v1867
      %v1956 = vpack.c.b16 %v1872, %v1870
      %v1957 = vpack.c.b16 %v1873, %v1871
      %v1958 = vpack.c.b16 %v1876, %v1874
      %v1959 = vpack.c.b16 %v1877, %v1875
      %v1960 = vpack.c.b16 %v1880, %v1878
      %v1961 = vpack.c.b16 %v1881, %v1879
      %v1962 = vpack.c.b16 %v1884, %v1882
      %v1963 = vpack.c.b16 %v1885, %v1883
      %v1964 = vpack.c.b16 %v1888, %v1886
      %v1965 = vpack.c.b16 %v1889, %v1887
      %v1966 = vpack.c.b16 %v1892, %v1890
      %v1967 = vpack.c.b16 %v1893, %v1891
      %v1968 = vpack.c.b16 %v1896, %v1894
      %v1969 = vpack.c.b16 %v1897, %v1895
      %v1970 = vpack.c.b16 %v1900, %v1898
      %v1971 = vpack.c.b16 %v1901, %v1899
      %v1972 = vpack.c.b16 %v1904, %v1902
      %v1973 = vpack.c.b16 %v1905, %v1903
      %v1974 = vpack.c.b16 %v1908, %v1906
      %v1975 = vpack.c.b16 %v1909, %v1907
      %v1976 = vpack.c.b16 %v1912, %v1910
      %v1977 = vpack.c.b16 %v1913, %v1911
      %v1978 = vpack.c.b16 %v1916, %v1914
      %v1979 = vpack.c.b16 %v1917, %v1915
      %v1980 = vpack.c.b16 %v1920, %v1918
      %v1981 = vpack.c.b16 %v1921, %v1919
      %v1982 = vpack.c.b16 %v1924, %v1922
      %v1983 = vpack.c.b16 %v1925, %v1923
      %v1984 = vpack.c.b16 %v1928, %v1926
      %v1985 = vpack.c.b16 %v1929, %v1927
      %v1986 = vpack.c.b16 %v1932, %v1930
      %v1987 = vpack.c.b16 %v1933, %v1931
      %v1988 = vpack.c.b16 %v1936, %v1934
      %v1989 = vpack.c.b16 %v1937, %v1935
      %v1990 = vpack.c.b16 %v1938, %v1938
      %v1991 = vpack.c.b16 %v1939, %v1939
      %vm2042 = vcmask 195584
      %v2043 = vsel %vm2042, %v1733, 0
      %v2045 = vsel %vm2042, %v1735, 0
      %vm2047 = vcmask 1043456
      %v2049 = vsel %vm2047, %v1990, 0
      %v2052 = vsel %vm2047, %v1991, 0
      %2054 = vmatprep.subr.bf16.mxu0 %v1941
      %2055 = vmatpush1.bf16.msra.mxu0 %v1940
      %2056 = vmatprep.subr.bf16.mxu0 %v1943
      %2057 = vmatpush1.bf16.msra.mxu0 %v1942
      %2058 = vmatprep.subr.bf16.mxu0 %v1945
      %2059 = vmatpush1.bf16.msra.mxu0 %v1944
      %2060 = vmatprep.subr.bf16.mxu0 %v1947
      %2061 = vmatpush1.bf16.msra.mxu0 %v1946
      %2062 = vmatprep.subr.bf16.mxu0 %v1949
      %2063 = vmatpush1.bf16.msra.mxu0 %v1948
      %2064 = vmatprep.subr.bf16.mxu0 %v1951
      %2065 = vmatpush1.bf16.msra.mxu0 %v1950
      %2066 = vmatprep.subr.bf16.mxu0 %v1953
      %2067 = vmatpush1.bf16.msra.mxu0 %v1952
      %2068 = vmatprep.subr.bf16.mxu0 %v1955
      %2069 = vmatpush1.bf16.msra.mxu0 %v1954
      %2070 = vmatprep.subr.bf16.mxu0 %v1957
      %2071 = vmatpush1.bf16.msra.mxu0 %v1956
      %2072 = vmatprep.subr.bf16.mxu0 %v1959
      %2073 = vmatpush1.bf16.msra.mxu0 %v1958
      %2074 = vmatprep.subr.bf16.mxu0 %v1961
      %2075 = vmatpush1.bf16.msra.mxu0 %v1960
      %2076 = vmatprep.subr.bf16.mxu0 %v1963
      %2077 = vmatpush1.bf16.msra.mxu0 %v1962
      %2078 = vmatprep.subr.bf16.mxu0 %v1965
      %2079 = vmatpush1.bf16.msra.mxu0 %v1964
      %2080 = vmatprep.subr.bf16.mxu0 %v1967
      %2081 = vmatpush1.bf16.msra.mxu0 %v1966
      %2082 = vmatprep.subr.bf16.mxu0 %v1969
      %2083 = vmatpush1.bf16.msra.mxu0 %v1968
      %2084 = vmatprep.subr.bf16.mxu0 %v1971
      %2085 = vmatpush1.bf16.msra.mxu0 %v1970
      %2086 = vmatprep.mubr.bf16.mxu0 %v1711
      %2087 = vmatmul.mubr.bf16.gmra.mrb[0].mxu0 %v1694
      %v2088 = vpop.f32.mrb[0].mxu0
      %v2089 = vadd.f32 0.0, %v2088
      %v2090 = vpop.f32.mrb[0].mxu0
      %v2091 = vadd.f32 0.0, %v2090
      %v2092 = vpop.f32.mrb[0].mxu0
      %v2093 = vadd.f32 0.0, %v2092
      %v2094 = vpop.f32.mrb[0].mxu0
      %v2095 = vadd.f32 0.0, %v2094
      %2096 = vmatprep.mubr.bf16.mxu0 %v1714
      %2097 = vmatmul.mubr.bf16.gmra.mrb[0].mxu0 %v1698
      %v2098 = vpop.f32.mrb[0].mxu0
      %v2099 = vadd.f32 0.0, %v2098
      %v2100 = vpop.f32.mrb[0].mxu0
      %v2101 = vadd.f32 0.0, %v2100
      %v2102 = vpop.f32.mrb[0].mxu0
      %v2103 = vadd.f32 0.0, %v2102
      %v2104 = vpop.f32.mrb[0].mxu0
      %v2105 = vadd.f32 0.0, %v2104
      %2106 = vdwg.mxu0
      %2107 = vmatprep.subr.bf16.mxu0 %v1973
      %2108 = vmatpush1.bf16.msra.mxu0 %v1972
      %2109 = vmatprep.subr.bf16.mxu0 %v1975
      %2110 = vmatpush1.bf16.msra.mxu0 %v1974
      %2111 = vmatprep.subr.bf16.mxu0 %v1977
      %2112 = vmatpush1.bf16.msra.mxu0 %v1976
      %2113 = vmatprep.subr.bf16.mxu0 %v1979
      %2114 = vmatpush1.bf16.msra.mxu0 %v1978
      %2115 = vmatprep.subr.bf16.mxu0 %v1981
      %2116 = vmatpush1.bf16.msra.mxu0 %v1980
      %2117 = vmatprep.subr.bf16.mxu0 %v1983
      %2118 = vmatpush1.bf16.msra.mxu0 %v1982
      %2119 = vmatprep.subr.bf16.mxu0 %v1985
      %2120 = vmatpush1.bf16.msra.mxu0 %v1984
      %2121 = vmatprep.subr.bf16.mxu0 %v1987
      %2122 = vmatpush1.bf16.msra.mxu0 %v1986
      %2123 = vmatprep.subr.bf16.mxu0 %v1989
      %2124 = vmatpush1.bf16.msra.mxu0 %v1988
      %2125 = vmatprep.subr.bf16.mxu0 %v2052
      %2126 = vmatpush1.bf16.msra.mxu0 %v2049
      %2127 = vmatprep.subr.bf16.mxu0 0
      %2128 = vmatpush1.bf16.msra.mxu0 0
      %2129 = vmatprep.subr.bf16.mxu0 0
      %2130 = vmatpush1.bf16.msra.mxu0 0
      %2131 = vmatprep.subr.bf16.mxu0 0
      %2132 = vmatpush1.bf16.msra.mxu0 0
      %2133 = vmatprep.subr.bf16.mxu0 0
      %2134 = vmatpush1.bf16.msra.mxu0 0
      %2135 = vmatprep.subr.bf16.mxu0 0
      %2136 = vmatpush1.bf16.msra.mxu0 0
      %2137 = vmatprep.subr.bf16.mxu0 0
      %2138 = vmatpush1.bf16.msra.mxu0 0
      %2139 = vmatprep.mubr.bf16.mxu0 %v2043
      %2140 = vmatmul.mubr.bf16.gmra.mrb[0].mxu0 %v1727
      %v2141 = vpop.f32.mrb[0].mxu0
      %v2142 = vadd.f32 %v2089, %v2141
      %v2143 = vpop.f32.mrb[0].mxu0
      %v2144 = vadd.f32 %v2091, %v2143
      %v2145 = vpop.f32.mrb[0].mxu0
      %v2146 = vadd.f32 %v2093, %v2145
      %v2147 = vpop.f32.mrb[0].mxu0
      %v2148 = vadd.f32 %v2095, %v2147
      %2149 = vmatprep.mubr.bf16.mxu0 %v2045
      %2150 = vmatmul.mubr.bf16.gmra.mrb[0].mxu0 %v1730
      %v2151 = vpop.f32.mrb[0].mxu0
      %v2152 = vadd.f32 %v2099, %v2151
      %v2153 = vpop.f32.mrb[0].mxu0
      %v2154 = vadd.f32 %v2101, %v2153
      %v2155 = vpop.f32.mrb[0].mxu0
      %v2156 = vadd.f32 %v2103, %v2155
      %v2157 = vpop.f32.mrb[0].mxu0
      %v2158 = vadd.f32 %v2105, %v2157
      %2159 = vdwg.mxu0
      %v2160 = vadd.f32 %v2142, %v2146
      %v2161 = vadd.f32 %v2160, %v2152
      %v2162 = vadd.f32 %v2161, %v2156
      %v2163 = vrot.slane %v2162, 4
      %v2164 = vadd.f32 %v2162, %v2163
      %v2165 = vrot.slane %v2164, 2
      %v2166 = vadd.f32 %v2164, %v2165
      %v2167 = vrot.slane %v2166, 1
      %v2168 = vadd.f32 %v2166, %v2167
      %v2169 = vadd.f32 %v2144, %v2148
      %v2170 = vadd.f32 %v2169, %v2154
      %v2171 = vadd.f32 %v2170, %v2158
      %v2172 = vrot.slane %v2171, 4
      %v2173 = vadd.f32 %v2171, %v2172
      %v2174 = vrot.slane %v2173, 2
      %v2175 = vadd.f32 %v2173, %v2174
      %v2176 = vrot.slane %v2175, 1
      %v2177 = vadd.f32 %v2175, %v2176
      %2179 = vrot.lane.b32.xlu0 %v2168, 120
      %v2180 = vpop.permute.xlu0 %2179
      %v2182 = vadd.f32 %v2168, %v2180
      %2183 = vrot.lane.b32.xlu0 %v2168, 112
      %v2184 = vpop.permute.xlu0 %2183
      %v2186 = vadd.f32 %v2182, %v2184
      %2187 = vrot.lane.b32.xlu0 %v2168, 104
      %v2188 = vpop.permute.xlu0 %2187
      %v2190 = vadd.f32 %v2186, %v2188
      %2191 = vrot.lane.b32.xlu0 %v2168, 96
      %v2192 = vpop.permute.xlu0 %2191
      %v2194 = vadd.f32 %v2190, %v2192
      %2195 = vrot.lane.b32.xlu0 %v2168, 88
      %v2196 = vpop.permute.xlu0 %2195
      %v2198 = vadd.f32 %v2194, %v2196
      %2199 = vrot.lane.b32.xlu0 %v2168, 80
      %v2200 = vpop.permute.xlu0 %2199
      %v2202 = vadd.f32 %v2198, %v2200
      %2203 = vrot.lane.b32.xlu0 %v2168, 72
      %v2204 = vpop.permute.xlu0 %2203
      %v2206 = vadd.f32 %v2202, %v2204
      %2207 = vrot.lane.b32.xlu0 %v2168, 64
      %v2208 = vpop.permute.xlu0 %2207
      %v2210 = vadd.f32 %v2206, %v2208
      %2211 = vrot.lane.b32.xlu0 %v2168, 56
      %v2212 = vpop.permute.xlu0 %2211
      %v2214 = vadd.f32 %v2210, %v2212
      %2215 = vrot.lane.b32.xlu0 %v2168, 48
      %v2216 = vpop.permute.xlu0 %2215
      %v2218 = vadd.f32 %v2214, %v2216
      %2219 = vrot.lane.b32.xlu0 %v2168, 40
      %v2220 = vpop.permute.xlu0 %2219
      %v2222 = vadd.f32 %v2218, %v2220
      %2223 = vrot.lane.b32.xlu0 %v2168, 32
      %v2224 = vpop.permute.xlu0 %2223
      %v2226 = vadd.f32 %v2222, %v2224
      %2227 = vrot.lane.b32.xlu0 %v2168, 24
      %v2228 = vpop.permute.xlu0 %2227
      %v2230 = vadd.f32 %v2226, %v2228
      %2231 = vrot.lane.b32.xlu0 %v2168, 16
      %v2232 = vpop.permute.xlu0 %2231
      %v2234 = vadd.f32 %v2230, %v2232
      %2235 = vrot.lane.b32.xlu0 %v2168, 8
      %v2236 = vpop.permute.xlu0 %2235
      %v2238 = vadd.f32 %v2234, %v2236
      %v2239 = vadd.f32 %v2238, %v2177
      %2241 = vrot.lane.b32.xlu0 %v2177, 120
      %v2242 = vpop.permute.xlu0 %2241
      %v2244 = vadd.f32 %v2239, %v2242
      %2245 = vrot.lane.b32.xlu0 %v2177, 112
      %v2246 = vpop.permute.xlu0 %2245
      %v2248 = vadd.f32 %v2244, %v2246
      %2249 = vrot.lane.b32.xlu0 %v2177, 104
      %v2250 = vpop.permute.xlu0 %2249
      %v2252 = vadd.f32 %v2248, %v2250
      %2253 = vrot.lane.b32.xlu0 %v2177, 96
      %v2254 = vpop.permute.xlu0 %2253
      %v2256 = vadd.f32 %v2252, %v2254
      %2257 = vrot.lane.b32.xlu0 %v2177, 88
      %v2258 = vpop.permute.xlu0 %2257
      %v2260 = vadd.f32 %v2256, %v2258
      %2261 = vrot.lane.b32.xlu0 %v2177, 80
      %v2262 = vpop.permute.xlu0 %2261
      %v2264 = vadd.f32 %v2260, %v2262
      %2265 = vrot.lane.b32.xlu0 %v2177, 72
      %v2266 = vpop.permute.xlu0 %2265
      %v2268 = vadd.f32 %v2264, %v2266
      %2269 = vrot.lane.b32.xlu0 %v2177, 64
      %v2270 = vpop.permute.xlu0 %2269
      %v2272 = vadd.f32 %v2268, %v2270
      %2273 = vrot.lane.b32.xlu0 %v2177, 56
      %v2274 = vpop.permute.xlu0 %2273
      %v2276 = vadd.f32 %v2272, %v2274
      %2277 = vrot.lane.b32.xlu0 %v2177, 48
      %v2278 = vpop.permute.xlu0 %2277
      %v2280 = vadd.f32 %v2276, %v2278
      %2281 = vrot.lane.b32.xlu0 %v2177, 40
      %v2282 = vpop.permute.xlu0 %2281
      %v2284 = vadd.f32 %v2280, %v2282
      %2285 = vrot.lane.b32.xlu0 %v2177, 32
      %v2286 = vpop.permute.xlu0 %2285
      %v2288 = vadd.f32 %v2284, %v2286
      %2289 = vrot.lane.b32.xlu0 %v2177, 24
      %v2290 = vpop.permute.xlu0 %2289
      %v2292 = vadd.f32 %v2288, %v2290
      %2293 = vrot.lane.b32.xlu0 %v2177, 16
      %v2294 = vpop.permute.xlu0 %2293
      %v2296 = vadd.f32 %v2292, %v2294
      %2297 = vrot.lane.b32.xlu0 %v2177, 8
      %v2298 = vpop.permute.xlu0 %2297
      %v2300 = vadd.f32 %v2296, %v2298
      %v2301 = vrcp.pop 1024.0
      %v2302 = vmul.f32 %v2300, %v2301
      %2304 = vrot.lane.b32.xlu0 %v2302, 8
      %v2305 = vpop.permute.xlu0 %2304
      %2307 = vrot.lane.b32.xlu0 %v2302, 16
      %v2308 = vpop.permute.xlu0 %2307
      %2310 = vrot.lane.b32.xlu0 %v2302, 24
      %v2311 = vpop.permute.xlu0 %2310
      %2313 = vrot.lane.b32.xlu0 %v2302, 32
      %v2314 = vpop.permute.xlu0 %2313
      %2316 = vrot.lane.b32.xlu0 %v2302, 40
      %v2317 = vpop.permute.xlu0 %2316
      %2319 = vrot.lane.b32.xlu0 %v2302, 48
      %v2320 = vpop.permute.xlu0 %2319
      %2322 = vrot.lane.b32.xlu0 %v2302, 56
      %v2323 = vpop.permute.xlu0 %2322
      %2325 = vrot.lane.b32.xlu0 %v2302, 64
      %v2326 = vpop.permute.xlu0 %2325
      %2328 = vrot.lane.b32.xlu0 %v2302, 72
      %v2329 = vpop.permute.xlu0 %2328
      %2331 = vrot.lane.b32.xlu0 %v2302, 80
      %v2332 = vpop.permute.xlu0 %2331
      %2334 = vrot.lane.b32.xlu0 %v2302, 88
      %v2335 = vpop.permute.xlu0 %2334
      %2337 = vrot.lane.b32.xlu0 %v2302, 96
      %v2338 = vpop.permute.xlu0 %2337
      %2340 = vrot.lane.b32.xlu0 %v2302, 104
      %v2341 = vpop.permute.xlu0 %2340
      %2343 = vrot.lane.b32.xlu0 %v2302, 112
      %v2344 = vpop.permute.xlu0 %2343
      %2346 = vrot.lane.b32.xlu0 %v2302, 120
      %v2347 = vpop.permute.xlu0 %2346
      %v2349 = vsel %vm1704, %v2302, %v2305
      %v2350 = vsel %vm1720, %v2349, %v2308
      %v2351 = vsel %vm2042, %v2350, %v2311
      %vm2352 = vcmask 261120
      %v2353 = vsel %vm2352, %v2351, %v2314
      %vm2354 = vcmask 326656
      %v2355 = vsel %vm2354, %v2353, %v2317
      %vm2356 = vcmask 392192
      %v2357 = vsel %vm2356, %v2355, %v2320
      %vm2358 = vcmask 457728
      %v2359 = vsel %vm2358, %v2357, %v2323
      %vm2360 = vcmask 523264
      %v2361 = vsel %vm2360, %v2359, %v2326
      %vm2362 = vcmask 588800
      %v2363 = vsel %vm2362, %v2361, %v2329
      %vm2364 = vcmask 654336
      %v2365 = vsel %vm2364, %v2363, %v2332
      %vm2366 = vcmask 719872
      %v2367 = vsel %vm2366, %v2365, %v2335
      %vm2368 = vcmask 785408
      %v2369 = vsel %vm2368, %v2367, %v2338
      %vm2370 = vcmask 850944
      %v2371 = vsel %vm2370, %v2369, %v2341
      %vm2372 = vcmask 916480
      %v2373 = vsel %vm2372, %v2371, %v2344
      %vm2374 = vcmask 982016
      %v2375 = vsel %vm2374, %v2373, %v2347
      %v2376 = vlaneseq
      %v2377 = vshrl.u32 %v2376, 7
      %v2378 = vsub.s32 0, %v2377
      %v2379 = vrot.slane %v2375, %v2378
      %v2380 = vsub.f32 %v2142, %v2379
      %v2381 = vsub.f32 %v2144, %v2379
      %v2382 = vsub.f32 %v2146, %v2379
      %v2383 = vsub.f32 %v2148, %v2379
      %v2384 = vsub.f32 %v2152, %v2379
      %v2385 = vsub.f32 %v2154, %v2379
      %v2386 = vsub.f32 %v2156, %v2379
      %v2387 = vsub.f32 %v2158, %v2379
      %v2388 = vmul.f32 %v2380, %v2380
      %v2389 = vmul.f32 %v2381, %v2381
      %v2390 = vmul.f32 %v2382, %v2382
      %v2391 = vmul.f32 %v2383, %v2383
      %v2392 = vmul.f32 %v2384, %v2384
      %v2393 = vmul.f32 %v2385, %v2385
      %v2394 = vmul.f32 %v2386, %v2386
      %v2395 = vmul.f32 %v2387, %v2387
      %v2396 = vadd.f32 %v2388, %v2390
      %v2397 = vadd.f32 %v2396, %v2392
      %v2398 = vadd.f32 %v2397, %v2394
      %v2399 = vrot.slane %v2398, 4
      %v2400 = vadd.f32 %v2398, %v2399
      %v2401 = vrot.slane %v2400, 2
      %v2402 = vadd.f32 %v2400, %v2401
      %v2403 = vrot.slane %v2402, 1
      %v2404 = vadd.f32 %v2402, %v2403
      %v2405 = vadd.f32 %v2389, %v2391
      %v2406 = vadd.f32 %v2405, %v2393
      %v2407 = vadd.f32 %v2406, %v2395
      %v2408 = vrot.slane %v2407, 4
      %v2409 = vadd.f32 %v2407, %v2408
      %v2410 = vrot.slane %v2409, 2
      %v2411 = vadd.f32 %v2409, %v2410
      %v2412 = vrot.slane %v2411, 1
      %v2413 = vadd.f32 %v2411, %v2412
      %2415 = vrot.lane.b32.xlu0 %v2404, 120
      %v2416 = vpop.permute.xlu0 %2415
      %v2418 = vadd.f32 %v2404, %v2416
      %2419 = vrot.lane.b32.xlu0 %v2404, 112
      %v2420 = vpop.permute.xlu0 %2419
      %v2422 = vadd.f32 %v2418, %v2420
      %2423 = vrot.lane.b32.xlu0 %v2404, 104
      %v2424 = vpop.permute.xlu0 %2423
      %v2426 = vadd.f32 %v2422, %v2424
      %2427 = vrot.lane.b32.xlu0 %v2404, 96
      %v2428 = vpop.permute.xlu0 %2427
      %v2430 = vadd.f32 %v2426, %v2428
      %2431 = vrot.lane.b32.xlu0 %v2404, 88
      %v2432 = vpop.permute.xlu0 %2431
      %v2434 = vadd.f32 %v2430, %v2432
      %2435 = vrot.lane.b32.xlu0 %v2404, 80
      %v2436 = vpop.permute.xlu0 %2435
      %v2438 = vadd.f32 %v2434, %v2436
      %2439 = vrot.lane.b32.xlu0 %v2404, 72
      %v2440 = vpop.permute.xlu0 %2439
      %v2442 = vadd.f32 %v2438, %v2440
      %2443 = vrot.lane.b32.xlu0 %v2404, 64
      %v2444 = vpop.permute.xlu0 %2443
      %v2446 = vadd.f32 %v2442, %v2444
      %2447 = vrot.lane.b32.xlu0 %v2404, 56
      %v2448 = vpop.permute.xlu0 %2447
      %v2450 = vadd.f32 %v2446, %v2448
      %2451 = vrot.lane.b32.xlu0 %v2404, 48
      %v2452 = vpop.permute.xlu0 %2451
      %v2454 = vadd.f32 %v2450, %v2452
      %2455 = vrot.lane.b32.xlu0 %v2404, 40
      %v2456 = vpop.permute.xlu0 %2455
      %v2458 = vadd.f32 %v2454, %v2456
      %2459 = vrot.lane.b32.xlu0 %v2404, 32
      %v2460 = vpop.permute.xlu0 %2459
      %v2462 = vadd.f32 %v2458, %v2460
      %2463 = vrot.lane.b32.xlu0 %v2404, 24
      %v2464 = vpop.permute.xlu0 %2463
      %v2466 = vadd.f32 %v2462, %v2464
      %2467 = vrot.lane.b32.xlu0 %v2404, 16
      %v2468 = vpop.permute.xlu0 %2467
      %v2470 = vadd.f32 %v2466, %v2468
      %2471 = vrot.lane.b32.xlu0 %v2404, 8
      %v2472 = vpop.permute.xlu0 %2471
      %v2474 = vadd.f32 %v2470, %v2472
      %v2475 = vadd.f32 %v2474, %v2413
      %2477 = vrot.lane.b32.xlu0 %v2413, 120
      %v2478 = vpop.permute.xlu0 %2477
      %v2480 = vadd.f32 %v2475, %v2478
      %2481 = vrot.lane.b32.xlu0 %v2413, 112
      %v2482 = vpop.permute.xlu0 %2481
      %v2484 = vadd.f32 %v2480, %v2482
      %2485 = vrot.lane.b32.xlu0 %v2413, 104
      %v2486 = vpop.permute.xlu0 %2485
      %v2488 = vadd.f32 %v2484, %v2486
      %2489 = vrot.lane.b32.xlu0 %v2413, 96
      %v2490 = vpop.permute.xlu0 %2489
      %v2492 = vadd.f32 %v2488, %v2490
      %2493 = vrot.lane.b32.xlu0 %v2413, 88
      %v2494 = vpop.permute.xlu0 %2493
      %v2496 = vadd.f32 %v2492, %v2494
      %2497 = vrot.lane.b32.xlu0 %v2413, 80
      %v2498 = vpop.permute.xlu0 %2497
      %v2500 = vadd.f32 %v2496, %v2498
      %2501 = vrot.lane.b32.xlu0 %v2413, 72
      %v2502 = vpop.permute.xlu0 %2501
      %v2504 = vadd.f32 %v2500, %v2502
      %2505 = vrot.lane.b32.xlu0 %v2413, 64
      %v2506 = vpop.permute.xlu0 %2505
      %v2508 = vadd.f32 %v2504, %v2506
      %2509 = vrot.lane.b32.xlu0 %v2413, 56
      %v2510 = vpop.permute.xlu0 %2509
      %v2512 = vadd.f32 %v2508, %v2510
      %2513 = vrot.lane.b32.xlu0 %v2413, 48
      %v2514 = vpop.permute.xlu0 %2513
      %v2516 = vadd.f32 %v2512, %v2514
      %2517 = vrot.lane.b32.xlu0 %v2413, 40
      %v2518 = vpop.permute.xlu0 %2517
      %v2520 = vadd.f32 %v2516, %v2518
      %2521 = vrot.lane.b32.xlu0 %v2413, 32
      %v2522 = vpop.permute.xlu0 %2521
      %v2524 = vadd.f32 %v2520, %v2522
      %2525 = vrot.lane.b32.xlu0 %v2413, 24
      %v2526 = vpop.permute.xlu0 %2525
      %v2528 = vadd.f32 %v2524, %v2526
      %2529 = vrot.lane.b32.xlu0 %v2413, 16
      %v2530 = vpop.permute.xlu0 %2529
      %v2532 = vadd.f32 %v2528, %v2530
      %2533 = vrot.lane.b32.xlu0 %v2413, 8
      %v2534 = vpop.permute.xlu0 %2533
      %v2536 = vadd.f32 %v2532, %v2534
      %v2537 = vmul.f32 %v2536, %v2301
      %v2538 = vadd.f32 %v2537, 1e-05
      %v2539 = vrsqrt.pop %v2538
      %2541 = vrot.lane.b32.xlu0 %v2539, 8
      %v2542 = vpop.permute.xlu0 %2541
      %2544 = vrot.lane.b32.xlu0 %v2539, 16
      %v2545 = vpop.permute.xlu0 %2544
      %2547 = vrot.lane.b32.xlu0 %v2539, 24
      %v2548 = vpop.permute.xlu0 %2547
      %2550 = vrot.lane.b32.xlu0 %v2539, 32
      %v2551 = vpop.permute.xlu0 %2550
      %2553 = vrot.lane.b32.xlu0 %v2539, 40
      %v2554 = vpop.permute.xlu0 %2553
      %2556 = vrot.lane.b32.xlu0 %v2539, 48
      %v2557 = vpop.permute.xlu0 %2556
      %2559 = vrot.lane.b32.xlu0 %v2539, 56
      %v2560 = vpop.permute.xlu0 %2559
      %2562 = vrot.lane.b32.xlu0 %v2539, 64
      %v2563 = vpop.permute.xlu0 %2562
      %2565 = vrot.lane.b32.xlu0 %v2539, 72
      %v2566 = vpop.permute.xlu0 %2565
      %2568 = vrot.lane.b32.xlu0 %v2539, 80
      %v2569 = vpop.permute.xlu0 %2568
      %2571 = vrot.lane.b32.xlu0 %v2539, 88
      %v2572 = vpop.permute.xlu0 %2571
      %2574 = vrot.lane.b32.xlu0 %v2539, 96
      %v2575 = vpop.permute.xlu0 %2574
      %2577 = vrot.lane.b32.xlu0 %v2539, 104
      %v2578 = vpop.permute.xlu0 %2577
      %2580 = vrot.lane.b32.xlu0 %v2539, 112
      %v2581 = vpop.permute.xlu0 %2580
      %2583 = vrot.lane.b32.xlu0 %v2539, 120
      %v2584 = vpop.permute.xlu0 %2583
      %v2586 = vsel %vm1704, %v2539, %v2542
      %v2587 = vsel %vm1720, %v2586, %v2545
      %v2588 = vsel %vm2042, %v2587, %v2548
      %v2589 = vsel %vm2352, %v2588, %v2551
      %v2590 = vsel %vm2354, %v2589, %v2554
      %v2591 = vsel %vm2356, %v2590, %v2557
      %v2592 = vsel %vm2358, %v2591, %v2560
      %v2593 = vsel %vm2360, %v2592, %v2563
      %v2594 = vsel %vm2362, %v2593, %v2566
      %v2595 = vsel %vm2364, %v2594, %v2569
      %v2596 = vsel %vm2366, %v2595, %v2572
      %v2597 = vsel %vm2368, %v2596, %v2575
      %v2598 = vsel %vm2370, %v2597, %v2578
      %v2599 = vsel %vm2372, %v2598, %v2581
      %v2600 = vsel %vm2374, %v2599, %v2584
      %v2601 = vlaneseq
      %v2602 = vshrl.u32 %v2601, 7
      %v2603 = vsub.s32 0, %v2602
      %v2604 = vrot.slane %v2600, %v2603
      %v2605 = vmul.f32 %v2380, %v2604
      %v2606 = vmul.f32 %v2381, %v2604
      %v2607 = vmul.f32 %v2382, %v2604
      %v2608 = vmul.f32 %v2383, %v2604
      %v2609 = vmul.f32 %v2384, %v2604
      %v2610 = vmul.f32 %v2385, %v2604
      %v2611 = vmul.f32 %v2386, %v2604
      %v2612 = vmul.f32 %v2387, %v2604
      %v2613 = vmax.f32 %v2605, 0.0
      %v2614 = vmax.f32 %v2606, 0.0
      %v2615 = vmax.f32 %v2607, 0.0
      %v2616 = vmax.f32 %v2608, 0.0
      %v2617 = vmax.f32 %v2609, 0.0
      %v2618 = vmax.f32 %v2610, 0.0
      %v2619 = vmax.f32 %v2611, 0.0
      %v2620 = vmax.f32 %v2612, 0.0
      %v2621 = vmax.f32 %v2613, %v2614
      %v2622 = vmax.f32 %v2615, %v2616
      %v2623 = vmax.f32 %v2617, %v2618
      %v2624 = vmax.f32 %v2619, %v2620
      %v2629 = vcombine.high %v2621, %v2621
      %v2631 = vunpack.c.l.s4 1966171168
      %v2632 = vunpack.c.0.s8 %v2631
      %v2633 = vlaneseq
      %v2634 = vshrl.u32 %v2633, 7
      %v2635 = vsub.s32 %v2632, %v2634
      %v2636 = vrot.slane %v2621, %v2635
      %v2638 = vunpack.c.l.s4 1966171168
      %v2639 = vunpack.c.0.s8 %v2638
      %v2640 = vlaneseq
      %v2641 = vshrl.u32 %v2640, 7
      %v2642 = vsub.s32 %v2639, %v2641
      %v2643 = vrot.slane %v2629, %v2642
      %v2644 = vcombine.high %v2636, %v2636
      %v2645 = vcombine.high %v2643, %v2643
      %v2647 = vunpack.c.l.s4 1966171168
      %v2648 = vunpack.c.0.s8 %v2647
      %v2649 = vlaneseq
      %v2650 = vshrl.u32 %v2649, 7
      %v2651 = vsub.s32 %v2648, %v2650
      %v2652 = vrot.slane %v2636, %v2651
      %v2654 = vunpack.c.l.s4 1966171168
      %v2655 = vunpack.c.0.s8 %v2654
      %v2656 = vlaneseq
      %v2657 = vshrl.u32 %v2656, 7
      %v2658 = vsub.s32 %v2655, %v2657
      %v2659 = vrot.slane %v2643, %v2658
      %v2661 = vunpack.c.l.s4 1966171168
      %v2662 = vunpack.c.0.s8 %v2661
      %v2663 = vlaneseq
      %v2664 = vshrl.u32 %v2663, 7
      %v2665 = vsub.s32 %v2662, %v2664
      %v2666 = vrot.slane %v2644, %v2665
      %v2668 = vunpack.c.l.s4 1966171168
      %v2669 = vunpack.c.0.s8 %v2668
      %v2670 = vlaneseq
      %v2671 = vshrl.u32 %v2670, 7
      %v2672 = vsub.s32 %v2669, %v2671
      %v2673 = vrot.slane %v2645, %v2672
      %v2674 = vcombine.high %v2652, %v2652
      %v2675 = vcombine.high %v2659, %v2659
      %v2676 = vcombine.high %v2666, %v2666
      %v2677 = vcombine.high %v2673, %v2673
      %v2678 = vcombine.high %v2622, %v2622
      %v2680 = vunpack.c.l.s4 1966171168
      %v2681 = vunpack.c.0.s8 %v2680
      %v2682 = vlaneseq
      %v2683 = vshrl.u32 %v2682, 7
      %v2684 = vsub.s32 %v2681, %v2683
      %v2685 = vrot.slane %v2622, %v2684
      %v2687 = vunpack.c.l.s4 1966171168
      %v2688 = vunpack.c.0.s8 %v2687
      %v2689 = vlaneseq
      %v2690 = vshrl.u32 %v2689, 7
      %v2691 = vsub.s32 %v2688, %v2690
      %v2692 = vrot.slane %v2678, %v2691
      %v2693 = vcombine.high %v2685, %v2685
      %v2694 = vcombine.high %v2692, %v2692
      %v2696 = vunpack.c.l.s4 1966171168
      %v2697 = vunpack.c.0.s8 %v2696
      %v2698 = vlaneseq
      %v2699 = vshrl.u32 %v2698, 7
      %v2700 = vsub.s32 %v2697, %v2699
      %v2701 = vrot.slane %v2685, %v2700
      %v2703 = vunpack.c.l.s4 1966171168
      %v2704 = vunpack.c.0.s8 %v2703
      %v2705 = vlaneseq
      %v2706 = vshrl.u32 %v2705, 7
      %v2707 = vsub.s32 %v2704, %v2706
      %v2708 = vrot.slane %v2692, %v2707
      %v2710 = vunpack.c.l.s4 1966171168
      %v2711 = vunpack.c.0.s8 %v2710
      %v2712 = vlaneseq
      %v2713 = vshrl.u32 %v2712, 7
      %v2714 = vsub.s32 %v2711, %v2713
      %v2715 = vrot.slane %v2693, %v2714
      %v2717 = vunpack.c.l.s4 1966171168
      %v2718 = vunpack.c.0.s8 %v2717
      %v2719 = vlaneseq
      %v2720 = vshrl.u32 %v2719, 7
      %v2721 = vsub.s32 %v2718, %v2720
      %v2722 = vrot.slane %v2694, %v2721
      %v2723 = vcombine.high %v2701, %v2701
      %v2724 = vcombine.high %v2708, %v2708
      %v2725 = vcombine.high %v2715, %v2715
      %v2726 = vcombine.high %v2722, %v2722
      %v2727 = vcombine.high %v2623, %v2623
      %v2729 = vunpack.c.l.s4 1966171168
      %v2730 = vunpack.c.0.s8 %v2729
      %v2731 = vlaneseq
      %v2732 = vshrl.u32 %v2731, 7
      %v2733 = vsub.s32 %v2730, %v2732
      %v2734 = vrot.slane %v2623, %v2733
      %v2736 = vunpack.c.l.s4 1966171168
      %v2737 = vunpack.c.0.s8 %v2736
      %v2738 = vlaneseq
      %v2739 = vshrl.u32 %v2738, 7
      %v2740 = vsub.s32 %v2737, %v2739
      %v2741 = vrot.slane %v2727, %v2740
      %v2742 = vcombine.high %v2734, %v2734
      %v2743 = vcombine.high %v2741, %v2741
      %v2745 = vunpack.c.l.s4 1966171168
      %v2746 = vunpack.c.0.s8 %v2745
      %v2747 = vlaneseq
      %v2748 = vshrl.u32 %v2747, 7
      %v2749 = vsub.s32 %v2746, %v2748
      %v2750 = vrot.slane %v2734, %v2749
      %v2752 = vunpack.c.l.s4 1966171168
      %v2753 = vunpack.c.0.s8 %v2752
      %v2754 = vlaneseq
      %v2755 = vshrl.u32 %v2754, 7
      %v2756 = vsub.s32 %v2753, %v2755
      %v2757 = vrot.slane %v2741, %v2756
      %v2759 = vunpack.c.l.s4 1966171168
      %v2760 = vunpack.c.0.s8 %v2759
      %v2761 = vlaneseq
      %v2762 = vshrl.u32 %v2761, 7
      %v2763 = vsub.s32 %v2760, %v2762
      %v2764 = vrot.slane %v2742, %v2763
      %v2766 = vunpack.c.l.s4 1966171168
      %v2767 = vunpack.c.0.s8 %v2766
      %v2768 = vlaneseq
      %v2769 = vshrl.u32 %v2768, 7
      %v2770 = vsub.s32 %v2767, %v2769
      %v2771 = vrot.slane %v2743, %v2770
      %v2772 = vcombine.high %v2750, %v2750
      %v2773 = vcombine.high %v2757, %v2757
      %v2774 = vcombine.high %v2764, %v2764
      %v2775 = vcombine.high %v2771, %v2771
      %v2776 = vcombine.high %v2624, %v2624
      %v2778 = vunpack.c.l.s4 1966171168
      %v2779 = vunpack.c.0.s8 %v2778
      %v2780 = vlaneseq
      %v2781 = vshrl.u32 %v2780, 7
      %v2782 = vsub.s32 %v2779, %v2781
      %v2783 = vrot.slane %v2624, %v2782
      %v2785 = vunpack.c.l.s4 1966171168
      %v2786 = vunpack.c.0.s8 %v2785
      %v2787 = vlaneseq
      %v2788 = vshrl.u32 %v2787, 7
      %v2789 = vsub.s32 %v2786, %v2788
      %v2790 = vrot.slane %v2776, %v2789
      %v2791 = vcombine.high %v2783, %v2783
      %v2792 = vcombine.high %v2790, %v2790
      %v2794 = vunpack.c.l.s4 1966171168
      %v2795 = vunpack.c.0.s8 %v2794
      %v2796 = vlaneseq
      %v2797 = vshrl.u32 %v2796, 7
      %v2798 = vsub.s32 %v2795, %v2797
      %v2799 = vrot.slane %v2783, %v2798
      %v2801 = vunpack.c.l.s4 1966171168
      %v2802 = vunpack.c.0.s8 %v2801
      %v2803 = vlaneseq
      %v2804 = vshrl.u32 %v2803, 7
      %v2805 = vsub.s32 %v2802, %v2804
      %v2806 = vrot.slane %v2790, %v2805
      %v2808 = vunpack.c.l.s4 1966171168
      %v2809 = vunpack.c.0.s8 %v2808
      %v2810 = vlaneseq
      %v2811 = vshrl.u32 %v2810, 7
      %v2812 = vsub.s32 %v2809, %v2811
      %v2813 = vrot.slane %v2791, %v2812
      %v2815 = vunpack.c.l.s4 1966171168
      %v2816 = vunpack.c.0.s8 %v2815
      %v2817 = vlaneseq
      %v2818 = vshrl.u32 %v2817, 7
      %v2819 = vsub.s32 %v2816, %v2818
      %v2820 = vrot.slane %v2792, %v2819
      %v2821 = vcombine.high %v2799, %v2799
      %v2822 = vcombine.high %v2806, %v2806
      %v2823 = vcombine.high %v2813, %v2813
      %v2824 = vcombine.high %v2820, %v2820
      %v2857 = vmax.f32 %v2652, %v2666
      %v2858 = vmax.f32 %v2674, %v2676
      %v2859 = vmax.f32 %v2659, %v2673
      %v2860 = vmax.f32 %v2675, %v2677
      %v2861 = vmax.f32 %v2701, %v2715
      %v2862 = vmax.f32 %v2723, %v2725
      %v2863 = vmax.f32 %v2708, %v2722
      %v2864 = vmax.f32 %v2724, %v2726
      %v2865 = vmax.f32 %v2750, %v2764
      %v2866 = vmax.f32 %v2772, %v2774
      %v2867 = vmax.f32 %v2757, %v2771
      %v2868 = vmax.f32 %v2773, %v2775
      %v2869 = vmax.f32 %v2799, %v2813
      %v2870 = vmax.f32 %v2821, %v2823
      %v2871 = vmax.f32 %v2806, %v2820
      %v2872 = vmax.f32 %v2822, %v2824
      %2873 = vst [vmem:[%s138] sm:$0x1] %v2857
      %2874 = vst [vmem:[%s138 + $0x1] sm:$0x1] %v2858
      %2875 = vst [vmem:[%s138 + $0x2] sm:$0x1] %v2859
      %2876 = vst [vmem:[%s138 + $0x3] sm:$0x1] %v2860
      %2877 = vst [vmem:[%s138 + $0x4] sm:$0x1] %v2861
      %2878 = vst [vmem:[%s138 + $0x5] sm:$0x1] %v2862
      %2879 = vst [vmem:[%s138 + $0x6] sm:$0x1] %v2863
      %2880 = vst [vmem:[%s138 + $0x7] sm:$0x1] %v2864
      %2881 = vst [vmem:[%s138 + $0x8] sm:$0x1] %v2865
      %2882 = vst [vmem:[%s138 + $0x9] sm:$0x1] %v2866
      %2883 = vst [vmem:[%s138 + $0xa] sm:$0x1] %v2867
      %2884 = vst [vmem:[%s138 + $0xb] sm:$0x1] %v2868
      %2885 = vst [vmem:[%s138 + $0xc] sm:$0x1] %v2869
      %2886 = vst [vmem:[%s138 + $0xd] sm:$0x1] %v2870
      %2887 = vst [vmem:[%s138 + $0xe] sm:$0x1] %v2871
      %2888 = vst [vmem:[%s138 + $0xf] sm:$0x1] %v2872
      %p2889 = scmp.lt.s32.totalorder %s13, 1
      %s2890 = scalar_select %p2889, %s13, 1
      %s2891 = smul.addr %s2890, 16
      %s2892 = scalar_lea.vmem %s2, %s2891
      // Predicated region
      $region29: #{_lambda_.2} parent=27 // pred_check
        %p2893 = pneg %p78
      $region30: #{_lambda_.2} parent=27 // pred_check_branch
        %2895 = sbr.rel (%p2893) target = $region32
      $region31: #{_lambda_.2} parent=27 // pred_region
        _
      $region32: #{_lambda_.2} parent=27 // pred_fallthru
        _
    $region28: #{_lambda_.2} parent=5 // pred_fallthru
      _
    %p2896 = scmp.le.s32.totalorder 2, %s8
    // Predicated region
    $region33: #{_lambda_.2} parent=5 // pred_check
      %p2897 = pneg %p2896
    $region34: #{_lambda_.2} parent=5 // pred_check_branch
      %2899 = sbr.rel (%p2897) target = $region36
    $region35: #{_lambda_.2} parent=5 // pred_region
      %s2900 = ssub.s32 %s8, 2
      // Predicated region
      $region37: #{_lambda_.2} parent=35 // pred_check
        %p2901 = pneg %p84
      $region38: #{_lambda_.2} parent=35 // pred_check_branch
        %2903 = sbr.rel (%p2901) target = $region40
      $region39: #{_lambda_.2} parent=35 // pred_region
        %p2904 = scmp.lt.s32.totalorder %s14, 1
        %s2905 = scalar_select %p2904, %s14, 1
        %s2906 = smul.addr %s2905, 16
        %s2907 = scalar_lea.vmem %s2, %s2906
      $region40: #{_lambda_.2} parent=35 // pred_fallthru
        _
    $region36: #{_lambda_.2} parent=5 // pred_fallthru
      _
  $region6: #{_lambda_.2} parent=0 // loop_footer
    %s12 = sadd.s32 1, %s8
  $region7: #{_lambda_.2} parent=0 // loop_footer_branch
    %7 = sbr.rel target = $region3
  $region8: #{_lambda_.2} parent=0 // loop_exit
    _

// kernel: _lambda_.3
$region0: #{_lambda_.3}
  #allocation0 [shape = 'u32[]', space=smem, size = 0x4, offset = 0x4, fixed_abs, tag = 'smem constant byte address 0x4 - core index']
  #allocation1 [shape = 'u32[144,128]{1,0:T(1,128)}', space=vmem, size = 0x12000, scoped, tag = 'internal scratch']
  #allocation2 [shape = 'bf16[18,3,128]{2,1,0:T(4,128)(2,1)}', space=vmem, size = 0x4800, scoped, tag = 'scratch operand']
  %s0 = inlined_call_operand.vmem [shape: f32[2,16,1,128], index: 0, kind: input, shape index: {}]
  %s1 = inlined_call_operand.vmem [shape: bf16[432,256], index: 1, kind: input, shape index: {}]
  %s2 = inlined_call_operand.vmem [shape: f32[2,8,1,128], index: 2, kind: output, shape index: {}]
  %s3 = sld [smem:[#allocation0]]
  $region41: #{_lambda_.3} parent=0
    _
  %s5 = ssub.s32 1, %s3
  %s6 = scalar_select 0, %s5, %s3
  loop: start=0, step=1, limit=4
  $region2: #{_lambda_.3} parent=0 // loop_pre_header
    _
  $region3: #{_lambda_.3} parent=0 // loop_header
    %s8 = sphi 0, %s12
    %p9 = scmp.ge.s32.totalorder %s8, 4
    %s18 = sphi 0, %s20
    %s21 = sphi 0, %s18
    %s22 = sphi 0, %s21
    %s38 = sphi 0, %s22
    %s42 = sphi 0, %s42
    %s44 = sphi 0, %s42
    %s45 = sphi 0, %s44
    %s59 = sphi 0, %s45
    %s65 = sphi 0, %s67
    %s68 = sphi 0, %s65
    %s69 = sphi 0, %s68
    %s85 = sphi 0, %s69
  $region4: #{_lambda_.3} parent=0 // loop_header_branch
    %11 = sbr.rel (%p9) target = $region8
  $region5: #{_lambda_.3} parent=0 // loop_body
    %s13 = ssub.s32 %s8, 1
    %s14 = ssub.s32 %s8, 2
    %s15 = sadd.s32 %s8, 1
    %s16 = ssub.s32 %s8, %s15
    %p17 = scmp.eq.s32.totalorder %s16, 0
    %s19 = sadd.s32 %s18, 1
    %s20 = scalar_select %p17, %s18, %s19
    %p23 = pneg %p17
    %p24 = scmp.eq.s32.totalorder %s8, 1
    %p25 = por %p23, %p24
    %p26 = scmp.ne.s32.totalorder %s18, %s21
    %p27 = scmp.eq.s32.totalorder %s8, 0
    %p28 = por %p26, %p27
    %p29 = scmp.ne.s32.totalorder %s18, %s21
    %p30 = scmp.eq.s32.totalorder %s13, 1
    %p31 = por %p29, %p30
    %p32 = scmp.ne.s32.totalorder %s21, %s22
    %p33 = scmp.eq.s32.totalorder %s13, 0
    %p34 = por %p32, %p33
    %p35 = scmp.ne.s32.totalorder %s21, %s22
    %p36 = scmp.eq.s32.totalorder %s14, 1
    %p37 = por %p35, %p36
    %p39 = scmp.ne.s32.totalorder %s22, %s38
    %p40 = scmp.eq.s32.totalorder %s14, 0
    %p41 = por %p39, %p40
    %s43 = sadd.s32 %s42, 1
    %p46 = scmp.eq.s32.totalorder %s8, 1
    %p47 = scmp.ne.s32.totalorder %s42, %s44
    %p48 = scmp.eq.s32.totalorder %s8, 0
    %p49 = por %p47, %p48
    %p50 = scmp.ne.s32.totalorder %s42, %s44
    %p51 = scmp.eq.s32.totalorder %s13, 1
    %p52 = por %p50, %p51
    %p53 = scmp.ne.s32.totalorder %s44, %s45
    %p54 = scmp.eq.s32.totalorder %s13, 0
    %p55 = por %p53, %p54
    %p56 = scmp.ne.s32.totalorder %s44, %s45
    %p57 = scmp.eq.s32.totalorder %s14, 1
    %p58 = por %p56, %p57
    %p60 = scmp.ne.s32.totalorder %s45, %s59
    %p61 = scmp.eq.s32.totalorder %s14, 0
    %p62 = por %p60, %p61
    %s63 = ssub.s32 %s8, %s15
    %p64 = scmp.eq.s32.totalorder %s63, 0
    %s66 = sadd.s32 %s65, 1
    %s67 = scalar_select %p64, %s65, %s66
    %p70 = pneg %p64
    %p71 = scmp.eq.s32.totalorder %s8, 1
    %p72 = por %p70, %p71
    %p73 = scmp.ne.s32.totalorder %s65, %s68
    %p74 = scmp.eq.s32.totalorder %s8, 0
    %p75 = por %p73, %p74
    %p76 = scmp.ne.s32.totalorder %s65, %s68
    %p77 = scmp.eq.s32.totalorder %s13, 1
    %p78 = por %p76, %p77
    %p79 = scmp.ne.s32.totalorder %s68, %s69
    %p80 = scmp.eq.s32.totalorder %s13, 0
    %p81 = por %p79, %p80
    %p82 = scmp.ne.s32.totalorder %s68, %s69
    %p83 = scmp.eq.s32.totalorder %s14, 1
    %p84 = por %p82, %p83
    %p86 = scmp.ne.s32.totalorder %s69, %s85
    %p87 = scmp.eq.s32.totalorder %s14, 0
    %p88 = por %p86, %p87
    %p89 = scmp.le.s32.totalorder 1, %s8
    %p90 = scmp.lt.s32.totalorder %s8, 3
    %p91 = pnand %p89, %p90
    %p92 = pneg %p91
    // Predicated region
    $region9: #{_lambda_.3} parent=5 // pred_check
      _
    $region10: #{_lambda_.3} parent=5 // pred_check_branch
      %94 = sbr.rel (%p91) target = $region12
    $region11: #{_lambda_.3} parent=5 // pred_region
      %s95 = ssub.s32 %s8, 1
      // Predicated region
      $region13: #{_lambda_.3} parent=11 // pred_check
        %p96 = pneg %p55
      $region14: #{_lambda_.3} parent=11 // pred_check_branch
        %98 = sbr.rel (%p96) target = $region16
      $region15: #{_lambda_.3} parent=11 // pred_region
        _
      $region16: #{_lambda_.3} parent=11 // pred_fallthru
        _
    $region12: #{_lambda_.3} parent=5 // pred_fallthru
      _
    %p99 = scmp.lt.s32.totalorder %s8, 2
    // Predicated region
    $region17: #{_lambda_.3} parent=5 // pred_check
      %p100 = pneg %p99
    $region18: #{_lambda_.3} parent=5 // pred_check_branch
      %102 = sbr.rel (%p100) target = $region20
    $region19: #{_lambda_.3} parent=5 // pred_region
      // Predicated region
      $region21: #{_lambda_.3} parent=19 // pred_check
        %p103 = pneg %p28
      $region22: #{_lambda_.3} parent=19 // pred_check_branch
        %105 = sbr.rel (%p103) target = $region24
      $region23: #{_lambda_.3} parent=19 // pred_region
        %p106 = scmp.lt.s32.totalorder %s8, 1
        %s107 = scalar_select %p106, %s8, 1
        %s108 = smul.addr %s107, 16
        %s109 = scalar_lea.vmem %s0, %s108
      $region24: #{_lambda_.3} parent=19 // pred_fallthru
        _
    $region20: #{_lambda_.3} parent=5 // pred_fallthru
      _
    %p110 = scmp.le.s32.totalorder 1, %s8
    %p111 = scmp.lt.s32.totalorder %s8, 3
    %p112 = pnand %p110, %p111
    %p113 = pneg %p112
    // Predicated region
    $region25: #{_lambda_.3} parent=5 // pred_check
      _
    $region26: #{_lambda_.3} parent=5 // pred_check_branch
      %115 = sbr.rel (%p112) target = $region28
    $region27: #{_lambda_.3} parent=5 // pred_region
      %s116 = ssub.s32 %s8, 1
      %p117 = scmp.lt.s32.totalorder %s13, 1
      %s118 = scalar_select %p117, %s13, 1
      %s119 = smul.addr %s118, 16
      %s120 = scalar_lea.vmem %s0, %s119
      %p121 = pneg %p34
      %p122 = pneg %p31
      %p123 = pneg %p55
      %p124 = pneg %p52
      %p125 = pneg %p81
      %p126 = pneg %p78
      %p127 = scmp.lt.s32.totalorder %s13, 1
      %s128 = scalar_select %p127, %s13, 1
      %s129 = smul.addr %s128, 8
      %s130 = scalar_lea.vmem %s2, %s129
      %p131 = scmp.lt.s32.totalorder %s13, 1
      %s132 = scalar_select %p131, %s13, 1
      %s133 = smul.addr %s132, 16
      %s134 = scalar_lea.vmem %s0, %s133
      %p135 = scmp.lt.s32.totalorder %s13, 1
      %s136 = scalar_select %p135, %s13, 1
      %s137 = smul.addr %s136, 8
      %s138 = scalar_lea.vmem %s2, %s137
      %vm140 = vcmask 1041408
      %vm141 = vsmask.f32 1280
      %vm142 = vmand %vm140, %vm141
      %v143 = vld [vmem:[#allocation2] sm:$0x3]
      %v144 = vsel %vm142, 0, %v143
      %145 = vst [vmem:[#allocation2] sm:$0x3] %v144
      %s146 = scalar_lea.vmem [#allocation2], 34
      %v147 = vld [vmem:[%s146] sm:$0x3]
      %v148 = vsel %vm142, 0, %v147
      %149 = vst [vmem:[%s146] sm:$0x3] %v148
      %s150 = scalar_lea.vmem [#allocation2], 2
      %vm151 = vcmask 1040384
      %vm152 = vsmask.f32 256
      %vm153 = vmand %vm151, %vm152
      %v154 = vld [vmem:[%s150] sm:$0x1]
      %v155 = vsel %vm153, 0, %v154
      %156 = vst [vmem:[%s150] sm:$0x1] %v155
      %v157 = vld [vmem:[%s150 + $0x2] sm:$0x1]
      %v158 = vsel %vm153, 0, %v157
      %159 = vst [vmem:[%s150 + $0x2] sm:$0x1] %v158
      %v160 = vld [vmem:[%s150 + $0x4] sm:$0x1]
      %v161 = vsel %vm153, 0, %v160
      %162 = vst [vmem:[%s150 + $0x4] sm:$0x1] %v161
      %v163 = vld [vmem:[%s150 + $0x6] sm:$0x1]
      %v164 = vsel %vm153, 0, %v163
      %165 = vst [vmem:[%s150 + $0x6] sm:$0x1] %v164
      %v166 = vld [vmem:[%s150 + $0x8] sm:$0x1]
      %v167 = vsel %vm153, 0, %v166
      %168 = vst [vmem:[%s150 + $0x8] sm:$0x1] %v167
      %v169 = vld [vmem:[%s150 + $0xa] sm:$0x1]
      %v170 = vsel %vm153, 0, %v169
      %171 = vst [vmem:[%s150 + $0xa] sm:$0x1] %v170
      %v172 = vld [vmem:[%s150 + $0xc] sm:$0x1]
      %v173 = vsel %vm153, 0, %v172
      %174 = vst [vmem:[%s150 + $0xc] sm:$0x1] %v173
      %v175 = vld [vmem:[%s150 + $0xe] sm:$0x1]
      %v176 = vsel %vm153, 0, %v175
      %177 = vst [vmem:[%s150 + $0xe] sm:$0x1] %v176
      %v178 = vld [vmem:[%s150 + $0x10] sm:$0x1]
      %v179 = vsel %vm153, 0, %v178
      %180 = vst [vmem:[%s150 + $0x10] sm:$0x1] %v179
      %v181 = vld [vmem:[%s150 + $0x12] sm:$0x1]
      %v182 = vsel %vm153, 0, %v181
      %183 = vst [vmem:[%s150 + $0x12] sm:$0x1] %v182
      %v184 = vld [vmem:[%s150 + $0x14] sm:$0x1]
      %v185 = vsel %vm153, 0, %v184
      %186 = vst [vmem:[%s150 + $0x14] sm:$0x1] %v185
      %v187 = vld [vmem:[%s150 + $0x16] sm:$0x1]
      %v188 = vsel %vm153, 0, %v187
      %189 = vst [vmem:[%s150 + $0x16] sm:$0x1] %v188
      %v190 = vld [vmem:[%s150 + $0x18] sm:$0x1]
      %v191 = vsel %vm153, 0, %v190
      %192 = vst [vmem:[%s150 + $0x18] sm:$0x1] %v191
      %v193 = vld [vmem:[%s150 + $0x1a] sm:$0x1]
      %v194 = vsel %vm153, 0, %v193
      %195 = vst [vmem:[%s150 + $0x1a] sm:$0x1] %v194
      %v196 = vld [vmem:[%s150 + $0x1c] sm:$0x1]
      %v197 = vsel %vm153, 0, %v196
      %198 = vst [vmem:[%s150 + $0x1c] sm:$0x1] %v197
      %v199 = vld [vmem:[%s150 + $0x1e] sm:$0x1]
      %v200 = vsel %vm153, 0, %v199
      %201 = vst [vmem:[%s150 + $0x1e] sm:$0x1] %v200
      %vm202 = vcmask 1041409
      %vm203 = vmand %vm202, %vm141
      %v204 = vld [vmem:[%s150] sm:$0x2]
      %v205 = vsel %vm203, 0, %v204
      %206 = vst [vmem:[%s150] sm:$0x2] %v205
      %v207 = vld [vmem:[%s150 + $0x2] sm:$0x2]
      %v208 = vsel %vm203, 0, %v207
      %209 = vst [vmem:[%s150 + $0x2] sm:$0x2] %v208
      %v210 = vld [vmem:[%s150 + $0x4] sm:$0x2]
      %v211 = vsel %vm203, 0, %v210
      %212 = vst [vmem:[%s150 + $0x4] sm:$0x2] %v211
      %v213 = vld [vmem:[%s150 + $0x6] sm:$0x2]
      %v214 = vsel %vm203, 0, %v213
      %215 = vst [vmem:[%s150 + $0x6] sm:$0x2] %v214
      %v216 = vld [vmem:[%s150 + $0x8] sm:$0x2]
      %v217 = vsel %vm203, 0, %v216
      %218 = vst [vmem:[%s150 + $0x8] sm:$0x2] %v217
      %v219 = vld [vmem:[%s150 + $0xa] sm:$0x2]
      %v220 = vsel %vm203, 0, %v219
      %221 = vst [vmem:[%s150 + $0xa] sm:$0x2] %v220
      %v222 = vld [vmem:[%s150 + $0xc] sm:$0x2]
      %v223 = vsel %vm203, 0, %v222
      %224 = vst [vmem:[%s150 + $0xc] sm:$0x2] %v223
      %v225 = vld [vmem:[%s150 + $0xe] sm:$0x2]
      %v226 = vsel %vm203, 0, %v225
      %227 = vst [vmem:[%s150 + $0xe] sm:$0x2] %v226
      %v228 = vld [vmem:[%s150 + $0x10] sm:$0x2]
      %v229 = vsel %vm203, 0, %v228
      %230 = vst [vmem:[%s150 + $0x10] sm:$0x2] %v229
      %v231 = vld [vmem:[%s150 + $0x12] sm:$0x2]
      %v232 = vsel %vm203, 0, %v231
      %233 = vst [vmem:[%s150 + $0x12] sm:$0x2] %v232
      %v234 = vld [vmem:[%s150 + $0x14] sm:$0x2]
      %v235 = vsel %vm203, 0, %v234
      %236 = vst [vmem:[%s150 + $0x14] sm:$0x2] %v235
      %v237 = vld [vmem:[%s150 + $0x16] sm:$0x2]
      %v238 = vsel %vm203, 0, %v237
      %239 = vst [vmem:[%s150 + $0x16] sm:$0x2] %v238
      %v240 = vld [vmem:[%s150 + $0x18] sm:$0x2]
      %v241 = vsel %vm203, 0, %v240
      %242 = vst [vmem:[%s150 + $0x18] sm:$0x2] %v241
      %v243 = vld [vmem:[%s150 + $0x1a] sm:$0x2]
      %v244 = vsel %vm203, 0, %v243
      %245 = vst [vmem:[%s150 + $0x1a] sm:$0x2] %v244
      %v246 = vld [vmem:[%s150 + $0x1c] sm:$0x2]
      %v247 = vsel %vm203, 0, %v246
      %248 = vst [vmem:[%s150 + $0x1c] sm:$0x2] %v247
      %v249 = vld [vmem:[%s150 + $0x1e] sm:$0x2]
      %v250 = vsel %vm203, 0, %v249
      %251 = vst [vmem:[%s150 + $0x1e] sm:$0x2] %v250
      %v252 = vld [vmem:[%s134] sm:$0x1]
      %v253 = vld [vmem:[%s134 + $0x1] sm:$0x1]
      %v254 = vld [vmem:[%s134 + $0x2] sm:$0x1]
      %v255 = vld [vmem:[%s134 + $0x3] sm:$0x1]
      %v256 = vld [vmem:[%s134 + $0x4] sm:$0x1]
      %v257 = vld [vmem:[%s134 + $0x5] sm:$0x1]
      %v258 = vld [vmem:[%s134 + $0x6] sm:$0x1]
      %v259 = vld [vmem:[%s134 + $0x7] sm:$0x1]
      %v260 = vld [vmem:[%s134 + $0x8] sm:$0x1]
      %v261 = vld [vmem:[%s134 + $0x9] sm:$0x1]
      %v262 = vld [vmem:[%s134 + $0xa] sm:$0x1]
      %v263 = vld [vmem:[%s134 + $0xb] sm:$0x1]
      %v264 = vld [vmem:[%s134 + $0xc] sm:$0x1]
      %v265 = vld [vmem:[%s134 + $0xd] sm:$0x1]
      %v266 = vld [vmem:[%s134 + $0xe] sm:$0x1]
      %v267 = vld [vmem:[%s134 + $0xf] sm:$0x1]
      %v268 = vpack.c.bf16 %v252, %v252
      %v269 = vpack.c.bf16 %v253, %v253
      %v270 = vpack.c.bf16 %v254, %v254
      %v271 = vpack.c.bf16 %v255, %v255
      %v272 = vpack.c.bf16 %v256, %v256
      %v273 = vpack.c.bf16 %v257, %v257
      %v274 = vpack.c.bf16 %v258, %v258
      %v275 = vpack.c.bf16 %v259, %v259
      %v276 = vpack.c.bf16 %v260, %v260
      %v277 = vpack.c.bf16 %v261, %v261
      %v278 = vpack.c.bf16 %v262, %v262
      %v279 = vpack.c.bf16 %v263, %v263
      %v280 = vpack.c.bf16 %v264, %v264
      %v281 = vpack.c.bf16 %v265, %v265
      %v282 = vpack.c.bf16 %v266, %v266
      %v283 = vpack.c.bf16 %v267, %v267
      %v301 = vunpack.c.l.s4 1983009808
      %v302 = vunpack.c.0.s8 %v301
      %v303 = vlaneseq
      %v304 = vshrl.u32 %v303, 7
      %v305 = vsub.s32 %v302, %v304
      %v306 = vrot.slane %v268, %v305
      %v308 = vunpack.c.l.s4 1983009808
      %v309 = vunpack.c.0.s8 %v308
      %v310 = vlaneseq
      %v311 = vshrl.u32 %v310, 7
      %v312 = vsub.s32 %v309, %v311
      %v313 = vrot.slane %v269, %v312
      %v315 = vunpack.c.l.s4 1983009808
      %v316 = vunpack.c.0.s8 %v315
      %v317 = vlaneseq
      %v318 = vshrl.u32 %v317, 7
      %v319 = vsub.s32 %v316, %v318
      %v320 = vrot.slane %v270, %v319
      %v322 = vunpack.c.l.s4 1983009808
      %v323 = vunpack.c.0.s8 %v322
      %v324 = vlaneseq
      %v325 = vshrl.u32 %v324, 7
      %v326 = vsub.s32 %v323, %v325
      %v327 = vrot.slane %v271, %v326
      %v329 = vunpack.c.l.s4 1983009808
      %v330 = vunpack.c.0.s8 %v329
      %v331 = vlaneseq
      %v332 = vshrl.u32 %v331, 7
      %v333 = vsub.s32 %v330, %v332
      %v334 = vrot.slane %v272, %v333
      %v336 = vunpack.c.l.s4 1983009808
      %v337 = vunpack.c.0.s8 %v336
      %v338 = vlaneseq
      %v339 = vshrl.u32 %v338, 7
      %v340 = vsub.s32 %v337, %v339
      %v341 = vrot.slane %v273, %v340
      %v343 = vunpack.c.l.s4 1983009808
      %v344 = vunpack.c.0.s8 %v343
      %v345 = vlaneseq
      %v346 = vshrl.u32 %v345, 7
      %v347 = vsub.s32 %v344, %v346
      %v348 = vrot.slane %v274, %v347
      %v350 = vunpack.c.l.s4 1983009808
      %v351 = vunpack.c.0.s8 %v350
      %v352 = vlaneseq
      %v353 = vshrl.u32 %v352, 7
      %v354 = vsub.s32 %v351, %v353
      %v355 = vrot.slane %v275, %v354
      %v357 = vunpack.c.l.s4 1983009808
      %v358 = vunpack.c.0.s8 %v357
      %v359 = vlaneseq
      %v360 = vshrl.u32 %v359, 7
      %v361 = vsub.s32 %v358, %v360
      %v362 = vrot.slane %v276, %v361
      %v364 = vunpack.c.l.s4 1983009808
      %v365 = vunpack.c.0.s8 %v364
      %v366 = vlaneseq
      %v367 = vshrl.u32 %v366, 7
      %v368 = vsub.s32 %v365, %v367
      %v369 = vrot.slane %v277, %v368
      %v371 = vunpack.c.l.s4 1983009808
      %v372 = vunpack.c.0.s8 %v371
      %v373 = vlaneseq
      %v374 = vshrl.u32 %v373, 7
      %v375 = vsub.s32 %v372, %v374
      %v376 = vrot.slane %v278, %v375
      %v378 = vunpack.c.l.s4 1983009808
      %v379 = vunpack.c.0.s8 %v378
      %v380 = vlaneseq
      %v381 = vshrl.u32 %v380, 7
      %v382 = vsub.s32 %v379, %v381
      %v383 = vrot.slane %v279, %v382
      %v385 = vunpack.c.l.s4 1983009808
      %v386 = vunpack.c.0.s8 %v385
      %v387 = vlaneseq
      %v388 = vshrl.u32 %v387, 7
      %v389 = vsub.s32 %v386, %v388
      %v390 = vrot.slane %v280, %v389
      %v392 = vunpack.c.l.s4 1983009808
      %v393 = vunpack.c.0.s8 %v392
      %v394 = vlaneseq
      %v395 = vshrl.u32 %v394, 7
      %v396 = vsub.s32 %v393, %v395
      %v397 = vrot.slane %v281, %v396
      %v399 = vunpack.c.l.s4 1983009808
      %v400 = vunpack.c.0.s8 %v399
      %v401 = vlaneseq
      %v402 = vshrl.u32 %v401, 7
      %v403 = vsub.s32 %v400, %v402
      %v404 = vrot.slane %v282, %v403
      %v406 = vunpack.c.l.s4 1983009808
      %v407 = vunpack.c.0.s8 %v406
      %v408 = vlaneseq
      %v409 = vshrl.u32 %v408, 7
      %v410 = vsub.s32 %v407, %v409
      %v411 = vrot.slane %v283, %v410
      %v413 = vshll.u32 %v306, 16
      %v416 = vshll.u32 %v313, 16
      %v419 = vshll.u32 %v320, 16
      %v422 = vshll.u32 %v327, 16
      %v425 = vshll.u32 %v334, 16
      %v428 = vshll.u32 %v341, 16
      %v431 = vshll.u32 %v348, 16
      %v434 = vshll.u32 %v355, 16
      %v437 = vshll.u32 %v362, 16
      %v440 = vshll.u32 %v369, 16
      %v443 = vshll.u32 %v376, 16
      %v446 = vshll.u32 %v383, 16
      %v449 = vshll.u32 %v390, 16
      %v452 = vshll.u32 %v397, 16
      %v455 = vshll.u32 %v404, 16
      %v458 = vshll.u32 %v411, 16
      %vm476 = vsmask.f32 7938
      %vm477 = vmand %vm151, %vm476
      %v478 = vld [vmem:[%s150] sm:$0x1]
      %v479 = vsel %vm477, %v413, %v478
      %480 = vst [vmem:[%s150] sm:$0x1] %v479
      %v481 = vld [vmem:[%s150 + $0x2] sm:$0x1]
      %v482 = vsel %vm477, %v416, %v481
      %483 = vst [vmem:[%s150 + $0x2] sm:$0x1] %v482
      %v484 = vld [vmem:[%s150 + $0x4] sm:$0x1]
      %v485 = vsel %vm477, %v419, %v484
      %486 = vst [vmem:[%s150 + $0x4] sm:$0x1] %v485
      %v487 = vld [vmem:[%s150 + $0x6] sm:$0x1]
      %v488 = vsel %vm477, %v422, %v487
      %489 = vst [vmem:[%s150 + $0x6] sm:$0x1] %v488
      %v490 = vld [vmem:[%s150 + $0x8] sm:$0x1]
      %v491 = vsel %vm477, %v425, %v490
      %492 = vst [vmem:[%s150 + $0x8] sm:$0x1] %v491
      %v493 = vld [vmem:[%s150 + $0xa] sm:$0x1]
      %v494 = vsel %vm477, %v428, %v493
      %495 = vst [vmem:[%s150 + $0xa] sm:$0x1] %v494
      %v496 = vld [vmem:[%s150 + $0xc] sm:$0x1]
      %v497 = vsel %vm477, %v431, %v496
      %498 = vst [vmem:[%s150 + $0xc] sm:$0x1] %v497
      %v499 = vld [vmem:[%s150 + $0xe] sm:$0x1]
      %v500 = vsel %vm477, %v434, %v499
      %501 = vst [vmem:[%s150 + $0xe] sm:$0x1] %v500
      %v502 = vld [vmem:[%s150 + $0x10] sm:$0x1]
      %v503 = vsel %vm477, %v437, %v502
      %504 = vst [vmem:[%s150 + $0x10] sm:$0x1] %v503
      %v505 = vld [vmem:[%s150 + $0x12] sm:$0x1]
      %v506 = vsel %vm477, %v440, %v505
      %507 = vst [vmem:[%s150 + $0x12] sm:$0x1] %v506
      %v508 = vld [vmem:[%s150 + $0x14] sm:$0x1]
      %v509 = vsel %vm477, %v443, %v508
      %510 = vst [vmem:[%s150 + $0x14] sm:$0x1] %v509
      %v511 = vld [vmem:[%s150 + $0x16] sm:$0x1]
      %v512 = vsel %vm477, %v446, %v511
      %513 = vst [vmem:[%s150 + $0x16] sm:$0x1] %v512
      %v514 = vld [vmem:[%s150 + $0x18] sm:$0x1]
      %v515 = vsel %vm477, %v449, %v514
      %516 = vst [vmem:[%s150 + $0x18] sm:$0x1] %v515
      %v517 = vld [vmem:[%s150 + $0x1a] sm:$0x1]
      %v518 = vsel %vm477, %v452, %v517
      %519 = vst [vmem:[%s150 + $0x1a] sm:$0x1] %v518
      %v520 = vld [vmem:[%s150 + $0x1c] sm:$0x1]
      %v521 = vsel %vm477, %v455, %v520
      %522 = vst [vmem:[%s150 + $0x1c] sm:$0x1] %v521
      %v523 = vld [vmem:[%s150 + $0x1e] sm:$0x1]
      %v524 = vsel %vm477, %v458, %v523
      %525 = vst [vmem:[%s150 + $0x1e] sm:$0x1] %v524
      %v526 = vld [vmem:[#allocation2] sm:$0x3]
      %v527 = vld [vmem:[#allocation2 + $0x2] sm:$0x3]
      %v528 = vld [vmem:[#allocation2 + $0x4] sm:$0x3]
      %v529 = vld [vmem:[#allocation2 + $0x6] sm:$0x3]
      %v530 = vld [vmem:[#allocation2 + $0x8] sm:$0x3]
      %v531 = vld [vmem:[#allocation2 + $0xa] sm:$0x3]
      %v532 = vld [vmem:[#allocation2 + $0xc] sm:$0x3]
      %v533 = vld [vmem:[#allocation2 + $0xe] sm:$0x3]
      %v534 = vld [vmem:[#allocation2 + $0x10] sm:$0x3]
      %v535 = vld [vmem:[#allocation2 + $0x12] sm:$0x3]
      %v536 = vld [vmem:[#allocation2 + $0x14] sm:$0x3]
      %v537 = vld [vmem:[#allocation2 + $0x16] sm:$0x3]
      %v538 = vld [vmem:[#allocation2 + $0x18] sm:$0x3]
      %v539 = vld [vmem:[#allocation2 + $0x1a] sm:$0x3]
      %v540 = vld [vmem:[#allocation2 + $0x1c] sm:$0x3]
      %v541 = vld [vmem:[#allocation2 + $0x1e] sm:$0x3]
      %v542 = vld [vmem:[#allocation2 + $0x20] sm:$0x3]
      %v543 = vld [vmem:[#allocation2 + $0x22] sm:$0x3]
      %v561 = vunpack.c.l.s4 1983009808
      %v562 = vunpack.c.0.s8 %v561
      %v563 = vlaneseq
      %v564 = vshrl.u32 %v563, 7
      %v565 = vsub.s32 %v562, %v564
      %v566 = vrot.slane %v526, %v565
      %v568 = vunpack.c.l.s4 1983009808
      %v569 = vunpack.c.0.s8 %v568
      %v570 = vlaneseq
      %v571 = vshrl.u32 %v570, 7
      %v572 = vsub.s32 %v569, %v571
      %v573 = vrot.slane %v527, %v572
      %v575 = vunpack.c.l.s4 1983009808
      %v576 = vunpack.c.0.s8 %v575
      %v577 = vlaneseq
      %v578 = vshrl.u32 %v577, 7
      %v579 = vsub.s32 %v576, %v578
      %v580 = vrot.slane %v528, %v579
      %v582 = vunpack.c.l.s4 1983009808
      %v583 = vunpack.c.0.s8 %v582
      %v584 = vlaneseq
      %v585 = vshrl.u32 %v584, 7
      %v586 = vsub.s32 %v583, %v585
      %v587 = vrot.slane %v529, %v586
      %v589 = vunpack.c.l.s4 1983009808
      %v590 = vunpack.c.0.s8 %v589
      %v591 = vlaneseq
      %v592 = vshrl.u32 %v591, 7
      %v593 = vsub.s32 %v590, %v592
      %v594 = vrot.slane %v530, %v593
      %v596 = vunpack.c.l.s4 1983009808
      %v597 = vunpack.c.0.s8 %v596
      %v598 = vlaneseq
      %v599 = vshrl.u32 %v598, 7
      %v600 = vsub.s32 %v597, %v599
      %v601 = vrot.slane %v531, %v600
      %v603 = vunpack.c.l.s4 1983009808
      %v604 = vunpack.c.0.s8 %v603
      %v605 = vlaneseq
      %v606 = vshrl.u32 %v605, 7
      %v607 = vsub.s32 %v604, %v606
      %v608 = vrot.slane %v532, %v607
      %v610 = vunpack.c.l.s4 1983009808
      %v611 = vunpack.c.0.s8 %v610
      %v612 = vlaneseq
      %v613 = vshrl.u32 %v612, 7
      %v614 = vsub.s32 %v611, %v613
      %v615 = vrot.slane %v533, %v614
      %v617 = vunpack.c.l.s4 1983009808
      %v618 = vunpack.c.0.s8 %v617
      %v619 = vlaneseq
      %v620 = vshrl.u32 %v619, 7
      %v621 = vsub.s32 %v618, %v620
      %v622 = vrot.slane %v534, %v621
      %v624 = vunpack.c.l.s4 1983009808
      %v625 = vunpack.c.0.s8 %v624
      %v626 = vlaneseq
      %v627 = vshrl.u32 %v626, 7
      %v628 = vsub.s32 %v625, %v627
      %v629 = vrot.slane %v535, %v628
      %v631 = vunpack.c.l.s4 1983009808
      %v632 = vunpack.c.0.s8 %v631
      %v633 = vlaneseq
      %v634 = vshrl.u32 %v633, 7
      %v635 = vsub.s32 %v632, %v634
      %v636 = vrot.slane %v536, %v635
      %v638 = vunpack.c.l.s4 1983009808
      %v639 = vunpack.c.0.s8 %v638
      %v640 = vlaneseq
      %v641 = vshrl.u32 %v640, 7
      %v642 = vsub.s32 %v639, %v641
      %v643 = vrot.slane %v537, %v642
      %v645 = vunpack.c.l.s4 1983009808
      %v646 = vunpack.c.0.s8 %v645
      %v647 = vlaneseq
      %v648 = vshrl.u32 %v647, 7
      %v649 = vsub.s32 %v646, %v648
      %v650 = vrot.slane %v538, %v649
      %v652 = vunpack.c.l.s4 1983009808
      %v653 = vunpack.c.0.s8 %v652
      %v654 = vlaneseq
      %v655 = vshrl.u32 %v654, 7
      %v656 = vsub.s32 %v653, %v655
      %v657 = vrot.slane %v539, %v656
      %v659 = vunpack.c.l.s4 1983009808
      %v660 = vunpack.c.0.s8 %v659
      %v661 = vlaneseq
      %v662 = vshrl.u32 %v661, 7
      %v663 = vsub.s32 %v660, %v662
      %v664 = vrot.slane %v540, %v663
      %v666 = vunpack.c.l.s4 1983009808
      %v667 = vunpack.c.0.s8 %v666
      %v668 = vlaneseq
      %v669 = vshrl.u32 %v668, 7
      %v670 = vsub.s32 %v667, %v669
      %v671 = vrot.slane %v541, %v670
      %v672 = vunpack.c.l.b16 %v566
      %v673 = vunpack.c.l.b16 %v573
      %v674 = vunpack.c.l.b16 %v580
      %v675 = vunpack.c.l.b16 %v587
      %v676 = vunpack.c.l.b16 %v594
      %v677 = vunpack.c.l.b16 %v601
      %v678 = vunpack.c.l.b16 %v608
      %v679 = vunpack.c.l.b16 %v615
      %v680 = vunpack.c.l.b16 %v622
      %v681 = vunpack.c.l.b16 %v629
      %v682 = vunpack.c.l.b16 %v636
      %v683 = vunpack.c.l.b16 %v643
      %v684 = vunpack.c.l.b16 %v650
      %v685 = vunpack.c.l.b16 %v657
      %v686 = vunpack.c.l.b16 %v664
      %v687 = vunpack.c.l.b16 %v671
      %v688 = vrot.slane %v673, 7
      %vm689 = vcmask 1041409
      %v690 = vsel %vm689, %v688, %v672
      %v691 = vrot.slane %v674, 6
      %vm692 = vcmask 1042434
      %v693 = vsel %vm692, %v691, %v690
      %v694 = vrot.slane %v675, 5
      %vm695 = vcmask 1043459
      %v696 = vsel %vm695, %v694, %v693
      %v697 = vrot.slane %v676, 4
      %vm698 = vcmask 1044484
      %v699 = vsel %vm698, %v697, %v696
      %v700 = vrot.slane %v677, 3
      %vm701 = vcmask 1045509
      %v702 = vsel %vm701, %v700, %v699
      %v703 = vrot.slane %v678, 2
      %vm704 = vcmask 1046534
      %v705 = vsel %vm704, %v703, %v702
      %v706 = vrot.slane %v679, 1
      %vm707 = vcmask 1047559
      %v708 = vsel %vm707, %v706, %v705
      %v709 = vrot.slane %v681, 7
      %v710 = vsel %vm689, %v709, %v680
      %v711 = vrot.slane %v682, 6
      %v712 = vsel %vm692, %v711, %v710
      %v713 = vrot.slane %v683, 5
      %v714 = vsel %vm695, %v713, %v712
      %v715 = vrot.slane %v684, 4
      %v716 = vsel %vm698, %v715, %v714
      %v717 = vrot.slane %v685, 3
      %v718 = vsel %vm701, %v717, %v716
      %v719 = vrot.slane %v686, 2
      %v720 = vsel %vm704, %v719, %v718
      %v721 = vrot.slane %v687, 1
      %v722 = vsel %vm707, %v721, %v720
      %v723 = vpack.c.b16 %v722, %v708
      %724 = vrot.lane.b32.xlu0 %v723, 8
      %v725 = vpop.permute.xlu0 %724
      %v726 = vrot.slane %v672, 1
      %v727 = vsel %vm689, %v673, %v726
      %v728 = vrot.slane %v674, 7
      %v729 = vsel %vm692, %v728, %v727
      %v730 = vrot.slane %v675, 6
      %v731 = vsel %vm695, %v730, %v729
      %v732 = vrot.slane %v676, 5
      %v733 = vsel %vm698, %v732, %v731
      %v734 = vrot.slane %v677, 4
      %v735 = vsel %vm701, %v734, %v733
      %v736 = vrot.slane %v678, 3
      %v737 = vsel %vm704, %v736, %v735
      %v738 = vrot.slane %v679, 2
      %v739 = vsel %vm707, %v738, %v737
      %v740 = vrot.slane %v680, 1
      %v741 = vsel %vm689, %v681, %v740
      %v742 = vrot.slane %v682, 7
      %v743 = vsel %vm692, %v742, %v741
      %v744 = vrot.slane %v683, 6
      %v745 = vsel %vm695, %v744, %v743
      %v746 = vrot.slane %v684, 5
      %v747 = vsel %vm698, %v746, %v745
      %v748 = vrot.slane %v685, 4
      %v749 = vsel %vm701, %v748, %v747
      %v750 = vrot.slane %v686, 3
      %v751 = vsel %vm704, %v750, %v749
      %v752 = vrot.slane %v687, 2
      %v753 = vsel %vm707, %v752, %v751
      %v754 = vpack.c.b16 %v753, %v739
      %755 = vrot.lane.b32.xlu0 %v754, 8
      %v756 = vpop.permute.xlu0 %755
      %v757 = vrot.slane %v672, 2
      %v758 = vrot.slane %v673, 1
      %v759 = vsel %vm689, %v758, %v757
      %v760 = vsel %vm692, %v674, %v759
      %v761 = vrot.slane %v675, 7
      %v762 = vsel %vm695, %v761, %v760
      %v763 = vrot.slane %v676, 6
      %v764 = vsel %vm698, %v763, %v762
      %v765 = vrot.slane %v677, 5
      %v766 = vsel %vm701, %v765, %v764
      %v767 = vrot.slane %v678, 4
      %v768 = vsel %vm704, %v767, %v766
      %v769 = vrot.slane %v679, 3
      %v770 = vsel %vm707, %v769, %v768
      %v771 = vrot.slane %v680, 2
      %v772 = vrot.slane %v681, 1
      %v773 = vsel %vm689, %v772, %v771
      %v774 = vsel %vm692, %v682, %v773
      %v775 = vrot.slane %v683, 7
      %v776 = vsel %vm695, %v775, %v774
      %v777 = vrot.slane %v684, 6
      %v778 = vsel %vm698, %v777, %v776
      %v779 = vrot.slane %v685, 5
      %v780 = vsel %vm701, %v779, %v778
      %v781 = vrot.slane %v686, 4
      %v782 = vsel %vm704, %v781, %v780
      %v783 = vrot.slane %v687, 3
      %v784 = vsel %vm707, %v783, %v782
      %v785 = vpack.c.b16 %v784, %v770
      %786 = vrot.lane.b32.xlu0 %v785, 8
      %v787 = vpop.permute.xlu0 %786
      %v790 = vunpack.c.l.s4 1983009808
      %v791 = vunpack.c.0.s8 %v790
      %v792 = vlaneseq
      %v793 = vshrl.u32 %v792, 7
      %v794 = vsub.s32 %v791, %v793
      %v795 = vrot.slane %v542, %v794
      %v796 = vunpack.c.l.b16 %v795
      %v797 = vsel %vm689, %v728, %v673
      %v798 = vsel %vm692, %v730, %v797
      %v799 = vsel %vm695, %v732, %v798
      %v800 = vsel %vm698, %v734, %v799
      %v801 = vsel %vm701, %v736, %v800
      %v802 = vsel %vm704, %v738, %v801
      %v803 = vsel %vm707, %v740, %v802
      %v804 = vsel %vm689, %v742, %v681
      %v805 = vsel %vm692, %v744, %v804
      %v806 = vsel %vm695, %v746, %v805
      %v807 = vsel %vm698, %v748, %v806
      %v808 = vsel %vm701, %v750, %v807
      %v809 = vsel %vm704, %v752, %v808
      %v810 = vrot.slane %v796, 1
      %v811 = vsel %vm707, %v810, %v809
      %v812 = vpack.c.b16 %v811, %v803
      %813 = vrot.lane.b32.xlu0 %v812, 24
      %v814 = vpop.permute.xlu0 %813
      %v815 = vsel %vm689, %v674, %v758
      %v816 = vsel %vm692, %v761, %v815
      %v817 = vsel %vm695, %v763, %v816
      %v818 = vsel %vm698, %v765, %v817
      %v819 = vsel %vm701, %v767, %v818
      %v820 = vsel %vm704, %v769, %v819
      %v821 = vsel %vm707, %v771, %v820
      %v822 = vsel %vm689, %v682, %v772
      %v823 = vsel %vm692, %v775, %v822
      %v824 = vsel %vm695, %v777, %v823
      %v825 = vsel %vm698, %v779, %v824
      %v826 = vsel %vm701, %v781, %v825
      %v827 = vsel %vm704, %v783, %v826
      %v828 = vrot.slane %v796, 2
      %v829 = vsel %vm707, %v828, %v827
      %v830 = vpack.c.b16 %v829, %v821
      %831 = vrot.lane.b32.xlu0 %v830, 24
      %v832 = vpop.permute.xlu0 %831
      %v833 = vrot.slane %v673, 2
      %v834 = vrot.slane %v674, 1
      %v835 = vsel %vm689, %v834, %v833
      %v836 = vsel %vm692, %v675, %v835
      %v837 = vrot.slane %v676, 7
      %v838 = vsel %vm695, %v837, %v836
      %v839 = vrot.slane %v677, 6
      %v840 = vsel %vm698, %v839, %v838
      %v841 = vrot.slane %v678, 5
      %v842 = vsel %vm701, %v841, %v840
      %v843 = vrot.slane %v679, 4
      %v844 = vsel %vm704, %v843, %v842
      %v845 = vrot.slane %v680, 3
      %v846 = vsel %vm707, %v845, %v844
      %v847 = vrot.slane %v681, 2
      %v848 = vrot.slane %v682, 1
      %v849 = vsel %vm689, %v848, %v847
      %v850 = vsel %vm692, %v683, %v849
      %v851 = vrot.slane %v684, 7
      %v852 = vsel %vm695, %v851, %v850
      %v853 = vrot.slane %v685, 6
      %v854 = vsel %vm698, %v853, %v852
      %v855 = vrot.slane %v686, 5
      %v856 = vsel %vm701, %v855, %v854
      %v857 = vrot.slane %v687, 4
      %v858 = vsel %vm704, %v857, %v856
      %v859 = vrot.slane %v796, 3
      %v860 = vsel %vm707, %v859, %v858
      %v861 = vpack.c.b16 %v860, %v846
      %862 = vrot.lane.b32.xlu0 %v861, 24
      %v863 = vpop.permute.xlu0 %862
      %v866 = vunpack.c.l.s4 1983009808
      %v867 = vunpack.c.0.s8 %v866
      %v868 = vlaneseq
      %v869 = vshrl.u32 %v868, 7
      %v870 = vsub.s32 %v867, %v869
      %v871 = vrot.slane %v543, %v870
      %v872 = vunpack.c.l.b16 %v871
      %v873 = vsel %vm689, %v761, %v674
      %v874 = vsel %vm692, %v763, %v873
      %v875 = vsel %vm695, %v765, %v874
      %v876 = vsel %vm698, %v767, %v875
      %v877 = vsel %vm701, %v769, %v876
      %v878 = vsel %vm704, %v771, %v877
      %v879 = vsel %vm707, %v772, %v878
      %v880 = vsel %vm689, %v775, %v682
      %v881 = vsel %vm692, %v777, %v880
      %v882 = vsel %vm695, %v779, %v881
      %v883 = vsel %vm698, %v781, %v882
      %v884 = vsel %vm701, %v783, %v883
      %v885 = vsel %vm704, %v828, %v884
      %v886 = vrot.slane %v872, 1
      %v887 = vsel %vm707, %v886, %v885
      %v888 = vpack.c.b16 %v887, %v879
      %889 = vrot.lane.b32.xlu0 %v888, 40
      %v890 = vpop.permute.xlu0 %889
      %v891 = vsel %vm689, %v675, %v834
      %v892 = vsel %vm692, %v837, %v891
      %v893 = vsel %vm695, %v839, %v892
      %v894 = vsel %vm698, %v841, %v893
      %v895 = vsel %vm701, %v843, %v894
      %v896 = vsel %vm704, %v845, %v895
      %v897 = vsel %vm707, %v847, %v896
      %v898 = vsel %vm689, %v683, %v848
      %v899 = vsel %vm692, %v851, %v898
      %v900 = vsel %vm695, %v853, %v899
      %v901 = vsel %vm698, %v855, %v900
      %v902 = vsel %vm701, %v857, %v901
      %v903 = vsel %vm704, %v859, %v902
      %v904 = vrot.slane %v872, 2
      %v905 = vsel %vm707, %v904, %v903
      %v906 = vpack.c.b16 %v905, %v897
      %907 = vrot.lane.b32.xlu0 %v906, 40
      %v908 = vpop.permute.xlu0 %907
      %v909 = vrot.slane %v674, 2
      %v910 = vrot.slane %v675, 1
      %v911 = vsel %vm689, %v910, %v909
      %v912 = vsel %vm692, %v676, %v911
      %v913 = vrot.slane %v677, 7
      %v914 = vsel %vm695, %v913, %v912
      %v915 = vrot.slane %v678, 6
      %v916 = vsel %vm698, %v915, %v914
      %v917 = vrot.slane %v679, 5
      %v918 = vsel %vm701, %v917, %v916
      %v919 = vrot.slane %v680, 4
      %v920 = vsel %vm704, %v919, %v918
      %v921 = vrot.slane %v681, 3
      %v922 = vsel %vm707, %v921, %v920
      %v923 = vrot.slane %v682, 2
      %v924 = vrot.slane %v683, 1
      %v925 = vsel %vm689, %v924, %v923
      %v926 = vsel %vm692, %v684, %v925
      %v927 = vrot.slane %v685, 7
      %v928 = vsel %vm695, %v927, %v926
      %v929 = vrot.slane %v686, 6
      %v930 = vsel %vm698, %v929, %v928
      %v931 = vrot.slane %v687, 5
      %v932 = vsel %vm701, %v931, %v930
      %v933 = vrot.slane %v796, 4
      %v934 = vsel %vm704, %v933, %v932
      %v935 = vrot.slane %v872, 3
      %v936 = vsel %vm707, %v935, %v934
      %v937 = vpack.c.b16 %v936, %v922
      %938 = vrot.lane.b32.xlu0 %v937, 40
      %v939 = vpop.permute.xlu0 %938
      %vm940 = vcmask 64512
      %v943 = vsel %vm940, %v725, %v756
      %v946 = vsel %vm940, %v756, %v787
      %vm947 = vcmask 130048
      %v949 = vsel %vm947, %v946, %v814
      %vm950 = vcmask 195584
      %v952 = vsel %vm950, %v949, %v832
      %v955 = vsel %vm950, %v832, %v863
      %vm956 = vcmask 261120
      %v958 = vsel %vm956, %v955, %v890
      %vm959 = vcmask 326656
      %v961 = vsel %vm959, %v958, %v908
      %v964 = vsel %vm959, %v908, %v939
      %v965 = vld [vmem:[%s1] sm:$0xff]
      %v966 = vld [vmem:[%s1 + $0x8] sm:$0xff]
      %v967 = vld [vmem:[%s1 + $0x10] sm:$0xff]
      %v968 = vld [vmem:[%s1 + $0x18] sm:$0xff]
      %v969 = vld [vmem:[%s1 + $0x20] sm:$0xff]
      %v970 = vld [vmem:[%s1 + $0x28] sm:$0xff]
      %v971 = vld [vmem:[%s1 + $0x30] sm:$0xff]
      %v972 = vld [vmem:[%s1 + $0x38] sm:$0xff]
      %v973 = vld [vmem:[%s1 + $0x40] sm:$0xff]
      %v974 = vld [vmem:[%s1 + $0x48] sm:$0xff]
      %v975 = vld [vmem:[%s1 + $0x50] sm:$0xff]
      %v976 = vld [vmem:[%s1 + $0x58] sm:$0xff]
      %v977 = vld [vmem:[%s1 + $0x60] sm:$0xff]
      %v978 = vld [vmem:[%s1 + $0x68] sm:$0xff]
      %v979 = vld [vmem:[%s1 + $0x70] sm:$0xff]
      %v980 = vld [vmem:[%s1 + $0x78] sm:$0xff]
      %v981 = vld [vmem:[%s1 + $0x80] sm:$0xff]
      %v982 = vld [vmem:[%s1 + $0x88] sm:$0xff]
      %v983 = vld [vmem:[%s1 + $0x90] sm:$0xff]
      %v984 = vld [vmem:[%s1 + $0x98] sm:$0xff]
      %v985 = vld [vmem:[%s1 + $0xa0] sm:$0xff]
      %v986 = vld [vmem:[%s1 + $0xa8] sm:$0xff]
      %v987 = vld [vmem:[%s1 + $0xb0] sm:$0xff]
      %v988 = vld [vmem:[%s1 + $0xb8] sm:$0xff]
      %v989 = vld [vmem:[%s1 + $0xc0] sm:$0xff]
      %v990 = vld [vmem:[%s1 + $0xc8] sm:$0xff]
      %v991 = vld [vmem:[%s1 + $0xd0] sm:$0xff]
      %v992 = vld [vmem:[%s1 + $0xd8] sm:$0xff]
      %v993 = vld [vmem:[%s1 + $0xe0] sm:$0xff]
      %v994 = vld [vmem:[%s1 + $0xe8] sm:$0xff]
      %v995 = vld [vmem:[%s1 + $0xf0] sm:$0xff]
      %v996 = vld [vmem:[%s1 + $0xf8] sm:$0xff]
      %v997 = vld [vmem:[%s1 + $0x100] sm:$0xff]
      %v998 = vld [vmem:[%s1 + $0x108] sm:$0xff]
      %v999 = vld [vmem:[%s1 + $0x110] sm:$0xff]
      %v1000 = vld [vmem:[%s1 + $0x118] sm:$0xff]
      %v1001 = vld [vmem:[%s1 + $0x120] sm:$0xff]
      %v1002 = vld [vmem:[%s1 + $0x128] sm:$0xff]
      %v1003 = vld [vmem:[%s1 + $0x130] sm:$0xff]
      %v1004 = vld [vmem:[%s1 + $0x138] sm:$0xff]
      %v1005 = vld [vmem:[%s1 + $0x140] sm:$0xff]
      %v1006 = vld [vmem:[%s1 + $0x148] sm:$0xff]
      %v1007 = vld [vmem:[%s1 + $0x150] sm:$0xff]
      %v1008 = vld [vmem:[%s1 + $0x158] sm:$0xff]
      %v1009 = vld [vmem:[%s1 + $0x160] sm:$0xff]
      %v1010 = vld [vmem:[%s1 + $0x168] sm:$0xff]
      %v1011 = vld [vmem:[%s1 + $0x170] sm:$0xff]
      %v1012 = vld [vmem:[%s1 + $0x178] sm:$0xff]
      %v1013 = vld [vmem:[%s1 + $0x180] sm:$0xff]
      %v1014 = vld [vmem:[%s1 + $0x188] sm:$0xff]
      %v1015 = vld [vmem:[%s1 + $0x190] sm:$0xff]
      %v1016 = vld [vmem:[%s1 + $0x198] sm:$0xff]
      %v1017 = vld [vmem:[%s1 + $0x1a0] sm:$0xff]
      %v1018 = vld [vmem:[%s1 + $0x1a8] sm:$0xff]
      %v1073 = vunpack.c.l.b16 %v965
      %v1074 = vunpack.c.h.b16 %v965
      %v1075 = vunpack.c.l.b16 %v966
      %v1076 = vunpack.c.h.b16 %v966
      %v1077 = vunpack.c.l.b16 %v967
      %v1078 = vunpack.c.h.b16 %v967
      %v1079 = vunpack.c.l.b16 %v968
      %v1080 = vunpack.c.h.b16 %v968
      %v1081 = vunpack.c.l.b16 %v969
      %v1082 = vunpack.c.h.b16 %v969
      %v1083 = vunpack.c.l.b16 %v970
      %v1084 = vunpack.c.h.b16 %v970
      %v1085 = vunpack.c.l.b16 %v971
      %v1086 = vunpack.c.h.b16 %v971
      %v1087 = vunpack.c.l.b16 %v972
      %v1088 = vunpack.c.h.b16 %v972
      %v1089 = vunpack.c.l.b16 %v973
      %v1090 = vunpack.c.h.b16 %v973
      %v1091 = vunpack.c.l.b16 %v974
      %v1092 = vunpack.c.h.b16 %v974
      %v1093 = vunpack.c.l.b16 %v975
      %v1094 = vunpack.c.h.b16 %v975
      %v1095 = vunpack.c.l.b16 %v976
      %v1096 = vunpack.c.h.b16 %v976
      %v1097 = vunpack.c.l.b16 %v977
      %v1098 = vunpack.c.h.b16 %v977
      %v1099 = vunpack.c.l.b16 %v978
      %v1100 = vunpack.c.h.b16 %v978
      %v1101 = vunpack.c.l.b16 %v979
      %v1102 = vunpack.c.h.b16 %v979
      %v1103 = vunpack.c.l.b16 %v980
      %v1104 = vunpack.c.h.b16 %v980
      %v1105 = vunpack.c.l.b16 %v981
      %v1106 = vunpack.c.h.b16 %v981
      %v1107 = vunpack.c.l.b16 %v982
      %v1108 = vunpack.c.h.b16 %v982
      %v1109 = vunpack.c.l.b16 %v983
      %v1110 = vunpack.c.h.b16 %v983
      %v1111 = vunpack.c.l.b16 %v984
      %v1112 = vunpack.c.h.b16 %v984
      %v1113 = vunpack.c.l.b16 %v985
      %v1114 = vunpack.c.h.b16 %v985
      %v1115 = vunpack.c.l.b16 %v986
      %v1116 = vunpack.c.h.b16 %v986
      %v1117 = vunpack.c.l.b16 %v987
      %v1118 = vunpack.c.h.b16 %v987
      %v1119 = vunpack.c.l.b16 %v988
      %v1120 = vunpack.c.h.b16 %v988
      %v1121 = vunpack.c.l.b16 %v989
      %v1122 = vunpack.c.h.b16 %v989
      %v1123 = vunpack.c.l.b16 %v990
      %v1124 = vunpack.c.h.b16 %v990
      %v1125 = vunpack.c.l.b16 %v991
      %v1126 = vunpack.c.h.b16 %v991
      %v1127 = vunpack.c.l.b16 %v992
      %v1128 = vunpack.c.h.b16 %v992
      %v1129 = vunpack.c.l.b16 %v993
      %v1130 = vunpack.c.h.b16 %v993
      %v1131 = vunpack.c.l.b16 %v994
      %v1132 = vunpack.c.h.b16 %v994
      %v1133 = vunpack.c.l.b16 %v995
      %v1134 = vunpack.c.h.b16 %v995
      %v1135 = vunpack.c.l.b16 %v996
      %v1136 = vunpack.c.h.b16 %v996
      %v1137 = vunpack.c.l.b16 %v997
      %v1138 = vunpack.c.h.b16 %v997
      %v1139 = vunpack.c.l.b16 %v998
      %v1140 = vunpack.c.h.b16 %v998
      %v1141 = vunpack.c.l.b16 %v999
      %v1142 = vunpack.c.h.b16 %v999
      %v1143 = vunpack.c.l.b16 %v1000
      %v1144 = vunpack.c.h.b16 %v1000
      %v1145 = vunpack.c.l.b16 %v1001
      %v1146 = vunpack.c.h.b16 %v1001
      %v1147 = vunpack.c.l.b16 %v1002
      %v1148 = vunpack.c.h.b16 %v1002
      %v1149 = vunpack.c.l.b16 %v1003
      %v1150 = vunpack.c.h.b16 %v1003
      %v1151 = vunpack.c.l.b16 %v1004
      %v1152 = vunpack.c.h.b16 %v1004
      %v1153 = vunpack.c.l.b16 %v1005
      %v1154 = vunpack.c.h.b16 %v1005
      %v1155 = vunpack.c.l.b16 %v1006
      %v1156 = vunpack.c.h.b16 %v1006
      %v1157 = vunpack.c.l.b16 %v1007
      %v1158 = vunpack.c.h.b16 %v1007
      %v1159 = vunpack.c.l.b16 %v1008
      %v1160 = vunpack.c.h.b16 %v1008
      %v1161 = vunpack.c.l.b16 %v1009
      %v1162 = vunpack.c.h.b16 %v1009
      %v1163 = vunpack.c.l.b16 %v1010
      %v1164 = vunpack.c.h.b16 %v1010
      %v1165 = vunpack.c.l.b16 %v1011
      %v1166 = vunpack.c.h.b16 %v1011
      %v1167 = vunpack.c.l.b16 %v1012
      %v1168 = vunpack.c.h.b16 %v1012
      %v1169 = vunpack.c.l.b16 %v1013
      %v1170 = vunpack.c.h.b16 %v1013
      %v1171 = vunpack.c.l.b16 %v1014
      %v1172 = vunpack.c.h.b16 %v1014
      %v1173 = vunpack.c.l.b16 %v1015
      %v1174 = vunpack.c.h.b16 %v1015
      %v1175 = vunpack.c.l.b16 %v1016
      %v1176 = vunpack.c.h.b16 %v1016
      %v1177 = vunpack.c.l.b16 %v1017
      %v1178 = vunpack.c.h.b16 %v1017
      %v1179 = vunpack.c.l.b16 %v1018
      %v1180 = vunpack.c.h.b16 %v1018
      %v1181 = vpack.c.b16 %v1075, %v1073
      %v1182 = vpack.c.b16 %v1076, %v1074
      %v1183 = vpack.c.b16 %v1079, %v1077
      %v1184 = vpack.c.b16 %v1080, %v1078
      %v1185 = vpack.c.b16 %v1083, %v1081
      %v1186 = vpack.c.b16 %v1084, %v1082
      %v1187 = vpack.c.b16 %v1087, %v1085
      %v1188 = vpack.c.b16 %v1088, %v1086
      %v1189 = vpack.c.b16 %v1091, %v1089
      %v1190 = vpack.c.b16 %v1092, %v1090
      %v1191 = vpack.c.b16 %v1095, %v1093
      %v1192 = vpack.c.b16 %v1096, %v1094
      %v1193 = vpack.c.b16 %v1099, %v1097
      %v1194 = vpack.c.b16 %v1100, %v1098
      %v1195 = vpack.c.b16 %v1103, %v1101
      %v1196 = vpack.c.b16 %v1104, %v1102
      %v1197 = vpack.c.b16 %v1107, %v1105
      %v1198 = vpack.c.b16 %v1108, %v1106
      %v1199 = vpack.c.b16 %v1111, %v1109
      %v1200 = vpack.c.b16 %v1112, %v1110
      %v1201 = vpack.c.b16 %v1115, %v1113
      %v1202 = vpack.c.b16 %v1116, %v1114
      %v1203 = vpack.c.b16 %v1119, %v1117
      %v1204 = vpack.c.b16 %v1120, %v1118
      %v1205 = vpack.c.b16 %v1123, %v1121
      %v1206 = vpack.c.b16 %v1124, %v1122
      %v1207 = vpack.c.b16 %v1127, %v1125
      %v1208 = vpack.c.b16 %v1128, %v1126
      %v1209 = vpack.c.b16 %v1131, %v1129
      %v1210 = vpack.c.b16 %v1132, %v1130
      %v1211 = vpack.c.b16 %v1135, %v1133
      %v1212 = vpack.c.b16 %v1136, %v1134
      %v1213 = vpack.c.b16 %v1139, %v1137
      %v1214 = vpack.c.b16 %v1140, %v1138
      %v1215 = vpack.c.b16 %v1143, %v1141
      %v1216 = vpack.c.b16 %v1144, %v1142
      %v1217 = vpack.c.b16 %v1147, %v1145
      %v1218 = vpack.c.b16 %v1148, %v1146
      %v1219 = vpack.c.b16 %v1151, %v1149
      %v1220 = vpack.c.b16 %v1152, %v1150
      %v1221 = vpack.c.b16 %v1155, %v1153
      %v1222 = vpack.c.b16 %v1156, %v1154
      %v1223 = vpack.c.b16 %v1159, %v1157
      %v1224 = vpack.c.b16 %v1160, %v1158
      %v1225 = vpack.c.b16 %v1163, %v1161
      %v1226 = vpack.c.b16 %v1164, %v1162
      %v1227 = vpack.c.b16 %v1167, %v1165
      %v1228 = vpack.c.b16 %v1168, %v1166
      %v1229 = vpack.c.b16 %v1171, %v1169
      %v1230 = vpack.c.b16 %v1172, %v1170
      %v1231 = vpack.c.b16 %v1175, %v1173
      %v1232 = vpack.c.b16 %v1176, %v1174
      %v1233 = vpack.c.b16 %v1179, %v1177
      %v1234 = vpack.c.b16 %v1180, %v1178
      %vm1289 = vcmask 392192
      %v1290 = vsel %vm1289, %v964, 0
      %1292 = vmatprep.subr.bf16.mxu0 %v1182
      %1293 = vmatpush1.bf16.msra.mxu0 %v1181
      %1294 = vmatprep.subr.bf16.mxu0 %v1184
      %1295 = vmatpush1.bf16.msra.mxu0 %v1183
      %1296 = vmatprep.subr.bf16.mxu0 %v1186
      %1297 = vmatpush1.bf16.msra.mxu0 %v1185
      %1298 = vmatprep.subr.bf16.mxu0 %v1188
      %1299 = vmatpush1.bf16.msra.mxu0 %v1187
      %1300 = vmatprep.subr.bf16.mxu0 %v1190
      %1301 = vmatpush1.bf16.msra.mxu0 %v1189
      %1302 = vmatprep.subr.bf16.mxu0 %v1192
      %1303 = vmatpush1.bf16.msra.mxu0 %v1191
      %1304 = vmatprep.subr.bf16.mxu0 %v1194
      %1305 = vmatpush1.bf16.msra.mxu0 %v1193
      %1306 = vmatprep.subr.bf16.mxu0 %v1196
      %1307 = vmatpush1.bf16.msra.mxu0 %v1195
      %1308 = vmatprep.subr.bf16.mxu0 %v1198
      %1309 = vmatpush1.bf16.msra.mxu0 %v1197
      %1310 = vmatprep.subr.bf16.mxu0 %v1200
      %1311 = vmatpush1.bf16.msra.mxu0 %v1199
      %1312 = vmatprep.subr.bf16.mxu0 %v1202
      %1313 = vmatpush1.bf16.msra.mxu0 %v1201
      %1314 = vmatprep.subr.bf16.mxu0 %v1204
      %1315 = vmatpush1.bf16.msra.mxu0 %v1203
      %1316 = vmatprep.subr.bf16.mxu0 %v1206
      %1317 = vmatpush1.bf16.msra.mxu0 %v1205
      %1318 = vmatprep.subr.bf16.mxu0 %v1208
      %1319 = vmatpush1.bf16.msra.mxu0 %v1207
      %1320 = vmatprep.subr.bf16.mxu0 %v1210
      %1321 = vmatpush1.bf16.msra.mxu0 %v1209
      %1322 = vmatprep.subr.bf16.mxu0 %v1212
      %1323 = vmatpush1.bf16.msra.mxu0 %v1211
      %1324 = vmatprep.mubr.bf16.mxu0 %v952
      %1325 = vmatmul.mubr.bf16.gmra.mrb[0].mxu0 %v943
      %v1326 = vpop.f32.mrb[0].mxu0
      %v1327 = vadd.f32 0.0, %v1326
      %v1328 = vpop.f32.mrb[0].mxu0
      %v1329 = vadd.f32 0.0, %v1328
      %v1330 = vpop.f32.mrb[0].mxu0
      %v1331 = vadd.f32 0.0, %v1330
      %v1332 = vpop.f32.mrb[0].mxu0
      %v1333 = vadd.f32 0.0, %v1332
      %1334 = vdwg.mxu0
      %1335 = vmatprep.subr.bf16.mxu0 %v1214
      %1336 = vmatpush1.bf16.msra.mxu0 %v1213
      %1337 = vmatprep.subr.bf16.mxu0 %v1216
      %1338 = vmatpush1.bf16.msra.mxu0 %v1215
      %1339 = vmatprep.subr.bf16.mxu0 %v1218
      %1340 = vmatpush1.bf16.msra.mxu0 %v1217
      %1341 = vmatprep.subr.bf16.mxu0 %v1220
      %1342 = vmatpush1.bf16.msra.mxu0 %v1219
      %1343 = vmatprep.subr.bf16.mxu0 %v1222
      %1344 = vmatpush1.bf16.msra.mxu0 %v1221
      %1345 = vmatprep.subr.bf16.mxu0 %v1224
      %1346 = vmatpush1.bf16.msra.mxu0 %v1223
      %1347 = vmatprep.subr.bf16.mxu0 %v1226
      %1348 = vmatpush1.bf16.msra.mxu0 %v1225
      %1349 = vmatprep.subr.bf16.mxu0 %v1228
      %1350 = vmatpush1.bf16.msra.mxu0 %v1227
      %1351 = vmatprep.subr.bf16.mxu0 %v1230
      %1352 = vmatpush1.bf16.msra.mxu0 %v1229
      %1353 = vmatprep.subr.bf16.mxu0 %v1232
      %1354 = vmatpush1.bf16.msra.mxu0 %v1231
      %1355 = vmatprep.subr.bf16.mxu0 %v1234
      %1356 = vmatpush1.bf16.msra.mxu0 %v1233
      %1357 = vmatprep.subr.bf16.mxu0 0
      %1358 = vmatpush1.bf16.msra.mxu0 0
      %1359 = vmatprep.subr.bf16.mxu0 0
      %1360 = vmatpush1.bf16.msra.mxu0 0
      %1361 = vmatprep.subr.bf16.mxu0 0
      %1362 = vmatpush1.bf16.msra.mxu0 0
      %1363 = vmatprep.subr.bf16.mxu0 0
      %1364 = vmatpush1.bf16.msra.mxu0 0
      %1365 = vmatprep.subr.bf16.mxu0 0
      %1366 = vmatpush1.bf16.msra.mxu0 0
      %1367 = vmatprep.mubr.bf16.mxu0 %v1290
      %1368 = vmatmul.mubr.bf16.gmra.mrb[0].mxu0 %v961
      %v1369 = vpop.f32.mrb[0].mxu0
      %v1370 = vadd.f32 %v1327, %v1369
      %v1371 = vpop.f32.mrb[0].mxu0
      %v1372 = vadd.f32 %v1329, %v1371
      %v1373 = vpop.f32.mrb[0].mxu0
      %v1374 = vadd.f32 %v1331, %v1373
      %v1375 = vpop.f32.mrb[0].mxu0
      %v1376 = vadd.f32 %v1333, %v1375
      %1377 = vdwg.mxu0
      %v1378 = vadd.f32 %v1370, %v1374
      %v1379 = vrot.slane %v1378, 4
      %v1380 = vadd.f32 %v1378, %v1379
      %v1381 = vrot.slane %v1380, 2
      %v1382 = vadd.f32 %v1380, %v1381
      %v1383 = vrot.slane %v1382, 1
      %v1384 = vadd.f32 %v1382, %v1383
      %v1385 = vadd.f32 %v1372, %v1376
      %v1386 = vrot.slane %v1385, 4
      %v1387 = vadd.f32 %v1385, %v1386
      %v1388 = vrot.slane %v1387, 2
      %v1389 = vadd.f32 %v1387, %v1388
      %v1390 = vrot.slane %v1389, 1
      %v1391 = vadd.f32 %v1389, %v1390
      %1393 = vrot.lane.b32.xlu0 %v1384, 112
      %v1394 = vpop.permute.xlu0 %1393
      %v1396 = vadd.f32 %v1384, %v1394
      %1397 = vrot.lane.b32.xlu0 %v1384, 96
      %v1398 = vpop.permute.xlu0 %1397
      %v1400 = vadd.f32 %v1396, %v1398
      %1401 = vrot.lane.b32.xlu0 %v1384, 80
      %v1402 = vpop.permute.xlu0 %1401
      %v1404 = vadd.f32 %v1400, %v1402
      %1405 = vrot.lane.b32.xlu0 %v1384, 64
      %v1406 = vpop.permute.xlu0 %1405
      %v1408 = vadd.f32 %v1404, %v1406
      %1409 = vrot.lane.b32.xlu0 %v1384, 48
      %v1410 = vpop.permute.xlu0 %1409
      %v1412 = vadd.f32 %v1408, %v1410
      %1413 = vrot.lane.b32.xlu0 %v1384, 32
      %v1414 = vpop.permute.xlu0 %1413
      %v1416 = vadd.f32 %v1412, %v1414
      %1417 = vrot.lane.b32.xlu0 %v1384, 16
      %v1418 = vpop.permute.xlu0 %1417
      %v1420 = vadd.f32 %v1416, %v1418
      %v1421 = vadd.f32 %v1420, %v1391
      %1423 = vrot.lane.b32.xlu0 %v1391, 112
      %v1424 = vpop.permute.xlu0 %1423
      %v1426 = vadd.f32 %v1421, %v1424
      %1427 = vrot.lane.b32.xlu0 %v1391, 96
      %v1428 = vpop.permute.xlu0 %1427
      %v1430 = vadd.f32 %v1426, %v1428
      %1431 = vrot.lane.b32.xlu0 %v1391, 80
      %v1432 = vpop.permute.xlu0 %1431
      %v1434 = vadd.f32 %v1430, %v1432
      %1435 = vrot.lane.b32.xlu0 %v1391, 64
      %v1436 = vpop.permute.xlu0 %1435
      %v1438 = vadd.f32 %v1434, %v1436
      %1439 = vrot.lane.b32.xlu0 %v1391, 48
      %v1440 = vpop.permute.xlu0 %1439
      %v1442 = vadd.f32 %v1438, %v1440
      %1443 = vrot.lane.b32.xlu0 %v1391, 32
      %v1444 = vpop.permute.xlu0 %1443
      %v1446 = vadd.f32 %v1442, %v1444
      %1447 = vrot.lane.b32.xlu0 %v1391, 16
      %v1448 = vpop.permute.xlu0 %1447
      %v1450 = vadd.f32 %v1446, %v1448
      %v1451 = vrcp.pop 256.0
      %v1452 = vmul.f32 %v1450, %v1451
      %1454 = vrot.lane.b32.xlu0 %v1452, 16
      %v1455 = vpop.permute.xlu0 %1454
      %1457 = vrot.lane.b32.xlu0 %v1452, 32
      %v1458 = vpop.permute.xlu0 %1457
      %1460 = vrot.lane.b32.xlu0 %v1452, 48
      %v1461 = vpop.permute.xlu0 %1460
      %1463 = vrot.lane.b32.xlu0 %v1452, 64
      %v1464 = vpop.permute.xlu0 %1463
      %1466 = vrot.lane.b32.xlu0 %v1452, 80
      %v1467 = vpop.permute.xlu0 %1466
      %1469 = vrot.lane.b32.xlu0 %v1452, 96
      %v1470 = vpop.permute.xlu0 %1469
      %1472 = vrot.lane.b32.xlu0 %v1452, 112
      %v1473 = vpop.permute.xlu0 %1472
      %v1475 = vsel %vm947, %v1452, %v1455
      %v1476 = vsel %vm956, %v1475, %v1458
      %v1477 = vsel %vm1289, %v1476, %v1461
      %vm1478 = vcmask 523264
      %v1479 = vsel %vm1478, %v1477, %v1464
      %vm1480 = vcmask 654336
      %v1481 = vsel %vm1480, %v1479, %v1467
      %vm1482 = vcmask 785408
      %v1483 = vsel %vm1482, %v1481, %v1470
      %vm1484 = vcmask 916480
      %v1485 = vsel %vm1484, %v1483, %v1473
      %v1486 = vlaneseq
      %v1487 = vshrl.u32 %v1486, 7
      %v1488 = vsub.s32 0, %v1487
      %v1489 = vrot.slane %v1485, %v1488
      %v1490 = vsub.f32 %v1370, %v1489
      %v1491 = vsub.f32 %v1372, %v1489
      %v1492 = vsub.f32 %v1374, %v1489
      %v1493 = vsub.f32 %v1376, %v1489
      %v1494 = vmul.f32 %v1490, %v1490
      %v1495 = vmul.f32 %v1491, %v1491
      %v1496 = vmul.f32 %v1492, %v1492
      %v1497 = vmul.f32 %v1493, %v1493
      %v1498 = vadd.f32 %v1494, %v1496
      %v1499 = vrot.slane %v1498, 4
      %v1500 = vadd.f32 %v1498, %v1499
      %v1501 = vrot.slane %v1500, 2
      %v1502 = vadd.f32 %v1500, %v1501
      %v1503 = vrot.slane %v1502, 1
      %v1504 = vadd.f32 %v1502, %v1503
      %v1505 = vadd.f32 %v1495, %v1497
      %v1506 = vrot.slane %v1505, 4
      %v1507 = vadd.f32 %v1505, %v1506
      %v1508 = vrot.slane %v1507, 2
      %v1509 = vadd.f32 %v1507, %v1508
      %v1510 = vrot.slane %v1509, 1
      %v1511 = vadd.f32 %v1509, %v1510
      %1513 = vrot.lane.b32.xlu0 %v1504, 112
      %v1514 = vpop.permute.xlu0 %1513
      %v1516 = vadd.f32 %v1504, %v1514
      %1517 = vrot.lane.b32.xlu0 %v1504, 96
      %v1518 = vpop.permute.xlu0 %1517
      %v1520 = vadd.f32 %v1516, %v1518
      %1521 = vrot.lane.b32.xlu0 %v1504, 80
      %v1522 = vpop.permute.xlu0 %1521
      %v1524 = vadd.f32 %v1520, %v1522
      %1525 = vrot.lane.b32.xlu0 %v1504, 64
      %v1526 = vpop.permute.xlu0 %1525
      %v1528 = vadd.f32 %v1524, %v1526
      %1529 = vrot.lane.b32.xlu0 %v1504, 48
      %v1530 = vpop.permute.xlu0 %1529
      %v1532 = vadd.f32 %v1528, %v1530
      %1533 = vrot.lane.b32.xlu0 %v1504, 32
      %v1534 = vpop.permute.xlu0 %1533
      %v1536 = vadd.f32 %v1532, %v1534
      %1537 = vrot.lane.b32.xlu0 %v1504, 16
      %v1538 = vpop.permute.xlu0 %1537
      %v1540 = vadd.f32 %v1536, %v1538
      %v1541 = vadd.f32 %v1540, %v1511
      %1543 = vrot.lane.b32.xlu0 %v1511, 112
      %v1544 = vpop.permute.xlu0 %1543
      %v1546 = vadd.f32 %v1541, %v1544
      %1547 = vrot.lane.b32.xlu0 %v1511, 96
      %v1548 = vpop.permute.xlu0 %1547
      %v1550 = vadd.f32 %v1546, %v1548
      %1551 = vrot.lane.b32.xlu0 %v1511, 80
      %v1552 = vpop.permute.xlu0 %1551
      %v1554 = vadd.f32 %v1550, %v1552
      %1555 = vrot.lane.b32.xlu0 %v1511, 64
      %v1556 = vpop.permute.xlu0 %1555
      %v1558 = vadd.f32 %v1554, %v1556
      %1559 = vrot.lane.b32.xlu0 %v1511, 48
      %v1560 = vpop.permute.xlu0 %1559
      %v1562 = vadd.f32 %v1558, %v1560
      %1563 = vrot.lane.b32.xlu0 %v1511, 32
      %v1564 = vpop.permute.xlu0 %1563
      %v1566 = vadd.f32 %v1562, %v1564
      %1567 = vrot.lane.b32.xlu0 %v1511, 16
      %v1568 = vpop.permute.xlu0 %1567
      %v1570 = vadd.f32 %v1566, %v1568
      %v1571 = vmul.f32 %v1570, %v1451
      %v1572 = vadd.f32 %v1571, 1e-05
      %v1573 = vrsqrt.pop %v1572
      %1575 = vrot.lane.b32.xlu0 %v1573, 16
      %v1576 = vpop.permute.xlu0 %1575
      %1578 = vrot.lane.b32.xlu0 %v1573, 32
      %v1579 = vpop.permute.xlu0 %1578
      %1581 = vrot.lane.b32.xlu0 %v1573, 48
      %v1582 = vpop.permute.xlu0 %1581
      %1584 = vrot.lane.b32.xlu0 %v1573, 64
      %v1585 = vpop.permute.xlu0 %1584
      %1587 = vrot.lane.b32.xlu0 %v1573, 80
      %v1588 = vpop.permute.xlu0 %1587
      %1590 = vrot.lane.b32.xlu0 %v1573, 96
      %v1591 = vpop.permute.xlu0 %1590
      %1593 = vrot.lane.b32.xlu0 %v1573, 112
      %v1594 = vpop.permute.xlu0 %1593
      %v1596 = vsel %vm947, %v1573, %v1576
      %v1597 = vsel %vm956, %v1596, %v1579
      %v1598 = vsel %vm1289, %v1597, %v1582
      %v1599 = vsel %vm1478, %v1598, %v1585
      %v1600 = vsel %vm1480, %v1599, %v1588
      %v1601 = vsel %vm1482, %v1600, %v1591
      %v1602 = vsel %vm1484, %v1601, %v1594
      %v1603 = vlaneseq
      %v1604 = vshrl.u32 %v1603, 7
      %v1605 = vsub.s32 0, %v1604
      %v1606 = vrot.slane %v1602, %v1605
      %v1607 = vmul.f32 %v1490, %v1606
      %v1608 = vmul.f32 %v1491, %v1606
      %v1609 = vmul.f32 %v1492, %v1606
      %v1610 = vmul.f32 %v1493, %v1606
      %v1611 = vmax.f32 %v1607, 0.0
      %v1612 = vmax.f32 %v1608, 0.0
      %v1613 = vmax.f32 %v1609, 0.0
      %v1614 = vmax.f32 %v1610, 0.0
      %v1615 = vmax.f32 %v1611, %v1612
      %v1616 = vmax.f32 %v1613, %v1614
      %v1619 = vcombine.high %v1615, %v1615
      %v1621 = vunpack.c.l.s4 1966171168
      %v1622 = vunpack.c.0.s8 %v1621
      %v1623 = vlaneseq
      %v1624 = vshrl.u32 %v1623, 7
      %v1625 = vsub.s32 %v1622, %v1624
      %v1626 = vrot.slane %v1615, %v1625
      %v1628 = vunpack.c.l.s4 1966171168
      %v1629 = vunpack.c.0.s8 %v1628
      %v1630 = vlaneseq
      %v1631 = vshrl.u32 %v1630, 7
      %v1632 = vsub.s32 %v1629, %v1631
      %v1633 = vrot.slane %v1619, %v1632
      %v1634 = vcombine.high %v1626, %v1626
      %v1635 = vcombine.high %v1633, %v1633
      %v1637 = vunpack.c.l.s4 1966171168
      %v1638 = vunpack.c.0.s8 %v1637
      %v1639 = vlaneseq
      %v1640 = vshrl.u32 %v1639, 7
      %v1641 = vsub.s32 %v1638, %v1640
      %v1642 = vrot.slane %v1626, %v1641
      %v1644 = vunpack.c.l.s4 1966171168
      %v1645 = vunpack.c.0.s8 %v1644
      %v1646 = vlaneseq
      %v1647 = vshrl.u32 %v1646, 7
      %v1648 = vsub.s32 %v1645, %v1647
      %v1649 = vrot.slane %v1633, %v1648
      %v1651 = vunpack.c.l.s4 1966171168
      %v1652 = vunpack.c.0.s8 %v1651
      %v1653 = vlaneseq
      %v1654 = vshrl.u32 %v1653, 7
      %v1655 = vsub.s32 %v1652, %v1654
      %v1656 = vrot.slane %v1634, %v1655
      %v1658 = vunpack.c.l.s4 1966171168
      %v1659 = vunpack.c.0.s8 %v1658
      %v1660 = vlaneseq
      %v1661 = vshrl.u32 %v1660, 7
      %v1662 = vsub.s32 %v1659, %v1661
      %v1663 = vrot.slane %v1635, %v1662
      %v1664 = vcombine.high %v1642, %v1642
      %v1665 = vcombine.high %v1649, %v1649
      %v1666 = vcombine.high %v1656, %v1656
      %v1667 = vcombine.high %v1663, %v1663
      %v1668 = vcombine.high %v1616, %v1616
      %v1670 = vunpack.c.l.s4 1966171168
      %v1671 = vunpack.c.0.s8 %v1670
      %v1672 = vlaneseq
      %v1673 = vshrl.u32 %v1672, 7
      %v1674 = vsub.s32 %v1671, %v1673
      %v1675 = vrot.slane %v1616, %v1674
      %v1677 = vunpack.c.l.s4 1966171168
      %v1678 = vunpack.c.0.s8 %v1677
      %v1679 = vlaneseq
      %v1680 = vshrl.u32 %v1679, 7
      %v1681 = vsub.s32 %v1678, %v1680
      %v1682 = vrot.slane %v1668, %v1681
      %v1683 = vcombine.high %v1675, %v1675
      %v1684 = vcombine.high %v1682, %v1682
      %v1686 = vunpack.c.l.s4 1966171168
      %v1687 = vunpack.c.0.s8 %v1686
      %v1688 = vlaneseq
      %v1689 = vshrl.u32 %v1688, 7
      %v1690 = vsub.s32 %v1687, %v1689
      %v1691 = vrot.slane %v1675, %v1690
      %v1693 = vunpack.c.l.s4 1966171168
      %v1694 = vunpack.c.0.s8 %v1693
      %v1695 = vlaneseq
      %v1696 = vshrl.u32 %v1695, 7
      %v1697 = vsub.s32 %v1694, %v1696
      %v1698 = vrot.slane %v1682, %v1697
      %v1700 = vunpack.c.l.s4 1966171168
      %v1701 = vunpack.c.0.s8 %v1700
      %v1702 = vlaneseq
      %v1703 = vshrl.u32 %v1702, 7
      %v1704 = vsub.s32 %v1701, %v1703
      %v1705 = vrot.slane %v1683, %v1704
      %v1707 = vunpack.c.l.s4 1966171168
      %v1708 = vunpack.c.0.s8 %v1707
      %v1709 = vlaneseq
      %v1710 = vshrl.u32 %v1709, 7
      %v1711 = vsub.s32 %v1708, %v1710
      %v1712 = vrot.slane %v1684, %v1711
      %v1713 = vcombine.high %v1691, %v1691
      %v1714 = vcombine.high %v1698, %v1698
      %v1715 = vcombine.high %v1705, %v1705
      %v1716 = vcombine.high %v1712, %v1712
      %v1733 = vmax.f32 %v1642, %v1656
      %v1734 = vmax.f32 %v1664, %v1666
      %v1735 = vmax.f32 %v1649, %v1663
      %v1736 = vmax.f32 %v1665, %v1667
      %v1737 = vmax.f32 %v1691, %v1705
      %v1738 = vmax.f32 %v1713, %v1715
      %v1739 = vmax.f32 %v1698, %v1712
      %v1740 = vmax.f32 %v1714, %v1716
      %1741 = vst [vmem:[%s138] sm:$0x1] %v1733
      %1742 = vst [vmem:[%s138 + $0x1] sm:$0x1] %v1734
      %1743 = vst [vmem:[%s138 + $0x2] sm:$0x1] %v1735
      %1744 = vst [vmem:[%s138 + $0x3] sm:$0x1] %v1736
      %1745 = vst [vmem:[%s138 + $0x4] sm:$0x1] %v1737
      %1746 = vst [vmem:[%s138 + $0x5] sm:$0x1] %v1738
      %1747 = vst [vmem:[%s138 + $0x6] sm:$0x1] %v1739
      %1748 = vst [vmem:[%s138 + $0x7] sm:$0x1] %v1740
      %p1749 = scmp.lt.s32.totalorder %s13, 1
      %s1750 = scalar_select %p1749, %s13, 1
      %s1751 = smul.addr %s1750, 8
      %s1752 = scalar_lea.vmem %s2, %s1751
      // Predicated region
      $region29: #{_lambda_.3} parent=27 // pred_check
        %p1753 = pneg %p78
      $region30: #{_lambda_.3} parent=27 // pred_check_branch
        %1755 = sbr.rel (%p1753) target = $region32
      $region31: #{_lambda_.3} parent=27 // pred_region
        _
      $region32: #{_lambda_.3} parent=27 // pred_fallthru
        _
    $region28: #{_lambda_.3} parent=5 // pred_fallthru
      _
    %p1756 = scmp.le.s32.totalorder 2, %s8
    // Predicated region
    $region33: #{_lambda_.3} parent=5 // pred_check
      %p1757 = pneg %p1756
    $region34: #{_lambda_.3} parent=5 // pred_check_branch
      %1759 = sbr.rel (%p1757) target = $region36
    $region35: #{_lambda_.3} parent=5 // pred_region
      %s1760 = ssub.s32 %s8, 2
      // Predicated region
      $region37: #{_lambda_.3} parent=35 // pred_check
        %p1761 = pneg %p84
      $region38: #{_lambda_.3} parent=35 // pred_check_branch
        %1763 = sbr.rel (%p1761) target = $region40
      $region39: #{_lambda_.3} parent=35 // pred_region
        %p1764 = scmp.lt.s32.totalorder %s14, 1
        %s1765 = scalar_select %p1764, %s14, 1
        %s1766 = smul.addr %s1765, 8
        %s1767 = scalar_lea.vmem %s2, %s1766
      $region40: #{_lambda_.3} parent=35 // pred_fallthru
        _
    $region36: #{_lambda_.3} parent=5 // pred_fallthru
      _
  $region6: #{_lambda_.3} parent=0 // loop_footer
    %s12 = sadd.s32 1, %s8
  $region7: #{_lambda_.3} parent=0 // loop_footer_branch
    %7 = sbr.rel target = $region3
  $region8: #{_lambda_.3} parent=0 // loop_exit
    _

</llo_original>
